<compile_context>
chip_gen: v7x
topology: tpu7x:2x2x1
jax: 0.10.0
libtpu: 0.0.40
codegen_flags: <defaults>
</compile_context>

<pallas_src>
import functools

import jax
import jax.numpy as jnp
from jax.experimental import pallas as pl
from jax.experimental.pallas import tpu as pltpu


_SMALL_N = 64 * 1024  # below this, pallas_call fixed overhead dominates


def _cdiv(a: int, b: int) -> int:
    return -(-a // b)


def _ceil_to(a: int, m: int) -> int:
    return _cdiv(a, m) * m


def _pick_tile_bytes() -> int:
    """~2 MiB per input tile everywhere; ~4 MiB when clearly on v6e/v7x.

    2 MiB tiles double-buffered for in+out = 8 MiB  -> fits v5e's 16 MiB
    scoped-VMEM default. 4 MiB tiles -> 16 MiB, fits the 32 MiB default on
    v6e/v7x. If detection is uncertain we keep the safe 2 MiB.
    """
    try:
        kind = jax.devices()[0].device_kind.lower()
    except Exception:  # pragma: no cover - defensive
        kind = ""
    if ("v6" in kind) or ("v7" in kind) or ("7x" in kind):
        return 4 * 1024 * 1024
    return 2 * 1024 * 1024


def _sine_kernel(x_ref, o_ref, *, w0):
    # Compute in f32 regardless of input dtype, cast back on store.
    x = x_ref[...].astype(jnp.float32)
    o_ref[...] = jnp.sin(jnp.float32(w0) * x).astype(o_ref.dtype)


def sine(x: jax.Array, w0: float = 1.0) -> jax.Array:
    """Pallas TPU implementation of Sine.forward: sin(w0 * x)."""
    orig_shape = x.shape
    orig_dtype = x.dtype
    n = x.size
    if n == 0:
        return x

    # TODO(synk): w0 is baked as a Python float (matches the nn.Module ctor);
    # a traced/jitted w0 scalar would need to be passed as an SMEM operand.
    w0 = float(w0)

    def _xla_path(v):
        # Single fused read+write pass in XLA; used for tiny inputs and for
        # element counts not divisible by 128.
        return jnp.sin(jnp.float32(w0) * v.astype(jnp.float32)).astype(orig_dtype)

    if n < _SMALL_N:
        return _xla_path(x)

    # Lane-dense 2-D slab via a free reshape: largest C in {1024,...,128} | n.
    C = 0
    for cand in (1024, 512, 256, 128):
        if n % cand == 0:
            C = cand
            break
    if C == 0:
        # n not a multiple of 128: any pad/slice/concat around a pallas_call
        # would add full extra HBM round trips; XLA fusion is already 1R+1W.
        return _xla_path(x)

    R = n // C
    itemsize = jnp.dtype(orig_dtype).itemsize
    sub = max(8, 32 // itemsize)  # sublane packing: 8 f32, 16 bf16, 32 int8

    # Row cap so one input tile is ~2 MiB (4 MiB on v6e/v7x).
    tile_bytes = _pick_tile_bytes()
    cap_rows = max(sub, ((tile_bytes // itemsize) // C) // sub * sub)

    # Grid-step target: at least what the byte cap requires, at least 4 steps
    # (>= 2 pipelined steps per TensorCore on v7x) when the slab allows it,
    # and an even count for balanced 2-TC sharding.
    steps = _cdiv(R, cap_rows)
    steps = max(steps, min(4, _cdiv(R, sub)))
    if steps > 1 and steps % 2 == 1:
        steps += 1
    # Round rows/tile up to the sublane packing; stays <= cap_rows because
    # cap_rows is a multiple of `sub` and steps >= cdiv(R, cap_rows).
    tile_rows = max(sub, _ceil_to(_cdiv(R, steps), sub))

    grid = (_cdiv(R, tile_rows),)  # ragged final row-block is masked by Pallas
    x2d = x.reshape(R, C)          # free for a contiguous array

    kernel = functools.partial(_sine_kernel, w0=w0)
    y2d = pl.pallas_call(
        kernel,
        out_shape=jax.ShapeDtypeStruct((R, C), orig_dtype),
        grid=grid,
        in_specs=[pl.BlockSpec((tile_rows, C), lambda i: (i, 0))],
        out_specs=pl.BlockSpec((tile_rows, C), lambda i: (i, 0)),
        compiler_params=pltpu.CompilerParams(
            dimension_semantics=("parallel",)
        ),
        cost_estimate=pl.CostEstimate(
            flops=n,
            transcendentals=n,
            bytes_accessed=2 * n * itemsize,
        ),
    )(x2d)
    return y2d.reshape(orig_shape)


if __name__ == "__main__":
    w0 = 30.0  # common SIREN scaling; module default is 1.0, any float works

    # 1) Small demo input (2x4x16x16): takes the small-n XLA fast path.
    x_small = jax.random.normal(jax.random.PRNGKey(0), (2, 4, 16, 16),
                                dtype=jnp.float32)
    y_small = jax.block_until_ready(sine(x_small, w0=w0))
    assert y_small.shape == x_small.shape and y_small.dtype == x_small.dtype
    assert jnp.allclose(y_small, jnp.sin(jnp.float32(w0) * x_small),
                        atol=1e-5, rtol=1e-5)

    k1, k2, k3 = jax.random.split(jax.random.PRNGKey(1), 3)

    # 2) f32 slab -> Pallas kernel path (C=1024, >=4 even grid steps).
    x_f32 = jax.random.normal(k1, (2, 4, 128, 128), dtype=jnp.float32)
    y_f32 = jax.block_until_ready(sine(x_f32, w0=w0))
    assert y_f32.shape == x_f32.shape and y_f32.dtype == x_f32.dtype
    assert jnp.allclose(y_f32, jnp.sin(jnp.float32(w0) * x_f32),
                        atol=1e-5, rtol=1e-5)

    # 3) bf16 slab -> kernel path with 16-row sublane packing.
    x_bf16 = jax.random.normal(k2, (4, 4, 128, 128), dtype=jnp.bfloat16)
    y_bf16 = jax.block_until_ready(sine(x_bf16, w0=w0))
    ref_bf16 = jnp.sin(jnp.float32(w0) * x_bf16.astype(jnp.float32)
                       ).astype(jnp.bfloat16)
    assert y_bf16.dtype == jnp.bfloat16
    assert jnp.allclose(y_bf16.astype(jnp.float32),
                        ref_bf16.astype(jnp.float32), atol=2e-2, rtol=2e-2)

    # 4) Ragged row grid (R=525 rows, C=256): last block masked by Pallas.
    x_rag = jax.random.normal(k3, (3, 5, 7, 1280), dtype=jnp.float32)
    y_rag = jax.block_until_ready(sine(x_rag, w0=w0))
    assert jnp.allclose(y_rag, jnp.sin(jnp.float32(w0) * x_rag),
                        atol=1e-5, rtol=1e-5)

    # 5) Element count not a multiple of 128 -> single-pass XLA fallback.
    x_irr = jax.random.normal(jax.random.PRNGKey(2), (131071,),
                              dtype=jnp.float32)
    y_irr = jax.block_until_ready(sine(x_irr, w0=w0))
    assert jnp.allclose(y_irr, jnp.sin(jnp.float32(w0) * x_irr),
                        atol=1e-5, rtol=1e-5)

    print("KERNEL_OK")
</pallas_src>

<mosaic_0001>
module attributes {stable_mosaic.version = 11 : i64} {
  func.func @_sine_kernel(%arg0: i32, %arg1: memref<32x1024xf32, #tpu.memory_space<vmem>>, %arg2: memref<32x1024xf32, #tpu.memory_space<vmem>>) attributes {dimension_semantics = [#tpu.dimension_semantics<parallel>], iteration_bounds = array<i64: 4>, scalar_prefetch = 0 : i64, scratch_operands = 0 : i64, tpu.core_type = #tpu.core_type<tc>, window_params = [{transform_indices = @transform_0, window_bounds = array<i64: 32, 1024>}, {transform_indices = @transform_1, window_bounds = array<i64: 32, 1024>}]} {
    %c0 = arith.constant 0 : index
    %c0_0 = arith.constant 0 : index
    %0 = vector.load %arg1[%c0, %c0_0] : memref<32x1024xf32, #tpu.memory_space<vmem>>, vector<32x1024xf32>
    %cst = arith.constant 3.000000e+01 : f32
    %1 = vector.broadcast %cst : f32 to vector<32x1024xf32>
    %2 = arith.mulf %1, %0 : vector<32x1024xf32>
    %3 = math.sin %2 : vector<32x1024xf32>
    %c0_1 = arith.constant 0 : index
    %c0_2 = arith.constant 0 : index
    %4 = vector.load %arg2[%c0_1, %c0_2] : memref<32x1024xf32, #tpu.memory_space<vmem>>, vector<32x1024xf32>
    tpu.vector_store %arg2[%c0_1, %c0_2], %3 {strides = array<i32>} : memref<32x1024xf32, #tpu.memory_space<vmem>>, vector<32x1024xf32>,
    return
  }
  func.func @transform_0(%arg0: i32) -> (i32, i32) {
    %c0_i32 = arith.constant 0 : i32
    %c0_i32_0 = arith.constant 0 : i32
    return %arg0, %c0_i32 : i32, i32
  }
  func.func @transform_1(%arg0: i32) -> (i32, i32) {
    %c0_i32 = arith.constant 0 : i32
    %c0_i32_0 = arith.constant 0 : i32
    return %arg0, %c0_i32 : i32, i32
  }
}

</mosaic_0001>

<llo_original>
// kernel: tpu_custom_call.1
$region0: #{tpu_custom_call.1}
  #allocation0 [shape = 'u32[]', space=smem, size = 0x4, offset = 0x4, fixed_abs, tag = 'smem constant byte address 0x4 - core index']
  #allocation1 [shape = 'u32[144,128]{1,0:T(1,128)}', space=vmem, size = 0x12000, scoped, tag = 'internal scratch']
  %s0 = inlined_call_operand.hbm [shape: f32[128,1024], index: 0, kind: input, shape index: {}]
  %s1 = inlined_call_operand.hbm [shape: f32[128,1024], index: 1, kind: output, shape index: {}]
  %s2 = sld [smem:[#allocation0]]
  $region41: #{tpu_custom_call.1} parent=0
    _
  %s4 = ssub.s32 1, %s2
  %s5 = scalar_select 0, %s4, %s2
  $region1: #{tpu_custom_call.1} parent=0
    #allocation2 [shape = 'u8[262144]{0}', space=vmem, size = 0x40000, scoped, tag = 'input window, operand 0']
    #allocation3 [shape = 's32[2]{0}', space=sflag, size = 0x8, scoped, tag = 'scoped memory for tpu_custom_call.1']
    #allocation4 [shape = 's32[2]{0}', space=sflag, size = 0x8, scoped, tag = 'scoped memory for tpu_custom_call.1']
    #allocation5 [shape = 'u8[262144]{0}', space=vmem, size = 0x40000, scoped, tag = 'output window, operand 0']
    %6 = vsyncpa [#allocation3], 0
    %s7 = scalar_lea.sflag [#allocation3], 1
    %8 = vsyncpa %s7, 0
    %9 = vsyncpa [#allocation4], 0
    %s10 = scalar_lea.sflag [#allocation4], 1
    %11 = vsyncpa %s10, 0
    loop: start=0, step=1, limit=6
    $region2: #{tpu_custom_call.1} parent=1 // loop_pre_header
      _
    $region3: #{tpu_custom_call.1} parent=1 // loop_header
      %s13 = sphi 0, %s17
      %p14 = scmp.ge.s32.totalorder %s13, 6
      %s23 = sphi 0, %s25
      %s26 = sphi 0, %s23
      %s27 = sphi 0, %s26
      %s43 = sphi 0, %s27
      %s49 = sphi 0, %s51
      %s52 = sphi 0, %s49
      %s53 = sphi 0, %s52
      %s69 = sphi 0, %s53
    $region4: #{tpu_custom_call.1} parent=1 // loop_header_branch
      %16 = sbr.rel (%p14) target = $region8
    $region5: #{tpu_custom_call.1} parent=1 // loop_body
      %s18 = ssub.s32 %s13, 1
      %s19 = ssub.s32 %s13, 2
      %s20 = sadd.s32 %s13, 1
      %s21 = ssub.s32 %s13, %s20
      %p22 = scmp.eq.s32.totalorder %s21, 0
      %s24 = sadd.s32 %s23, 1
      %s25 = scalar_select %p22, %s23, %s24
      %p28 = pneg %p22
      %p29 = scmp.eq.s32.totalorder %s13, 3
      %p30 = por %p28, %p29
      %p31 = scmp.ne.s32.totalorder %s23, %s26
      %p32 = scmp.eq.s32.totalorder %s13, 0
      %p33 = por %p31, %p32
      %p34 = scmp.ne.s32.totalorder %s23, %s26
      %p35 = scmp.eq.s32.totalorder %s18, 3
      %p36 = por %p34, %p35
      %p37 = scmp.ne.s32.totalorder %s26, %s27
      %p38 = scmp.eq.s32.totalorder %s18, 0
      %p39 = por %p37, %p38
      %p40 = scmp.ne.s32.totalorder %s26, %s27
      %p41 = scmp.eq.s32.totalorder %s19, 3
      %p42 = por %p40, %p41
      %p44 = scmp.ne.s32.totalorder %s27, %s43
      %p45 = scmp.eq.s32.totalorder %s19, 0
      %p46 = por %p44, %p45
      %s47 = ssub.s32 %s13, %s20
      %p48 = scmp.eq.s32.totalorder %s47, 0
      %s50 = sadd.s32 %s49, 1
      %s51 = scalar_select %p48, %s49, %s50
      %p54 = pneg %p48
      %p55 = scmp.eq.s32.totalorder %s13, 3
      %p56 = por %p54, %p55
      %p57 = scmp.ne.s32.totalorder %s49, %s52
      %p58 = scmp.eq.s32.totalorder %s13, 0
      %p59 = por %p57, %p58
      %p60 = scmp.ne.s32.totalorder %s49, %s52
      %p61 = scmp.eq.s32.totalorder %s18, 3
      %p62 = por %p60, %p61
      %p63 = scmp.ne.s32.totalorder %s52, %s53
      %p64 = scmp.eq.s32.totalorder %s18, 0
      %p65 = por %p63, %p64
      %p66 = scmp.ne.s32.totalorder %s52, %s53
      %p67 = scmp.eq.s32.totalorder %s19, 3
      %p68 = por %p66, %p67
      %p70 = scmp.ne.s32.totalorder %s53, %s69
      %p71 = scmp.eq.s32.totalorder %s19, 0
      %p72 = por %p70, %p71
      %p73 = scmp.le.s32.totalorder 1, %s13
      %p74 = scmp.lt.s32.totalorder %s13, 5
      %p75 = pnand %p73, %p74
      %p76 = pneg %p75
      // Predicated region
      $region9: #{tpu_custom_call.1} parent=5 // pred_check
        _
      $region10: #{tpu_custom_call.1} parent=5 // pred_check_branch
        %78 = sbr.rel (%p75) target = $region12
      $region11: #{tpu_custom_call.1} parent=5 // pred_region
        %s79 = ssub.s32 %s13, 1
      $region12: #{tpu_custom_call.1} parent=5 // pred_fallthru
        _
      %p80 = scmp.lt.s32.totalorder %s13, 4
      // Predicated region
      $region13: #{tpu_custom_call.1} parent=5 // pred_check
        %p81 = pneg %p80
      $region14: #{tpu_custom_call.1} parent=5 // pred_check_branch
        %83 = sbr.rel (%p81) target = $region16
      $region15: #{tpu_custom_call.1} parent=5 // pred_region
        // Predicated region
        $region17: #{tpu_custom_call.1} parent=15 // pred_check
          %p84 = pneg %p33
        $region18: #{tpu_custom_call.1} parent=15 // pred_check_branch
          %86 = sbr.rel (%p84) target = $region20
        $region19: #{tpu_custom_call.1} parent=15 // pred_region
          %s87 = sand.u32 %s23, 1
          %s88 = scalar_lea.sflag [#allocation3], %s87
          %s89 = sand.u32 %s23, 1
          %s90 = smul.addr %s89, 256
          %s91 = scalar_lea.vmem [#allocation2], %s90
          %s92 = smul.u32 4, %s13
          %s94 = ssub.s32 4096, 4096
          %95 = vsyncadd %s88, %s94
          %s96 = smul.addr %s92, 8
          %s97 = smul.addr %s96, 128
          %s98 = scalar_lea.hbm %s0, %s97
          %s99 = sshll.u32 %s91, 4
          %s100 = int_to_ptr.vmem [resolvable:$true] %s99
          %105 = dma.hbm_to_vmem [thread:$0]  %s98, 4096, %s100, %s88, 1024, 1024, 64
        $region20: #{tpu_custom_call.1} parent=15 // pred_fallthru
          _
      $region16: #{tpu_custom_call.1} parent=5 // pred_fallthru
        _
      %p106 = scmp.le.s32.totalorder 1, %s13
      %p107 = scmp.lt.s32.totalorder %s13, 5
      %p108 = pnand %p106, %p107
      %p109 = pneg %p108
      // Predicated region
      $region21: #{tpu_custom_call.1} parent=5 // pred_check
        _
      $region22: #{tpu_custom_call.1} parent=5 // pred_check_branch
        %111 = sbr.rel (%p108) target = $region24
      $region23: #{tpu_custom_call.1} parent=5 // pred_region
        %s112 = ssub.s32 %s13, 1
        %s113 = sand.u32 %s26, 1
        %s114 = scalar_lea.sflag [#allocation3], %s113
        %s115 = sand.u32 %s26, 1
        %s116 = smul.addr %s115, 256
        %s117 = scalar_lea.vmem [#allocation2], %s116
        // Predicated region
        $region25: #{tpu_custom_call.1} parent=23 // pred_check
          %p118 = pneg %p39
        $region26: #{tpu_custom_call.1} parent=23 // pred_check_branch
          %120 = sbr.rel (%p118) target = $region28
        $region27: #{tpu_custom_call.1} parent=23 // pred_region
          %121 = dma.done %s114, 4096
        $region28: #{tpu_custom_call.1} parent=23 // pred_fallthru
          _
        %s122 = sand.u32 %s26, 1
        %s123 = scalar_lea.sflag [#allocation3], %s122
        %s124 = sand.u32 %s26, 1
        %s125 = smul.addr %s124, 256
        %s126 = scalar_lea.vmem [#allocation2], %s125
        %p127 = pneg %p39
        %p128 = pneg %p36
        %p129 = pneg %p65
        %p130 = pneg %p62
        %s131 = sand.u32 %s52, 1
        %s132 = scalar_lea.sflag [#allocation4], %s131
        %s133 = sand.u32 %s52, 1
        %s134 = smul.addr %s133, 256
        %s135 = scalar_lea.vmem [#allocation5], %s134
        %s136 = smul.u32 4, %s18
        %s137 = smul.u32 4, %s18
        %v138 = vld [vmem:[%s117] sm:$0xff]
        %v139 = vld [vmem:[%s117 + $0x8] sm:$0xff]
        %v140 = vld [vmem:[%s117 + $0x10] sm:$0xff]
        %v141 = vld [vmem:[%s117 + $0x18] sm:$0xff]
        %v142 = vld [vmem:[%s117 + $0x20] sm:$0xff]
        %v143 = vld [vmem:[%s117 + $0x28] sm:$0xff]
        %v144 = vld [vmem:[%s117 + $0x30] sm:$0xff]
        %v145 = vld [vmem:[%s117 + $0x38] sm:$0xff]
        %v146 = vld [vmem:[%s117 + $0x40] sm:$0xff]
        %v147 = vld [vmem:[%s117 + $0x48] sm:$0xff]
        %v148 = vld [vmem:[%s117 + $0x50] sm:$0xff]
        %v149 = vld [vmem:[%s117 + $0x58] sm:$0xff]
        %v150 = vld [vmem:[%s117 + $0x60] sm:$0xff]
        %v151 = vld [vmem:[%s117 + $0x68] sm:$0xff]
        %v152 = vld [vmem:[%s117 + $0x70] sm:$0xff]
        %v153 = vld [vmem:[%s117 + $0x78] sm:$0xff]
        %v154 = vld [vmem:[%s117 + $0x80] sm:$0xff]
        %v155 = vld [vmem:[%s117 + $0x88] sm:$0xff]
        %v156 = vld [vmem:[%s117 + $0x90] sm:$0xff]
        %v157 = vld [vmem:[%s117 + $0x98] sm:$0xff]
        %v158 = vld [vmem:[%s117 + $0xa0] sm:$0xff]
        %v159 = vld [vmem:[%s117 + $0xa8] sm:$0xff]
        %v160 = vld [vmem:[%s117 + $0xb0] sm:$0xff]
        %v161 = vld [vmem:[%s117 + $0xb8] sm:$0xff]
        %v162 = vld [vmem:[%s117 + $0xc0] sm:$0xff]
        %v163 = vld [vmem:[%s117 + $0xc8] sm:$0xff]
        %v164 = vld [vmem:[%s117 + $0xd0] sm:$0xff]
        %v165 = vld [vmem:[%s117 + $0xd8] sm:$0xff]
        %v166 = vld [vmem:[%s117 + $0xe0] sm:$0xff]
        %v167 = vld [vmem:[%s117 + $0xe8] sm:$0xff]
        %v168 = vld [vmem:[%s117 + $0xf0] sm:$0xff]
        %v169 = vld [vmem:[%s117 + $0xf8] sm:$0xff]
        %v170 = vmul.f32 %v138, 30.0
        %v171 = vmul.f32 %v139, 30.0
        %v172 = vmul.f32 %v140, 30.0
        %v173 = vmul.f32 %v141, 30.0
        %v174 = vmul.f32 %v142, 30.0
        %v175 = vmul.f32 %v143, 30.0
        %v176 = vmul.f32 %v144, 30.0
        %v177 = vmul.f32 %v145, 30.0
        %v178 = vmul.f32 %v146, 30.0
        %v179 = vmul.f32 %v147, 30.0
        %v180 = vmul.f32 %v148, 30.0
        %v181 = vmul.f32 %v149, 30.0
        %v182 = vmul.f32 %v150, 30.0
        %v183 = vmul.f32 %v151, 30.0
        %v184 = vmul.f32 %v152, 30.0
        %v185 = vmul.f32 %v153, 30.0
        %v186 = vmul.f32 %v154, 30.0
        %v187 = vmul.f32 %v155, 30.0
        %v188 = vmul.f32 %v156, 30.0
        %v189 = vmul.f32 %v157, 30.0
        %v190 = vmul.f32 %v158, 30.0
        %v191 = vmul.f32 %v159, 30.0
        %v192 = vmul.f32 %v160, 30.0
        %v193 = vmul.f32 %v161, 30.0
        %v194 = vmul.f32 %v162, 30.0
        %v195 = vmul.f32 %v163, 30.0
        %v196 = vmul.f32 %v164, 30.0
        %v197 = vmul.f32 %v165, 30.0
        %v198 = vmul.f32 %v166, 30.0
        %v199 = vmul.f32 %v167, 30.0
        %v200 = vmul.f32 %v168, 30.0
        %v201 = vmul.f32 %v169, 30.0
        %v202 = vand.u32 2147483647, %v170
        %vm203 = vcmp.le.f32.partialorder %v202, 0.7853982
        %vm204 = vcmp.lt.s32.totalorder %v170, 0
        %v205 = vand.u32 %v170, 2139095040
        %v206 = vshrl.u32 %v205, 23
        %v207 = vsub.s32 %v206, 127
        %v208 = vand.u32 2147483647, %v170
        %v209 = vand.u32 %v208, 8388607
        %v210 = vor.u32 %v209, 8388608
        %v211 = vsub.s32 0, %v210
        %v212 = vadd.s32 %v207, 1
        %vm213 = vcmp.gt.s32.totalorder %v212, 0
        %v214 = vsel %vm213, %v212, 0
        %v215 = vshrl.u32 %v214, 5
        %v216 = vand.u32 %v214, 31
        %v217 = vsub.s32 32, %v216
        %v218 = vshrl.u32 683565275, %v217
        %v219 = vshll.u32 683565275, %v216
        %v220 = vshrl.u32 2475754826, %v217
        %v221 = vor.u32 %v219, %v220
        %v222 = vshll.u32 2475754826, %v216
        %v223 = vshrl.u32 2131351028, %v217
        %v224 = vor.u32 %v222, %v223
        %v225 = vshll.u32 2131351028, %v216
        %v226 = vshrl.u32 2102212464, %v217
        %v227 = vor.u32 %v225, %v226
        %v228 = vshll.u32 2102212464, %v216
        %v229 = vshrl.u32 920167782, %v217
        %v230 = vor.u32 %v228, %v229
        %v231 = vshll.u32 920167782, %v216
        %v232 = vshrl.u32 1326507024, %v217
        %v233 = vor.u32 %v231, %v232
        %vm234 = vcmp.lt.s32.totalorder %v215, 1
        %vm235 = vcmp.lt.s32.totalorder %v215, 2
        %vm236 = vcmp.lt.s32.totalorder %v215, 3
        %vm237 = vcmp.lt.s32.totalorder %v215, 4
        %v238 = vsel %vm234, %v218, %v221
        %v239 = vsel %vm237, %v227, 2102212464
        %v240 = vsel %vm236, %v224, %v239
        %v241 = vsel %vm235, %v238, %v240
        %v242 = vsel %vm234, %v221, %v224
        %v243 = vsel %vm237, %v230, 920167782
        %v244 = vsel %vm236, %v227, %v243
        %v245 = vsel %vm235, %v242, %v244
        %v246 = vsel %vm234, %v224, %v227
        %v247 = vsel %vm237, %v233, 1326507024
        %v248 = vsel %vm236, %v230, %v247
        %v249 = vsel %vm235, %v246, %v248
        %v250 = vshll.u32 %v210, 8
        %v251 = vmul.u32.u64.compose %v250, %v249
        %v252 = vextract.low.u32 %v251
        %v253 = vextract.high.u32 %v251
        %v254 = vmul.u32.u64.compose %v250, %v245
        %v255 = vextract.low.u32 %v254
        %v256 = vextract.high.u32 %v254
        %v257 = vmul.u32 %v250, %v241
        %v258 = vadd.s32 %v253, %v255
        %vm259 = vc.u32 %v253, %v255
        %v260 = vadd.s32 %v256, 1
        %v261 = vsel %vm259, %v260, %v256
        %v262 = vadd.s32 %v257, %v261
        %v263 = vadd.s32 %v262, 536870912
        %v264 = vshrl.u32 %v263, 30
        %v265 = vshll.u32 %v264, 30
        %v266 = vsub.s32 %v262, %v265
        %vm267 = vcmp.lt.s32.totalorder %v266, 0
        %v268 = vsub.s32 0, %v266
        %v269 = vsel %vm267, %v268, %v266
        %v270 = vclz %v269
        %v271 = vsub.s32 %v270, 2
        %vm272 = vcmp.gt.s32.totalorder 0, %v271
        %v273 = vsel %vm272, 0, %v271
        %v274 = vsub.s32 32, %v273
        %v275 = vshll.u32 %v266, %v273
        %v276 = vshrl.u32 %v258, %v274
        %v277 = vor.u32 %v275, %v276
        %v278 = vsub.s32 4294967266, %v273
        %v279 = vadd.s32 %v278, 127
        %v280 = vshll.u32 %v279, 23
        %v281 = vor.u32 4788187, %v280
        %v282 = vand.u32 2147483647, %v281
        %v284 = vcvt.s32.f32 %v277
        %v285 = vmul.f32 %v284, %v282
        %v286 = vxor.u32 %v285, 2147483648
        %v287 = vsel %vm204, %v286, %v285
        %v288 = vsub.s32 4, %v264
        %v289 = vsel %vm204, %v288, %v264
        %v290 = vsel %vm203, %v170, %v287
        %v291 = vsel %vm203, 0, %v289
        %v292 = vcosq.f32.pop %v290
        %v293 = vsinq.f32.pop %v290
        %vm294 = vweird.f32 %v170
        %v295 = vadd.s32 %v291, 3
        %v296 = vand.u32 %v295, 3
        %vm297 = vcmp.lt.s32.totalorder %v296, 2
        %vm298 = vcmp.eq.s32.totalorder %v296, 0
        %v299 = vxor.u32 %v293, 2147483648
        %v300 = vsel %vm298, %v292, %v299
        %vm301 = vcmp.eq.s32.totalorder %v296, 2
        %v302 = vxor.u32 %v292, 2147483648
        %v303 = vsel %vm301, %v302, %v293
        %v304 = vsel %vm297, %v300, %v303
        %v305 = vsel %vm294, nan, %v304
        %v306 = vand.u32 2147483647, %v171
        %vm307 = vcmp.le.f32.partialorder %v306, 0.7853982
        %vm308 = vcmp.lt.s32.totalorder %v171, 0
        %v309 = vand.u32 %v171, 2139095040
        %v310 = vshrl.u32 %v309, 23
        %v311 = vsub.s32 %v310, 127
        %v312 = vand.u32 2147483647, %v171
        %v313 = vand.u32 %v312, 8388607
        %v314 = vor.u32 %v313, 8388608
        %v315 = vsub.s32 0, %v314
        %v316 = vadd.s32 %v311, 1
        %vm317 = vcmp.gt.s32.totalorder %v316, 0
        %v318 = vsel %vm317, %v316, 0
        %v319 = vshrl.u32 %v318, 5
        %v320 = vand.u32 %v318, 31
        %v321 = vsub.s32 32, %v320
        %v322 = vshrl.u32 683565275, %v321
        %v323 = vshll.u32 683565275, %v320
        %v324 = vshrl.u32 2475754826, %v321
        %v325 = vor.u32 %v323, %v324
        %v326 = vshll.u32 2475754826, %v320
        %v327 = vshrl.u32 2131351028, %v321
        %v328 = vor.u32 %v326, %v327
        %v329 = vshll.u32 2131351028, %v320
        %v330 = vshrl.u32 2102212464, %v321
        %v331 = vor.u32 %v329, %v330
        %v332 = vshll.u32 2102212464, %v320
        %v333 = vshrl.u32 920167782, %v321
        %v334 = vor.u32 %v332, %v333
        %v335 = vshll.u32 920167782, %v320
        %v336 = vshrl.u32 1326507024, %v321
        %v337 = vor.u32 %v335, %v336
        %vm338 = vcmp.lt.s32.totalorder %v319, 1
        %vm339 = vcmp.lt.s32.totalorder %v319, 2
        %vm340 = vcmp.lt.s32.totalorder %v319, 3
        %vm341 = vcmp.lt.s32.totalorder %v319, 4
        %v342 = vsel %vm338, %v322, %v325
        %v343 = vsel %vm341, %v331, 2102212464
        %v344 = vsel %vm340, %v328, %v343
        %v345 = vsel %vm339, %v342, %v344
        %v346 = vsel %vm338, %v325, %v328
        %v347 = vsel %vm341, %v334, 920167782
        %v348 = vsel %vm340, %v331, %v347
        %v349 = vsel %vm339, %v346, %v348
        %v350 = vsel %vm338, %v328, %v331
        %v351 = vsel %vm341, %v337, 1326507024
        %v352 = vsel %vm340, %v334, %v351
        %v353 = vsel %vm339, %v350, %v352
        %v354 = vshll.u32 %v314, 8
        %v355 = vmul.u32.u64.compose %v354, %v353
        %v356 = vextract.low.u32 %v355
        %v357 = vextract.high.u32 %v355
        %v358 = vmul.u32.u64.compose %v354, %v349
        %v359 = vextract.low.u32 %v358
        %v360 = vextract.high.u32 %v358
        %v361 = vmul.u32 %v354, %v345
        %v362 = vadd.s32 %v357, %v359
        %vm363 = vc.u32 %v357, %v359
        %v364 = vadd.s32 %v360, 1
        %v365 = vsel %vm363, %v364, %v360
        %v366 = vadd.s32 %v361, %v365
        %v367 = vadd.s32 %v366, 536870912
        %v368 = vshrl.u32 %v367, 30
        %v369 = vshll.u32 %v368, 30
        %v370 = vsub.s32 %v366, %v369
        %vm371 = vcmp.lt.s32.totalorder %v370, 0
        %v372 = vsub.s32 0, %v370
        %v373 = vsel %vm371, %v372, %v370
        %v374 = vclz %v373
        %v375 = vsub.s32 %v374, 2
        %vm376 = vcmp.gt.s32.totalorder 0, %v375
        %v377 = vsel %vm376, 0, %v375
        %v378 = vsub.s32 32, %v377
        %v379 = vshll.u32 %v370, %v377
        %v380 = vshrl.u32 %v362, %v378
        %v381 = vor.u32 %v379, %v380
        %v382 = vsub.s32 4294967266, %v377
        %v383 = vadd.s32 %v382, 127
        %v384 = vshll.u32 %v383, 23
        %v385 = vor.u32 4788187, %v384
        %v386 = vand.u32 2147483647, %v385
        %v388 = vcvt.s32.f32 %v381
        %v389 = vmul.f32 %v388, %v386
        %v390 = vxor.u32 %v389, 2147483648
        %v391 = vsel %vm308, %v390, %v389
        %v392 = vsub.s32 4, %v368
        %v393 = vsel %vm308, %v392, %v368
        %v394 = vsel %vm307, %v171, %v391
        %v395 = vsel %vm307, 0, %v393
        %v396 = vcosq.f32.pop %v394
        %v397 = vsinq.f32.pop %v394
        %vm398 = vweird.f32 %v171
        %v399 = vadd.s32 %v395, 3
        %v400 = vand.u32 %v399, 3
        %vm401 = vcmp.lt.s32.totalorder %v400, 2
        %vm402 = vcmp.eq.s32.totalorder %v400, 0
        %v403 = vxor.u32 %v397, 2147483648
        %v404 = vsel %vm402, %v396, %v403
        %vm405 = vcmp.eq.s32.totalorder %v400, 2
        %v406 = vxor.u32 %v396, 2147483648
        %v407 = vsel %vm405, %v406, %v397
        %v408 = vsel %vm401, %v404, %v407
        %v409 = vsel %vm398, nan, %v408
        %v410 = vand.u32 2147483647, %v172
        %vm411 = vcmp.le.f32.partialorder %v410, 0.7853982
        %vm412 = vcmp.lt.s32.totalorder %v172, 0
        %v413 = vand.u32 %v172, 2139095040
        %v414 = vshrl.u32 %v413, 23
        %v415 = vsub.s32 %v414, 127
        %v416 = vand.u32 2147483647, %v172
        %v417 = vand.u32 %v416, 8388607
        %v418 = vor.u32 %v417, 8388608
        %v419 = vsub.s32 0, %v418
        %v420 = vadd.s32 %v415, 1
        %vm421 = vcmp.gt.s32.totalorder %v420, 0
        %v422 = vsel %vm421, %v420, 0
        %v423 = vshrl.u32 %v422, 5
        %v424 = vand.u32 %v422, 31
        %v425 = vsub.s32 32, %v424
        %v426 = vshrl.u32 683565275, %v425
        %v427 = vshll.u32 683565275, %v424
        %v428 = vshrl.u32 2475754826, %v425
        %v429 = vor.u32 %v427, %v428
        %v430 = vshll.u32 2475754826, %v424
        %v431 = vshrl.u32 2131351028, %v425
        %v432 = vor.u32 %v430, %v431
        %v433 = vshll.u32 2131351028, %v424
        %v434 = vshrl.u32 2102212464, %v425
        %v435 = vor.u32 %v433, %v434
        %v436 = vshll.u32 2102212464, %v424
        %v437 = vshrl.u32 920167782, %v425
        %v438 = vor.u32 %v436, %v437
        %v439 = vshll.u32 920167782, %v424
        %v440 = vshrl.u32 1326507024, %v425
        %v441 = vor.u32 %v439, %v440
        %vm442 = vcmp.lt.s32.totalorder %v423, 1
        %vm443 = vcmp.lt.s32.totalorder %v423, 2
        %vm444 = vcmp.lt.s32.totalorder %v423, 3
        %vm445 = vcmp.lt.s32.totalorder %v423, 4
        %v446 = vsel %vm442, %v426, %v429
        %v447 = vsel %vm445, %v435, 2102212464
        %v448 = vsel %vm444, %v432, %v447
        %v449 = vsel %vm443, %v446, %v448
        %v450 = vsel %vm442, %v429, %v432
        %v451 = vsel %vm445, %v438, 920167782
        %v452 = vsel %vm444, %v435, %v451
        %v453 = vsel %vm443, %v450, %v452
        %v454 = vsel %vm442, %v432, %v435
        %v455 = vsel %vm445, %v441, 1326507024
        %v456 = vsel %vm444, %v438, %v455
        %v457 = vsel %vm443, %v454, %v456
        %v458 = vshll.u32 %v418, 8
        %v459 = vmul.u32.u64.compose %v458, %v457
        %v460 = vextract.low.u32 %v459
        %v461 = vextract.high.u32 %v459
        %v462 = vmul.u32.u64.compose %v458, %v453
        %v463 = vextract.low.u32 %v462
        %v464 = vextract.high.u32 %v462
        %v465 = vmul.u32 %v458, %v449
        %v466 = vadd.s32 %v461, %v463
        %vm467 = vc.u32 %v461, %v463
        %v468 = vadd.s32 %v464, 1
        %v469 = vsel %vm467, %v468, %v464
        %v470 = vadd.s32 %v465, %v469
        %v471 = vadd.s32 %v470, 536870912
        %v472 = vshrl.u32 %v471, 30
        %v473 = vshll.u32 %v472, 30
        %v474 = vsub.s32 %v470, %v473
        %vm475 = vcmp.lt.s32.totalorder %v474, 0
        %v476 = vsub.s32 0, %v474
        %v477 = vsel %vm475, %v476, %v474
        %v478 = vclz %v477
        %v479 = vsub.s32 %v478, 2
        %vm480 = vcmp.gt.s32.totalorder 0, %v479
        %v481 = vsel %vm480, 0, %v479
        %v482 = vsub.s32 32, %v481
        %v483 = vshll.u32 %v474, %v481
        %v484 = vshrl.u32 %v466, %v482
        %v485 = vor.u32 %v483, %v484
        %v486 = vsub.s32 4294967266, %v481
        %v487 = vadd.s32 %v486, 127
        %v488 = vshll.u32 %v487, 23
        %v489 = vor.u32 4788187, %v488
        %v490 = vand.u32 2147483647, %v489
        %v492 = vcvt.s32.f32 %v485
        %v493 = vmul.f32 %v492, %v490
        %v494 = vxor.u32 %v493, 2147483648
        %v495 = vsel %vm412, %v494, %v493
        %v496 = vsub.s32 4, %v472
        %v497 = vsel %vm412, %v496, %v472
        %v498 = vsel %vm411, %v172, %v495
        %v499 = vsel %vm411, 0, %v497
        %v500 = vcosq.f32.pop %v498
        %v501 = vsinq.f32.pop %v498
        %vm502 = vweird.f32 %v172
        %v503 = vadd.s32 %v499, 3
        %v504 = vand.u32 %v503, 3
        %vm505 = vcmp.lt.s32.totalorder %v504, 2
        %vm506 = vcmp.eq.s32.totalorder %v504, 0
        %v507 = vxor.u32 %v501, 2147483648
        %v508 = vsel %vm506, %v500, %v507
        %vm509 = vcmp.eq.s32.totalorder %v504, 2
        %v510 = vxor.u32 %v500, 2147483648
        %v511 = vsel %vm509, %v510, %v501
        %v512 = vsel %vm505, %v508, %v511
        %v513 = vsel %vm502, nan, %v512
        %v514 = vand.u32 2147483647, %v173
        %vm515 = vcmp.le.f32.partialorder %v514, 0.7853982
        %vm516 = vcmp.lt.s32.totalorder %v173, 0
        %v517 = vand.u32 %v173, 2139095040
        %v518 = vshrl.u32 %v517, 23
        %v519 = vsub.s32 %v518, 127
        %v520 = vand.u32 2147483647, %v173
        %v521 = vand.u32 %v520, 8388607
        %v522 = vor.u32 %v521, 8388608
        %v523 = vsub.s32 0, %v522
        %v524 = vadd.s32 %v519, 1
        %vm525 = vcmp.gt.s32.totalorder %v524, 0
        %v526 = vsel %vm525, %v524, 0
        %v527 = vshrl.u32 %v526, 5
        %v528 = vand.u32 %v526, 31
        %v529 = vsub.s32 32, %v528
        %v530 = vshrl.u32 683565275, %v529
        %v531 = vshll.u32 683565275, %v528
        %v532 = vshrl.u32 2475754826, %v529
        %v533 = vor.u32 %v531, %v532
        %v534 = vshll.u32 2475754826, %v528
        %v535 = vshrl.u32 2131351028, %v529
        %v536 = vor.u32 %v534, %v535
        %v537 = vshll.u32 2131351028, %v528
        %v538 = vshrl.u32 2102212464, %v529
        %v539 = vor.u32 %v537, %v538
        %v540 = vshll.u32 2102212464, %v528
        %v541 = vshrl.u32 920167782, %v529
        %v542 = vor.u32 %v540, %v541
        %v543 = vshll.u32 920167782, %v528
        %v544 = vshrl.u32 1326507024, %v529
        %v545 = vor.u32 %v543, %v544
        %vm546 = vcmp.lt.s32.totalorder %v527, 1
        %vm547 = vcmp.lt.s32.totalorder %v527, 2
        %vm548 = vcmp.lt.s32.totalorder %v527, 3
        %vm549 = vcmp.lt.s32.totalorder %v527, 4
        %v550 = vsel %vm546, %v530, %v533
        %v551 = vsel %vm549, %v539, 2102212464
        %v552 = vsel %vm548, %v536, %v551
        %v553 = vsel %vm547, %v550, %v552
        %v554 = vsel %vm546, %v533, %v536
        %v555 = vsel %vm549, %v542, 920167782
        %v556 = vsel %vm548, %v539, %v555
        %v557 = vsel %vm547, %v554, %v556
        %v558 = vsel %vm546, %v536, %v539
        %v559 = vsel %vm549, %v545, 1326507024
        %v560 = vsel %vm548, %v542, %v559
        %v561 = vsel %vm547, %v558, %v560
        %v562 = vshll.u32 %v522, 8
        %v563 = vmul.u32.u64.compose %v562, %v561
        %v564 = vextract.low.u32 %v563
        %v565 = vextract.high.u32 %v563
        %v566 = vmul.u32.u64.compose %v562, %v557
        %v567 = vextract.low.u32 %v566
        %v568 = vextract.high.u32 %v566
        %v569 = vmul.u32 %v562, %v553
        %v570 = vadd.s32 %v565, %v567
        %vm571 = vc.u32 %v565, %v567
        %v572 = vadd.s32 %v568, 1
        %v573 = vsel %vm571, %v572, %v568
        %v574 = vadd.s32 %v569, %v573
        %v575 = vadd.s32 %v574, 536870912
        %v576 = vshrl.u32 %v575, 30
        %v577 = vshll.u32 %v576, 30
        %v578 = vsub.s32 %v574, %v577
        %vm579 = vcmp.lt.s32.totalorder %v578, 0
        %v580 = vsub.s32 0, %v578
        %v581 = vsel %vm579, %v580, %v578
        %v582 = vclz %v581
        %v583 = vsub.s32 %v582, 2
        %vm584 = vcmp.gt.s32.totalorder 0, %v583
        %v585 = vsel %vm584, 0, %v583
        %v586 = vsub.s32 32, %v585
        %v587 = vshll.u32 %v578, %v585
        %v588 = vshrl.u32 %v570, %v586
        %v589 = vor.u32 %v587, %v588
        %v590 = vsub.s32 4294967266, %v585
        %v591 = vadd.s32 %v590, 127
        %v592 = vshll.u32 %v591, 23
        %v593 = vor.u32 4788187, %v592
        %v594 = vand.u32 2147483647, %v593
        %v596 = vcvt.s32.f32 %v589
        %v597 = vmul.f32 %v596, %v594
        %v598 = vxor.u32 %v597, 2147483648
        %v599 = vsel %vm516, %v598, %v597
        %v600 = vsub.s32 4, %v576
        %v601 = vsel %vm516, %v600, %v576
        %v602 = vsel %vm515, %v173, %v599
        %v603 = vsel %vm515, 0, %v601
        %v604 = vcosq.f32.pop %v602
        %v605 = vsinq.f32.pop %v602
        %vm606 = vweird.f32 %v173
        %v607 = vadd.s32 %v603, 3
        %v608 = vand.u32 %v607, 3
        %vm609 = vcmp.lt.s32.totalorder %v608, 2
        %vm610 = vcmp.eq.s32.totalorder %v608, 0
        %v611 = vxor.u32 %v605, 2147483648
        %v612 = vsel %vm610, %v604, %v611
        %vm613 = vcmp.eq.s32.totalorder %v608, 2
        %v614 = vxor.u32 %v604, 2147483648
        %v615 = vsel %vm613, %v614, %v605
        %v616 = vsel %vm609, %v612, %v615
        %v617 = vsel %vm606, nan, %v616
        %v618 = vand.u32 2147483647, %v174
        %vm619 = vcmp.le.f32.partialorder %v618, 0.7853982
        %vm620 = vcmp.lt.s32.totalorder %v174, 0
        %v621 = vand.u32 %v174, 2139095040
        %v622 = vshrl.u32 %v621, 23
        %v623 = vsub.s32 %v622, 127
        %v624 = vand.u32 2147483647, %v174
        %v625 = vand.u32 %v624, 8388607
        %v626 = vor.u32 %v625, 8388608
        %v627 = vsub.s32 0, %v626
        %v628 = vadd.s32 %v623, 1
        %vm629 = vcmp.gt.s32.totalorder %v628, 0
        %v630 = vsel %vm629, %v628, 0
        %v631 = vshrl.u32 %v630, 5
        %v632 = vand.u32 %v630, 31
        %v633 = vsub.s32 32, %v632
        %v634 = vshrl.u32 683565275, %v633
        %v635 = vshll.u32 683565275, %v632
        %v636 = vshrl.u32 2475754826, %v633
        %v637 = vor.u32 %v635, %v636
        %v638 = vshll.u32 2475754826, %v632
        %v639 = vshrl.u32 2131351028, %v633
        %v640 = vor.u32 %v638, %v639
        %v641 = vshll.u32 2131351028, %v632
        %v642 = vshrl.u32 2102212464, %v633
        %v643 = vor.u32 %v641, %v642
        %v644 = vshll.u32 2102212464, %v632
        %v645 = vshrl.u32 920167782, %v633
        %v646 = vor.u32 %v644, %v645
        %v647 = vshll.u32 920167782, %v632
        %v648 = vshrl.u32 1326507024, %v633
        %v649 = vor.u32 %v647, %v648
        %vm650 = vcmp.lt.s32.totalorder %v631, 1
        %vm651 = vcmp.lt.s32.totalorder %v631, 2
        %vm652 = vcmp.lt.s32.totalorder %v631, 3
        %vm653 = vcmp.lt.s32.totalorder %v631, 4
        %v654 = vsel %vm650, %v634, %v637
        %v655 = vsel %vm653, %v643, 2102212464
        %v656 = vsel %vm652, %v640, %v655
        %v657 = vsel %vm651, %v654, %v656
        %v658 = vsel %vm650, %v637, %v640
        %v659 = vsel %vm653, %v646, 920167782
        %v660 = vsel %vm652, %v643, %v659
        %v661 = vsel %vm651, %v658, %v660
        %v662 = vsel %vm650, %v640, %v643
        %v663 = vsel %vm653, %v649, 1326507024
        %v664 = vsel %vm652, %v646, %v663
        %v665 = vsel %vm651, %v662, %v664
        %v666 = vshll.u32 %v626, 8
        %v667 = vmul.u32.u64.compose %v666, %v665
        %v668 = vextract.low.u32 %v667
        %v669 = vextract.high.u32 %v667
        %v670 = vmul.u32.u64.compose %v666, %v661
        %v671 = vextract.low.u32 %v670
        %v672 = vextract.high.u32 %v670
        %v673 = vmul.u32 %v666, %v657
        %v674 = vadd.s32 %v669, %v671
        %vm675 = vc.u32 %v669, %v671
        %v676 = vadd.s32 %v672, 1
        %v677 = vsel %vm675, %v676, %v672
        %v678 = vadd.s32 %v673, %v677
        %v679 = vadd.s32 %v678, 536870912
        %v680 = vshrl.u32 %v679, 30
        %v681 = vshll.u32 %v680, 30
        %v682 = vsub.s32 %v678, %v681
        %vm683 = vcmp.lt.s32.totalorder %v682, 0
        %v684 = vsub.s32 0, %v682
        %v685 = vsel %vm683, %v684, %v682
        %v686 = vclz %v685
        %v687 = vsub.s32 %v686, 2
        %vm688 = vcmp.gt.s32.totalorder 0, %v687
        %v689 = vsel %vm688, 0, %v687
        %v690 = vsub.s32 32, %v689
        %v691 = vshll.u32 %v682, %v689
        %v692 = vshrl.u32 %v674, %v690
        %v693 = vor.u32 %v691, %v692
        %v694 = vsub.s32 4294967266, %v689
        %v695 = vadd.s32 %v694, 127
        %v696 = vshll.u32 %v695, 23
        %v697 = vor.u32 4788187, %v696
        %v698 = vand.u32 2147483647, %v697
        %v700 = vcvt.s32.f32 %v693
        %v701 = vmul.f32 %v700, %v698
        %v702 = vxor.u32 %v701, 2147483648
        %v703 = vsel %vm620, %v702, %v701
        %v704 = vsub.s32 4, %v680
        %v705 = vsel %vm620, %v704, %v680
        %v706 = vsel %vm619, %v174, %v703
        %v707 = vsel %vm619, 0, %v705
        %v708 = vcosq.f32.pop %v706
        %v709 = vsinq.f32.pop %v706
        %vm710 = vweird.f32 %v174
        %v711 = vadd.s32 %v707, 3
        %v712 = vand.u32 %v711, 3
        %vm713 = vcmp.lt.s32.totalorder %v712, 2
        %vm714 = vcmp.eq.s32.totalorder %v712, 0
        %v715 = vxor.u32 %v709, 2147483648
        %v716 = vsel %vm714, %v708, %v715
        %vm717 = vcmp.eq.s32.totalorder %v712, 2
        %v718 = vxor.u32 %v708, 2147483648
        %v719 = vsel %vm717, %v718, %v709
        %v720 = vsel %vm713, %v716, %v719
        %v721 = vsel %vm710, nan, %v720
        %v722 = vand.u32 2147483647, %v175
        %vm723 = vcmp.le.f32.partialorder %v722, 0.7853982
        %vm724 = vcmp.lt.s32.totalorder %v175, 0
        %v725 = vand.u32 %v175, 2139095040
        %v726 = vshrl.u32 %v725, 23
        %v727 = vsub.s32 %v726, 127
        %v728 = vand.u32 2147483647, %v175
        %v729 = vand.u32 %v728, 8388607
        %v730 = vor.u32 %v729, 8388608
        %v731 = vsub.s32 0, %v730
        %v732 = vadd.s32 %v727, 1
        %vm733 = vcmp.gt.s32.totalorder %v732, 0
        %v734 = vsel %vm733, %v732, 0
        %v735 = vshrl.u32 %v734, 5
        %v736 = vand.u32 %v734, 31
        %v737 = vsub.s32 32, %v736
        %v738 = vshrl.u32 683565275, %v737
        %v739 = vshll.u32 683565275, %v736
        %v740 = vshrl.u32 2475754826, %v737
        %v741 = vor.u32 %v739, %v740
        %v742 = vshll.u32 2475754826, %v736
        %v743 = vshrl.u32 2131351028, %v737
        %v744 = vor.u32 %v742, %v743
        %v745 = vshll.u32 2131351028, %v736
        %v746 = vshrl.u32 2102212464, %v737
        %v747 = vor.u32 %v745, %v746
        %v748 = vshll.u32 2102212464, %v736
        %v749 = vshrl.u32 920167782, %v737
        %v750 = vor.u32 %v748, %v749
        %v751 = vshll.u32 920167782, %v736
        %v752 = vshrl.u32 1326507024, %v737
        %v753 = vor.u32 %v751, %v752
        %vm754 = vcmp.lt.s32.totalorder %v735, 1
        %vm755 = vcmp.lt.s32.totalorder %v735, 2
        %vm756 = vcmp.lt.s32.totalorder %v735, 3
        %vm757 = vcmp.lt.s32.totalorder %v735, 4
        %v758 = vsel %vm754, %v738, %v741
        %v759 = vsel %vm757, %v747, 2102212464
        %v760 = vsel %vm756, %v744, %v759
        %v761 = vsel %vm755, %v758, %v760
        %v762 = vsel %vm754, %v741, %v744
        %v763 = vsel %vm757, %v750, 920167782
        %v764 = vsel %vm756, %v747, %v763
        %v765 = vsel %vm755, %v762, %v764
        %v766 = vsel %vm754, %v744, %v747
        %v767 = vsel %vm757, %v753, 1326507024
        %v768 = vsel %vm756, %v750, %v767
        %v769 = vsel %vm755, %v766, %v768
        %v770 = vshll.u32 %v730, 8
        %v771 = vmul.u32.u64.compose %v770, %v769
        %v772 = vextract.low.u32 %v771
        %v773 = vextract.high.u32 %v771
        %v774 = vmul.u32.u64.compose %v770, %v765
        %v775 = vextract.low.u32 %v774
        %v776 = vextract.high.u32 %v774
        %v777 = vmul.u32 %v770, %v761
        %v778 = vadd.s32 %v773, %v775
        %vm779 = vc.u32 %v773, %v775
        %v780 = vadd.s32 %v776, 1
        %v781 = vsel %vm779, %v780, %v776
        %v782 = vadd.s32 %v777, %v781
        %v783 = vadd.s32 %v782, 536870912
        %v784 = vshrl.u32 %v783, 30
        %v785 = vshll.u32 %v784, 30
        %v786 = vsub.s32 %v782, %v785
        %vm787 = vcmp.lt.s32.totalorder %v786, 0
        %v788 = vsub.s32 0, %v786
        %v789 = vsel %vm787, %v788, %v786
        %v790 = vclz %v789
        %v791 = vsub.s32 %v790, 2
        %vm792 = vcmp.gt.s32.totalorder 0, %v791
        %v793 = vsel %vm792, 0, %v791
        %v794 = vsub.s32 32, %v793
        %v795 = vshll.u32 %v786, %v793
        %v796 = vshrl.u32 %v778, %v794
        %v797 = vor.u32 %v795, %v796
        %v798 = vsub.s32 4294967266, %v793
        %v799 = vadd.s32 %v798, 127
        %v800 = vshll.u32 %v799, 23
        %v801 = vor.u32 4788187, %v800
        %v802 = vand.u32 2147483647, %v801
        %v804 = vcvt.s32.f32 %v797
        %v805 = vmul.f32 %v804, %v802
        %v806 = vxor.u32 %v805, 2147483648
        %v807 = vsel %vm724, %v806, %v805
        %v808 = vsub.s32 4, %v784
        %v809 = vsel %vm724, %v808, %v784
        %v810 = vsel %vm723, %v175, %v807
        %v811 = vsel %vm723, 0, %v809
        %v812 = vcosq.f32.pop %v810
        %v813 = vsinq.f32.pop %v810
        %vm814 = vweird.f32 %v175
        %v815 = vadd.s32 %v811, 3
        %v816 = vand.u32 %v815, 3
        %vm817 = vcmp.lt.s32.totalorder %v816, 2
        %vm818 = vcmp.eq.s32.totalorder %v816, 0
        %v819 = vxor.u32 %v813, 2147483648
        %v820 = vsel %vm818, %v812, %v819
        %vm821 = vcmp.eq.s32.totalorder %v816, 2
        %v822 = vxor.u32 %v812, 2147483648
        %v823 = vsel %vm821, %v822, %v813
        %v824 = vsel %vm817, %v820, %v823
        %v825 = vsel %vm814, nan, %v824
        %v826 = vand.u32 2147483647, %v176
        %vm827 = vcmp.le.f32.partialorder %v826, 0.7853982
        %vm828 = vcmp.lt.s32.totalorder %v176, 0
        %v829 = vand.u32 %v176, 2139095040
        %v830 = vshrl.u32 %v829, 23
        %v831 = vsub.s32 %v830, 127
        %v832 = vand.u32 2147483647, %v176
        %v833 = vand.u32 %v832, 8388607
        %v834 = vor.u32 %v833, 8388608
        %v835 = vsub.s32 0, %v834
        %v836 = vadd.s32 %v831, 1
        %vm837 = vcmp.gt.s32.totalorder %v836, 0
        %v838 = vsel %vm837, %v836, 0
        %v839 = vshrl.u32 %v838, 5
        %v840 = vand.u32 %v838, 31
        %v841 = vsub.s32 32, %v840
        %v842 = vshrl.u32 683565275, %v841
        %v843 = vshll.u32 683565275, %v840
        %v844 = vshrl.u32 2475754826, %v841
        %v845 = vor.u32 %v843, %v844
        %v846 = vshll.u32 2475754826, %v840
        %v847 = vshrl.u32 2131351028, %v841
        %v848 = vor.u32 %v846, %v847
        %v849 = vshll.u32 2131351028, %v840
        %v850 = vshrl.u32 2102212464, %v841
        %v851 = vor.u32 %v849, %v850
        %v852 = vshll.u32 2102212464, %v840
        %v853 = vshrl.u32 920167782, %v841
        %v854 = vor.u32 %v852, %v853
        %v855 = vshll.u32 920167782, %v840
        %v856 = vshrl.u32 1326507024, %v841
        %v857 = vor.u32 %v855, %v856
        %vm858 = vcmp.lt.s32.totalorder %v839, 1
        %vm859 = vcmp.lt.s32.totalorder %v839, 2
        %vm860 = vcmp.lt.s32.totalorder %v839, 3
        %vm861 = vcmp.lt.s32.totalorder %v839, 4
        %v862 = vsel %vm858, %v842, %v845
        %v863 = vsel %vm861, %v851, 2102212464
        %v864 = vsel %vm860, %v848, %v863
        %v865 = vsel %vm859, %v862, %v864
        %v866 = vsel %vm858, %v845, %v848
        %v867 = vsel %vm861, %v854, 920167782
        %v868 = vsel %vm860, %v851, %v867
        %v869 = vsel %vm859, %v866, %v868
        %v870 = vsel %vm858, %v848, %v851
        %v871 = vsel %vm861, %v857, 1326507024
        %v872 = vsel %vm860, %v854, %v871
        %v873 = vsel %vm859, %v870, %v872
        %v874 = vshll.u32 %v834, 8
        %v875 = vmul.u32.u64.compose %v874, %v873
        %v876 = vextract.low.u32 %v875
        %v877 = vextract.high.u32 %v875
        %v878 = vmul.u32.u64.compose %v874, %v869
        %v879 = vextract.low.u32 %v878
        %v880 = vextract.high.u32 %v878
        %v881 = vmul.u32 %v874, %v865
        %v882 = vadd.s32 %v877, %v879
        %vm883 = vc.u32 %v877, %v879
        %v884 = vadd.s32 %v880, 1
        %v885 = vsel %vm883, %v884, %v880
        %v886 = vadd.s32 %v881, %v885
        %v887 = vadd.s32 %v886, 536870912
        %v888 = vshrl.u32 %v887, 30
        %v889 = vshll.u32 %v888, 30
        %v890 = vsub.s32 %v886, %v889
        %vm891 = vcmp.lt.s32.totalorder %v890, 0
        %v892 = vsub.s32 0, %v890
        %v893 = vsel %vm891, %v892, %v890
        %v894 = vclz %v893
        %v895 = vsub.s32 %v894, 2
        %vm896 = vcmp.gt.s32.totalorder 0, %v895
        %v897 = vsel %vm896, 0, %v895
        %v898 = vsub.s32 32, %v897
        %v899 = vshll.u32 %v890, %v897
        %v900 = vshrl.u32 %v882, %v898
        %v901 = vor.u32 %v899, %v900
        %v902 = vsub.s32 4294967266, %v897
        %v903 = vadd.s32 %v902, 127
        %v904 = vshll.u32 %v903, 23
        %v905 = vor.u32 4788187, %v904
        %v906 = vand.u32 2147483647, %v905
        %v908 = vcvt.s32.f32 %v901
        %v909 = vmul.f32 %v908, %v906
        %v910 = vxor.u32 %v909, 2147483648
        %v911 = vsel %vm828, %v910, %v909
        %v912 = vsub.s32 4, %v888
        %v913 = vsel %vm828, %v912, %v888
        %v914 = vsel %vm827, %v176, %v911
        %v915 = vsel %vm827, 0, %v913
        %v916 = vcosq.f32.pop %v914
        %v917 = vsinq.f32.pop %v914
        %vm918 = vweird.f32 %v176
        %v919 = vadd.s32 %v915, 3
        %v920 = vand.u32 %v919, 3
        %vm921 = vcmp.lt.s32.totalorder %v920, 2
        %vm922 = vcmp.eq.s32.totalorder %v920, 0
        %v923 = vxor.u32 %v917, 2147483648
        %v924 = vsel %vm922, %v916, %v923
        %vm925 = vcmp.eq.s32.totalorder %v920, 2
        %v926 = vxor.u32 %v916, 2147483648
        %v927 = vsel %vm925, %v926, %v917
        %v928 = vsel %vm921, %v924, %v927
        %v929 = vsel %vm918, nan, %v928
        %v930 = vand.u32 2147483647, %v177
        %vm931 = vcmp.le.f32.partialorder %v930, 0.7853982
        %vm932 = vcmp.lt.s32.totalorder %v177, 0
        %v933 = vand.u32 %v177, 2139095040
        %v934 = vshrl.u32 %v933, 23
        %v935 = vsub.s32 %v934, 127
        %v936 = vand.u32 2147483647, %v177
        %v937 = vand.u32 %v936, 8388607
        %v938 = vor.u32 %v937, 8388608
        %v939 = vsub.s32 0, %v938
        %v940 = vadd.s32 %v935, 1
        %vm941 = vcmp.gt.s32.totalorder %v940, 0
        %v942 = vsel %vm941, %v940, 0
        %v943 = vshrl.u32 %v942, 5
        %v944 = vand.u32 %v942, 31
        %v945 = vsub.s32 32, %v944
        %v946 = vshrl.u32 683565275, %v945
        %v947 = vshll.u32 683565275, %v944
        %v948 = vshrl.u32 2475754826, %v945
        %v949 = vor.u32 %v947, %v948
        %v950 = vshll.u32 2475754826, %v944
        %v951 = vshrl.u32 2131351028, %v945
        %v952 = vor.u32 %v950, %v951
        %v953 = vshll.u32 2131351028, %v944
        %v954 = vshrl.u32 2102212464, %v945
        %v955 = vor.u32 %v953, %v954
        %v956 = vshll.u32 2102212464, %v944
        %v957 = vshrl.u32 920167782, %v945
        %v958 = vor.u32 %v956, %v957
        %v959 = vshll.u32 920167782, %v944
        %v960 = vshrl.u32 1326507024, %v945
        %v961 = vor.u32 %v959, %v960
        %vm962 = vcmp.lt.s32.totalorder %v943, 1
        %vm963 = vcmp.lt.s32.totalorder %v943, 2
        %vm964 = vcmp.lt.s32.totalorder %v943, 3
        %vm965 = vcmp.lt.s32.totalorder %v943, 4
        %v966 = vsel %vm962, %v946, %v949
        %v967 = vsel %vm965, %v955, 2102212464
        %v968 = vsel %vm964, %v952, %v967
        %v969 = vsel %vm963, %v966, %v968
        %v970 = vsel %vm962, %v949, %v952
        %v971 = vsel %vm965, %v958, 920167782
        %v972 = vsel %vm964, %v955, %v971
        %v973 = vsel %vm963, %v970, %v972
        %v974 = vsel %vm962, %v952, %v955
        %v975 = vsel %vm965, %v961, 1326507024
        %v976 = vsel %vm964, %v958, %v975
        %v977 = vsel %vm963, %v974, %v976
        %v978 = vshll.u32 %v938, 8
        %v979 = vmul.u32.u64.compose %v978, %v977
        %v980 = vextract.low.u32 %v979
        %v981 = vextract.high.u32 %v979
        %v982 = vmul.u32.u64.compose %v978, %v973
        %v983 = vextract.low.u32 %v982
        %v984 = vextract.high.u32 %v982
        %v985 = vmul.u32 %v978, %v969
        %v986 = vadd.s32 %v981, %v983
        %vm987 = vc.u32 %v981, %v983
        %v988 = vadd.s32 %v984, 1
        %v989 = vsel %vm987, %v988, %v984
        %v990 = vadd.s32 %v985, %v989
        %v991 = vadd.s32 %v990, 536870912
        %v992 = vshrl.u32 %v991, 30
        %v993 = vshll.u32 %v992, 30
        %v994 = vsub.s32 %v990, %v993
        %vm995 = vcmp.lt.s32.totalorder %v994, 0
        %v996 = vsub.s32 0, %v994
        %v997 = vsel %vm995, %v996, %v994
        %v998 = vclz %v997
        %v999 = vsub.s32 %v998, 2
        %vm1000 = vcmp.gt.s32.totalorder 0, %v999
        %v1001 = vsel %vm1000, 0, %v999
        %v1002 = vsub.s32 32, %v1001
        %v1003 = vshll.u32 %v994, %v1001
        %v1004 = vshrl.u32 %v986, %v1002
        %v1005 = vor.u32 %v1003, %v1004
        %v1006 = vsub.s32 4294967266, %v1001
        %v1007 = vadd.s32 %v1006, 127
        %v1008 = vshll.u32 %v1007, 23
        %v1009 = vor.u32 4788187, %v1008
        %v1010 = vand.u32 2147483647, %v1009
        %v1012 = vcvt.s32.f32 %v1005
        %v1013 = vmul.f32 %v1012, %v1010
        %v1014 = vxor.u32 %v1013, 2147483648
        %v1015 = vsel %vm932, %v1014, %v1013
        %v1016 = vsub.s32 4, %v992
        %v1017 = vsel %vm932, %v1016, %v992
        %v1018 = vsel %vm931, %v177, %v1015
        %v1019 = vsel %vm931, 0, %v1017
        %v1020 = vcosq.f32.pop %v1018
        %v1021 = vsinq.f32.pop %v1018
        %vm1022 = vweird.f32 %v177
        %v1023 = vadd.s32 %v1019, 3
        %v1024 = vand.u32 %v1023, 3
        %vm1025 = vcmp.lt.s32.totalorder %v1024, 2
        %vm1026 = vcmp.eq.s32.totalorder %v1024, 0
        %v1027 = vxor.u32 %v1021, 2147483648
        %v1028 = vsel %vm1026, %v1020, %v1027
        %vm1029 = vcmp.eq.s32.totalorder %v1024, 2
        %v1030 = vxor.u32 %v1020, 2147483648
        %v1031 = vsel %vm1029, %v1030, %v1021
        %v1032 = vsel %vm1025, %v1028, %v1031
        %v1033 = vsel %vm1022, nan, %v1032
        %v1034 = vand.u32 2147483647, %v178
        %vm1035 = vcmp.le.f32.partialorder %v1034, 0.7853982
        %vm1036 = vcmp.lt.s32.totalorder %v178, 0
        %v1037 = vand.u32 %v178, 2139095040
        %v1038 = vshrl.u32 %v1037, 23
        %v1039 = vsub.s32 %v1038, 127
        %v1040 = vand.u32 2147483647, %v178
        %v1041 = vand.u32 %v1040, 8388607
        %v1042 = vor.u32 %v1041, 8388608
        %v1043 = vsub.s32 0, %v1042
        %v1044 = vadd.s32 %v1039, 1
        %vm1045 = vcmp.gt.s32.totalorder %v1044, 0
        %v1046 = vsel %vm1045, %v1044, 0
        %v1047 = vshrl.u32 %v1046, 5
        %v1048 = vand.u32 %v1046, 31
        %v1049 = vsub.s32 32, %v1048
        %v1050 = vshrl.u32 683565275, %v1049
        %v1051 = vshll.u32 683565275, %v1048
        %v1052 = vshrl.u32 2475754826, %v1049
        %v1053 = vor.u32 %v1051, %v1052
        %v1054 = vshll.u32 2475754826, %v1048
        %v1055 = vshrl.u32 2131351028, %v1049
        %v1056 = vor.u32 %v1054, %v1055
        %v1057 = vshll.u32 2131351028, %v1048
        %v1058 = vshrl.u32 2102212464, %v1049
        %v1059 = vor.u32 %v1057, %v1058
        %v1060 = vshll.u32 2102212464, %v1048
        %v1061 = vshrl.u32 920167782, %v1049
        %v1062 = vor.u32 %v1060, %v1061
        %v1063 = vshll.u32 920167782, %v1048
        %v1064 = vshrl.u32 1326507024, %v1049
        %v1065 = vor.u32 %v1063, %v1064
        %vm1066 = vcmp.lt.s32.totalorder %v1047, 1
        %vm1067 = vcmp.lt.s32.totalorder %v1047, 2
        %vm1068 = vcmp.lt.s32.totalorder %v1047, 3
        %vm1069 = vcmp.lt.s32.totalorder %v1047, 4
        %v1070 = vsel %vm1066, %v1050, %v1053
        %v1071 = vsel %vm1069, %v1059, 2102212464
        %v1072 = vsel %vm1068, %v1056, %v1071
        %v1073 = vsel %vm1067, %v1070, %v1072
        %v1074 = vsel %vm1066, %v1053, %v1056
        %v1075 = vsel %vm1069, %v1062, 920167782
        %v1076 = vsel %vm1068, %v1059, %v1075
        %v1077 = vsel %vm1067, %v1074, %v1076
        %v1078 = vsel %vm1066, %v1056, %v1059
        %v1079 = vsel %vm1069, %v1065, 1326507024
        %v1080 = vsel %vm1068, %v1062, %v1079
        %v1081 = vsel %vm1067, %v1078, %v1080
        %v1082 = vshll.u32 %v1042, 8
        %v1083 = vmul.u32.u64.compose %v1082, %v1081
        %v1084 = vextract.low.u32 %v1083
        %v1085 = vextract.high.u32 %v1083
        %v1086 = vmul.u32.u64.compose %v1082, %v1077
        %v1087 = vextract.low.u32 %v1086
        %v1088 = vextract.high.u32 %v1086
        %v1089 = vmul.u32 %v1082, %v1073
        %v1090 = vadd.s32 %v1085, %v1087
        %vm1091 = vc.u32 %v1085, %v1087
        %v1092 = vadd.s32 %v1088, 1
        %v1093 = vsel %vm1091, %v1092, %v1088
        %v1094 = vadd.s32 %v1089, %v1093
        %v1095 = vadd.s32 %v1094, 536870912
        %v1096 = vshrl.u32 %v1095, 30
        %v1097 = vshll.u32 %v1096, 30
        %v1098 = vsub.s32 %v1094, %v1097
        %vm1099 = vcmp.lt.s32.totalorder %v1098, 0
        %v1100 = vsub.s32 0, %v1098
        %v1101 = vsel %vm1099, %v1100, %v1098
        %v1102 = vclz %v1101
        %v1103 = vsub.s32 %v1102, 2
        %vm1104 = vcmp.gt.s32.totalorder 0, %v1103
        %v1105 = vsel %vm1104, 0, %v1103
        %v1106 = vsub.s32 32, %v1105
        %v1107 = vshll.u32 %v1098, %v1105
        %v1108 = vshrl.u32 %v1090, %v1106
        %v1109 = vor.u32 %v1107, %v1108
        %v1110 = vsub.s32 4294967266, %v1105
        %v1111 = vadd.s32 %v1110, 127
        %v1112 = vshll.u32 %v1111, 23
        %v1113 = vor.u32 4788187, %v1112
        %v1114 = vand.u32 2147483647, %v1113
        %v1116 = vcvt.s32.f32 %v1109
        %v1117 = vmul.f32 %v1116, %v1114
        %v1118 = vxor.u32 %v1117, 2147483648
        %v1119 = vsel %vm1036, %v1118, %v1117
        %v1120 = vsub.s32 4, %v1096
        %v1121 = vsel %vm1036, %v1120, %v1096
        %v1122 = vsel %vm1035, %v178, %v1119
        %v1123 = vsel %vm1035, 0, %v1121
        %v1124 = vcosq.f32.pop %v1122
        %v1125 = vsinq.f32.pop %v1122
        %vm1126 = vweird.f32 %v178
        %v1127 = vadd.s32 %v1123, 3
        %v1128 = vand.u32 %v1127, 3
        %vm1129 = vcmp.lt.s32.totalorder %v1128, 2
        %vm1130 = vcmp.eq.s32.totalorder %v1128, 0
        %v1131 = vxor.u32 %v1125, 2147483648
        %v1132 = vsel %vm1130, %v1124, %v1131
        %vm1133 = vcmp.eq.s32.totalorder %v1128, 2
        %v1134 = vxor.u32 %v1124, 2147483648
        %v1135 = vsel %vm1133, %v1134, %v1125
        %v1136 = vsel %vm1129, %v1132, %v1135
        %v1137 = vsel %vm1126, nan, %v1136
        %v1138 = vand.u32 2147483647, %v179
        %vm1139 = vcmp.le.f32.partialorder %v1138, 0.7853982
        %vm1140 = vcmp.lt.s32.totalorder %v179, 0
        %v1141 = vand.u32 %v179, 2139095040
        %v1142 = vshrl.u32 %v1141, 23
        %v1143 = vsub.s32 %v1142, 127
        %v1144 = vand.u32 2147483647, %v179
        %v1145 = vand.u32 %v1144, 8388607
        %v1146 = vor.u32 %v1145, 8388608
        %v1147 = vsub.s32 0, %v1146
        %v1148 = vadd.s32 %v1143, 1
        %vm1149 = vcmp.gt.s32.totalorder %v1148, 0
        %v1150 = vsel %vm1149, %v1148, 0
        %v1151 = vshrl.u32 %v1150, 5
        %v1152 = vand.u32 %v1150, 31
        %v1153 = vsub.s32 32, %v1152
        %v1154 = vshrl.u32 683565275, %v1153
        %v1155 = vshll.u32 683565275, %v1152
        %v1156 = vshrl.u32 2475754826, %v1153
        %v1157 = vor.u32 %v1155, %v1156
        %v1158 = vshll.u32 2475754826, %v1152
        %v1159 = vshrl.u32 2131351028, %v1153
        %v1160 = vor.u32 %v1158, %v1159
        %v1161 = vshll.u32 2131351028, %v1152
        %v1162 = vshrl.u32 2102212464, %v1153
        %v1163 = vor.u32 %v1161, %v1162
        %v1164 = vshll.u32 2102212464, %v1152
        %v1165 = vshrl.u32 920167782, %v1153
        %v1166 = vor.u32 %v1164, %v1165
        %v1167 = vshll.u32 920167782, %v1152
        %v1168 = vshrl.u32 1326507024, %v1153
        %v1169 = vor.u32 %v1167, %v1168
        %vm1170 = vcmp.lt.s32.totalorder %v1151, 1
        %vm1171 = vcmp.lt.s32.totalorder %v1151, 2
        %vm1172 = vcmp.lt.s32.totalorder %v1151, 3
        %vm1173 = vcmp.lt.s32.totalorder %v1151, 4
        %v1174 = vsel %vm1170, %v1154, %v1157
        %v1175 = vsel %vm1173, %v1163, 2102212464
        %v1176 = vsel %vm1172, %v1160, %v1175
        %v1177 = vsel %vm1171, %v1174, %v1176
        %v1178 = vsel %vm1170, %v1157, %v1160
        %v1179 = vsel %vm1173, %v1166, 920167782
        %v1180 = vsel %vm1172, %v1163, %v1179
        %v1181 = vsel %vm1171, %v1178, %v1180
        %v1182 = vsel %vm1170, %v1160, %v1163
        %v1183 = vsel %vm1173, %v1169, 1326507024
        %v1184 = vsel %vm1172, %v1166, %v1183
        %v1185 = vsel %vm1171, %v1182, %v1184
        %v1186 = vshll.u32 %v1146, 8
        %v1187 = vmul.u32.u64.compose %v1186, %v1185
        %v1188 = vextract.low.u32 %v1187
        %v1189 = vextract.high.u32 %v1187
        %v1190 = vmul.u32.u64.compose %v1186, %v1181
        %v1191 = vextract.low.u32 %v1190
        %v1192 = vextract.high.u32 %v1190
        %v1193 = vmul.u32 %v1186, %v1177
        %v1194 = vadd.s32 %v1189, %v1191
        %vm1195 = vc.u32 %v1189, %v1191
        %v1196 = vadd.s32 %v1192, 1
        %v1197 = vsel %vm1195, %v1196, %v1192
        %v1198 = vadd.s32 %v1193, %v1197
        %v1199 = vadd.s32 %v1198, 536870912
        %v1200 = vshrl.u32 %v1199, 30
        %v1201 = vshll.u32 %v1200, 30
        %v1202 = vsub.s32 %v1198, %v1201
        %vm1203 = vcmp.lt.s32.totalorder %v1202, 0
        %v1204 = vsub.s32 0, %v1202
        %v1205 = vsel %vm1203, %v1204, %v1202
        %v1206 = vclz %v1205
        %v1207 = vsub.s32 %v1206, 2
        %vm1208 = vcmp.gt.s32.totalorder 0, %v1207
        %v1209 = vsel %vm1208, 0, %v1207
        %v1210 = vsub.s32 32, %v1209
        %v1211 = vshll.u32 %v1202, %v1209
        %v1212 = vshrl.u32 %v1194, %v1210
        %v1213 = vor.u32 %v1211, %v1212
        %v1214 = vsub.s32 4294967266, %v1209
        %v1215 = vadd.s32 %v1214, 127
        %v1216 = vshll.u32 %v1215, 23
        %v1217 = vor.u32 4788187, %v1216
        %v1218 = vand.u32 2147483647, %v1217
        %v1220 = vcvt.s32.f32 %v1213
        %v1221 = vmul.f32 %v1220, %v1218
        %v1222 = vxor.u32 %v1221, 2147483648
        %v1223 = vsel %vm1140, %v1222, %v1221
        %v1224 = vsub.s32 4, %v1200
        %v1225 = vsel %vm1140, %v1224, %v1200
        %v1226 = vsel %vm1139, %v179, %v1223
        %v1227 = vsel %vm1139, 0, %v1225
        %v1228 = vcosq.f32.pop %v1226
        %v1229 = vsinq.f32.pop %v1226
        %vm1230 = vweird.f32 %v179
        %v1231 = vadd.s32 %v1227, 3
        %v1232 = vand.u32 %v1231, 3
        %vm1233 = vcmp.lt.s32.totalorder %v1232, 2
        %vm1234 = vcmp.eq.s32.totalorder %v1232, 0
        %v1235 = vxor.u32 %v1229, 2147483648
        %v1236 = vsel %vm1234, %v1228, %v1235
        %vm1237 = vcmp.eq.s32.totalorder %v1232, 2
        %v1238 = vxor.u32 %v1228, 2147483648
        %v1239 = vsel %vm1237, %v1238, %v1229
        %v1240 = vsel %vm1233, %v1236, %v1239
        %v1241 = vsel %vm1230, nan, %v1240
        %v1242 = vand.u32 2147483647, %v180
        %vm1243 = vcmp.le.f32.partialorder %v1242, 0.7853982
        %vm1244 = vcmp.lt.s32.totalorder %v180, 0
        %v1245 = vand.u32 %v180, 2139095040
        %v1246 = vshrl.u32 %v1245, 23
        %v1247 = vsub.s32 %v1246, 127
        %v1248 = vand.u32 2147483647, %v180
        %v1249 = vand.u32 %v1248, 8388607
        %v1250 = vor.u32 %v1249, 8388608
        %v1251 = vsub.s32 0, %v1250
        %v1252 = vadd.s32 %v1247, 1
        %vm1253 = vcmp.gt.s32.totalorder %v1252, 0
        %v1254 = vsel %vm1253, %v1252, 0
        %v1255 = vshrl.u32 %v1254, 5
        %v1256 = vand.u32 %v1254, 31
        %v1257 = vsub.s32 32, %v1256
        %v1258 = vshrl.u32 683565275, %v1257
        %v1259 = vshll.u32 683565275, %v1256
        %v1260 = vshrl.u32 2475754826, %v1257
        %v1261 = vor.u32 %v1259, %v1260
        %v1262 = vshll.u32 2475754826, %v1256
        %v1263 = vshrl.u32 2131351028, %v1257
        %v1264 = vor.u32 %v1262, %v1263
        %v1265 = vshll.u32 2131351028, %v1256
        %v1266 = vshrl.u32 2102212464, %v1257
        %v1267 = vor.u32 %v1265, %v1266
        %v1268 = vshll.u32 2102212464, %v1256
        %v1269 = vshrl.u32 920167782, %v1257
        %v1270 = vor.u32 %v1268, %v1269
        %v1271 = vshll.u32 920167782, %v1256
        %v1272 = vshrl.u32 1326507024, %v1257
        %v1273 = vor.u32 %v1271, %v1272
        %vm1274 = vcmp.lt.s32.totalorder %v1255, 1
        %vm1275 = vcmp.lt.s32.totalorder %v1255, 2
        %vm1276 = vcmp.lt.s32.totalorder %v1255, 3
        %vm1277 = vcmp.lt.s32.totalorder %v1255, 4
        %v1278 = vsel %vm1274, %v1258, %v1261
        %v1279 = vsel %vm1277, %v1267, 2102212464
        %v1280 = vsel %vm1276, %v1264, %v1279
        %v1281 = vsel %vm1275, %v1278, %v1280
        %v1282 = vsel %vm1274, %v1261, %v1264
        %v1283 = vsel %vm1277, %v1270, 920167782
        %v1284 = vsel %vm1276, %v1267, %v1283
        %v1285 = vsel %vm1275, %v1282, %v1284
        %v1286 = vsel %vm1274, %v1264, %v1267
        %v1287 = vsel %vm1277, %v1273, 1326507024
        %v1288 = vsel %vm1276, %v1270, %v1287
        %v1289 = vsel %vm1275, %v1286, %v1288
        %v1290 = vshll.u32 %v1250, 8
        %v1291 = vmul.u32.u64.compose %v1290, %v1289
        %v1292 = vextract.low.u32 %v1291
        %v1293 = vextract.high.u32 %v1291
        %v1294 = vmul.u32.u64.compose %v1290, %v1285
        %v1295 = vextract.low.u32 %v1294
        %v1296 = vextract.high.u32 %v1294
        %v1297 = vmul.u32 %v1290, %v1281
        %v1298 = vadd.s32 %v1293, %v1295
        %vm1299 = vc.u32 %v1293, %v1295
        %v1300 = vadd.s32 %v1296, 1
        %v1301 = vsel %vm1299, %v1300, %v1296
        %v1302 = vadd.s32 %v1297, %v1301
        %v1303 = vadd.s32 %v1302, 536870912
        %v1304 = vshrl.u32 %v1303, 30
        %v1305 = vshll.u32 %v1304, 30
        %v1306 = vsub.s32 %v1302, %v1305
        %vm1307 = vcmp.lt.s32.totalorder %v1306, 0
        %v1308 = vsub.s32 0, %v1306
        %v1309 = vsel %vm1307, %v1308, %v1306
        %v1310 = vclz %v1309
        %v1311 = vsub.s32 %v1310, 2
        %vm1312 = vcmp.gt.s32.totalorder 0, %v1311
        %v1313 = vsel %vm1312, 0, %v1311
        %v1314 = vsub.s32 32, %v1313
        %v1315 = vshll.u32 %v1306, %v1313
        %v1316 = vshrl.u32 %v1298, %v1314
        %v1317 = vor.u32 %v1315, %v1316
        %v1318 = vsub.s32 4294967266, %v1313
        %v1319 = vadd.s32 %v1318, 127
        %v1320 = vshll.u32 %v1319, 23
        %v1321 = vor.u32 4788187, %v1320
        %v1322 = vand.u32 2147483647, %v1321
        %v1324 = vcvt.s32.f32 %v1317
        %v1325 = vmul.f32 %v1324, %v1322
        %v1326 = vxor.u32 %v1325, 2147483648
        %v1327 = vsel %vm1244, %v1326, %v1325
        %v1328 = vsub.s32 4, %v1304
        %v1329 = vsel %vm1244, %v1328, %v1304
        %v1330 = vsel %vm1243, %v180, %v1327
        %v1331 = vsel %vm1243, 0, %v1329
        %v1332 = vcosq.f32.pop %v1330
        %v1333 = vsinq.f32.pop %v1330
        %vm1334 = vweird.f32 %v180
        %v1335 = vadd.s32 %v1331, 3
        %v1336 = vand.u32 %v1335, 3
        %vm1337 = vcmp.lt.s32.totalorder %v1336, 2
        %vm1338 = vcmp.eq.s32.totalorder %v1336, 0
        %v1339 = vxor.u32 %v1333, 2147483648
        %v1340 = vsel %vm1338, %v1332, %v1339
        %vm1341 = vcmp.eq.s32.totalorder %v1336, 2
        %v1342 = vxor.u32 %v1332, 2147483648
        %v1343 = vsel %vm1341, %v1342, %v1333
        %v1344 = vsel %vm1337, %v1340, %v1343
        %v1345 = vsel %vm1334, nan, %v1344
        %v1346 = vand.u32 2147483647, %v181
        %vm1347 = vcmp.le.f32.partialorder %v1346, 0.7853982
        %vm1348 = vcmp.lt.s32.totalorder %v181, 0
        %v1349 = vand.u32 %v181, 2139095040
        %v1350 = vshrl.u32 %v1349, 23
        %v1351 = vsub.s32 %v1350, 127
        %v1352 = vand.u32 2147483647, %v181
        %v1353 = vand.u32 %v1352, 8388607
        %v1354 = vor.u32 %v1353, 8388608
        %v1355 = vsub.s32 0, %v1354
        %v1356 = vadd.s32 %v1351, 1
        %vm1357 = vcmp.gt.s32.totalorder %v1356, 0
        %v1358 = vsel %vm1357, %v1356, 0
        %v1359 = vshrl.u32 %v1358, 5
        %v1360 = vand.u32 %v1358, 31
        %v1361 = vsub.s32 32, %v1360
        %v1362 = vshrl.u32 683565275, %v1361
        %v1363 = vshll.u32 683565275, %v1360
        %v1364 = vshrl.u32 2475754826, %v1361
        %v1365 = vor.u32 %v1363, %v1364
        %v1366 = vshll.u32 2475754826, %v1360
        %v1367 = vshrl.u32 2131351028, %v1361
        %v1368 = vor.u32 %v1366, %v1367
        %v1369 = vshll.u32 2131351028, %v1360
        %v1370 = vshrl.u32 2102212464, %v1361
        %v1371 = vor.u32 %v1369, %v1370
        %v1372 = vshll.u32 2102212464, %v1360
        %v1373 = vshrl.u32 920167782, %v1361
        %v1374 = vor.u32 %v1372, %v1373
        %v1375 = vshll.u32 920167782, %v1360
        %v1376 = vshrl.u32 1326507024, %v1361
        %v1377 = vor.u32 %v1375, %v1376
        %vm1378 = vcmp.lt.s32.totalorder %v1359, 1
        %vm1379 = vcmp.lt.s32.totalorder %v1359, 2
        %vm1380 = vcmp.lt.s32.totalorder %v1359, 3
        %vm1381 = vcmp.lt.s32.totalorder %v1359, 4
        %v1382 = vsel %vm1378, %v1362, %v1365
        %v1383 = vsel %vm1381, %v1371, 2102212464
        %v1384 = vsel %vm1380, %v1368, %v1383
        %v1385 = vsel %vm1379, %v1382, %v1384
        %v1386 = vsel %vm1378, %v1365, %v1368
        %v1387 = vsel %vm1381, %v1374, 920167782
        %v1388 = vsel %vm1380, %v1371, %v1387
        %v1389 = vsel %vm1379, %v1386, %v1388
        %v1390 = vsel %vm1378, %v1368, %v1371
        %v1391 = vsel %vm1381, %v1377, 1326507024
        %v1392 = vsel %vm1380, %v1374, %v1391
        %v1393 = vsel %vm1379, %v1390, %v1392
        %v1394 = vshll.u32 %v1354, 8
        %v1395 = vmul.u32.u64.compose %v1394, %v1393
        %v1396 = vextract.low.u32 %v1395
        %v1397 = vextract.high.u32 %v1395
        %v1398 = vmul.u32.u64.compose %v1394, %v1389
        %v1399 = vextract.low.u32 %v1398
        %v1400 = vextract.high.u32 %v1398
        %v1401 = vmul.u32 %v1394, %v1385
        %v1402 = vadd.s32 %v1397, %v1399
        %vm1403 = vc.u32 %v1397, %v1399
        %v1404 = vadd.s32 %v1400, 1
        %v1405 = vsel %vm1403, %v1404, %v1400
        %v1406 = vadd.s32 %v1401, %v1405
        %v1407 = vadd.s32 %v1406, 536870912
        %v1408 = vshrl.u32 %v1407, 30
        %v1409 = vshll.u32 %v1408, 30
        %v1410 = vsub.s32 %v1406, %v1409
        %vm1411 = vcmp.lt.s32.totalorder %v1410, 0
        %v1412 = vsub.s32 0, %v1410
        %v1413 = vsel %vm1411, %v1412, %v1410
        %v1414 = vclz %v1413
        %v1415 = vsub.s32 %v1414, 2
        %vm1416 = vcmp.gt.s32.totalorder 0, %v1415
        %v1417 = vsel %vm1416, 0, %v1415
        %v1418 = vsub.s32 32, %v1417
        %v1419 = vshll.u32 %v1410, %v1417
        %v1420 = vshrl.u32 %v1402, %v1418
        %v1421 = vor.u32 %v1419, %v1420
        %v1422 = vsub.s32 4294967266, %v1417
        %v1423 = vadd.s32 %v1422, 127
        %v1424 = vshll.u32 %v1423, 23
        %v1425 = vor.u32 4788187, %v1424
        %v1426 = vand.u32 2147483647, %v1425
        %v1428 = vcvt.s32.f32 %v1421
        %v1429 = vmul.f32 %v1428, %v1426
        %v1430 = vxor.u32 %v1429, 2147483648
        %v1431 = vsel %vm1348, %v1430, %v1429
        %v1432 = vsub.s32 4, %v1408
        %v1433 = vsel %vm1348, %v1432, %v1408
        %v1434 = vsel %vm1347, %v181, %v1431
        %v1435 = vsel %vm1347, 0, %v1433
        %v1436 = vcosq.f32.pop %v1434
        %v1437 = vsinq.f32.pop %v1434
        %vm1438 = vweird.f32 %v181
        %v1439 = vadd.s32 %v1435, 3
        %v1440 = vand.u32 %v1439, 3
        %vm1441 = vcmp.lt.s32.totalorder %v1440, 2
        %vm1442 = vcmp.eq.s32.totalorder %v1440, 0
        %v1443 = vxor.u32 %v1437, 2147483648
        %v1444 = vsel %vm1442, %v1436, %v1443
        %vm1445 = vcmp.eq.s32.totalorder %v1440, 2
        %v1446 = vxor.u32 %v1436, 2147483648
        %v1447 = vsel %vm1445, %v1446, %v1437
        %v1448 = vsel %vm1441, %v1444, %v1447
        %v1449 = vsel %vm1438, nan, %v1448
        %v1450 = vand.u32 2147483647, %v182
        %vm1451 = vcmp.le.f32.partialorder %v1450, 0.7853982
        %vm1452 = vcmp.lt.s32.totalorder %v182, 0
        %v1453 = vand.u32 %v182, 2139095040
        %v1454 = vshrl.u32 %v1453, 23
        %v1455 = vsub.s32 %v1454, 127
        %v1456 = vand.u32 2147483647, %v182
        %v1457 = vand.u32 %v1456, 8388607
        %v1458 = vor.u32 %v1457, 8388608
        %v1459 = vsub.s32 0, %v1458
        %v1460 = vadd.s32 %v1455, 1
        %vm1461 = vcmp.gt.s32.totalorder %v1460, 0
        %v1462 = vsel %vm1461, %v1460, 0
        %v1463 = vshrl.u32 %v1462, 5
        %v1464 = vand.u32 %v1462, 31
        %v1465 = vsub.s32 32, %v1464
        %v1466 = vshrl.u32 683565275, %v1465
        %v1467 = vshll.u32 683565275, %v1464
        %v1468 = vshrl.u32 2475754826, %v1465
        %v1469 = vor.u32 %v1467, %v1468
        %v1470 = vshll.u32 2475754826, %v1464
        %v1471 = vshrl.u32 2131351028, %v1465
        %v1472 = vor.u32 %v1470, %v1471
        %v1473 = vshll.u32 2131351028, %v1464
        %v1474 = vshrl.u32 2102212464, %v1465
        %v1475 = vor.u32 %v1473, %v1474
        %v1476 = vshll.u32 2102212464, %v1464
        %v1477 = vshrl.u32 920167782, %v1465
        %v1478 = vor.u32 %v1476, %v1477
        %v1479 = vshll.u32 920167782, %v1464
        %v1480 = vshrl.u32 1326507024, %v1465
        %v1481 = vor.u32 %v1479, %v1480
        %vm1482 = vcmp.lt.s32.totalorder %v1463, 1
        %vm1483 = vcmp.lt.s32.totalorder %v1463, 2
        %vm1484 = vcmp.lt.s32.totalorder %v1463, 3
        %vm1485 = vcmp.lt.s32.totalorder %v1463, 4
        %v1486 = vsel %vm1482, %v1466, %v1469
        %v1487 = vsel %vm1485, %v1475, 2102212464
        %v1488 = vsel %vm1484, %v1472, %v1487
        %v1489 = vsel %vm1483, %v1486, %v1488
        %v1490 = vsel %vm1482, %v1469, %v1472
        %v1491 = vsel %vm1485, %v1478, 920167782
        %v1492 = vsel %vm1484, %v1475, %v1491
        %v1493 = vsel %vm1483, %v1490, %v1492
        %v1494 = vsel %vm1482, %v1472, %v1475
        %v1495 = vsel %vm1485, %v1481, 1326507024
        %v1496 = vsel %vm1484, %v1478, %v1495
        %v1497 = vsel %vm1483, %v1494, %v1496
        %v1498 = vshll.u32 %v1458, 8
        %v1499 = vmul.u32.u64.compose %v1498, %v1497
        %v1500 = vextract.low.u32 %v1499
        %v1501 = vextract.high.u32 %v1499
        %v1502 = vmul.u32.u64.compose %v1498, %v1493
        %v1503 = vextract.low.u32 %v1502
        %v1504 = vextract.high.u32 %v1502
        %v1505 = vmul.u32 %v1498, %v1489
        %v1506 = vadd.s32 %v1501, %v1503
        %vm1507 = vc.u32 %v1501, %v1503
        %v1508 = vadd.s32 %v1504, 1
        %v1509 = vsel %vm1507, %v1508, %v1504
        %v1510 = vadd.s32 %v1505, %v1509
        %v1511 = vadd.s32 %v1510, 536870912
        %v1512 = vshrl.u32 %v1511, 30
        %v1513 = vshll.u32 %v1512, 30
        %v1514 = vsub.s32 %v1510, %v1513
        %vm1515 = vcmp.lt.s32.totalorder %v1514, 0
        %v1516 = vsub.s32 0, %v1514
        %v1517 = vsel %vm1515, %v1516, %v1514
        %v1518 = vclz %v1517
        %v1519 = vsub.s32 %v1518, 2
        %vm1520 = vcmp.gt.s32.totalorder 0, %v1519
        %v1521 = vsel %vm1520, 0, %v1519
        %v1522 = vsub.s32 32, %v1521
        %v1523 = vshll.u32 %v1514, %v1521
        %v1524 = vshrl.u32 %v1506, %v1522
        %v1525 = vor.u32 %v1523, %v1524
        %v1526 = vsub.s32 4294967266, %v1521
        %v1527 = vadd.s32 %v1526, 127
        %v1528 = vshll.u32 %v1527, 23
        %v1529 = vor.u32 4788187, %v1528
        %v1530 = vand.u32 2147483647, %v1529
        %v1532 = vcvt.s32.f32 %v1525
        %v1533 = vmul.f32 %v1532, %v1530
        %v1534 = vxor.u32 %v1533, 2147483648
        %v1535 = vsel %vm1452, %v1534, %v1533
        %v1536 = vsub.s32 4, %v1512
        %v1537 = vsel %vm1452, %v1536, %v1512
        %v1538 = vsel %vm1451, %v182, %v1535
        %v1539 = vsel %vm1451, 0, %v1537
        %v1540 = vcosq.f32.pop %v1538
        %v1541 = vsinq.f32.pop %v1538
        %vm1542 = vweird.f32 %v182
        %v1543 = vadd.s32 %v1539, 3
        %v1544 = vand.u32 %v1543, 3
        %vm1545 = vcmp.lt.s32.totalorder %v1544, 2
        %vm1546 = vcmp.eq.s32.totalorder %v1544, 0
        %v1547 = vxor.u32 %v1541, 2147483648
        %v1548 = vsel %vm1546, %v1540, %v1547
        %vm1549 = vcmp.eq.s32.totalorder %v1544, 2
        %v1550 = vxor.u32 %v1540, 2147483648
        %v1551 = vsel %vm1549, %v1550, %v1541
        %v1552 = vsel %vm1545, %v1548, %v1551
        %v1553 = vsel %vm1542, nan, %v1552
        %v1554 = vand.u32 2147483647, %v183
        %vm1555 = vcmp.le.f32.partialorder %v1554, 0.7853982
        %vm1556 = vcmp.lt.s32.totalorder %v183, 0
        %v1557 = vand.u32 %v183, 2139095040
        %v1558 = vshrl.u32 %v1557, 23
        %v1559 = vsub.s32 %v1558, 127
        %v1560 = vand.u32 2147483647, %v183
        %v1561 = vand.u32 %v1560, 8388607
        %v1562 = vor.u32 %v1561, 8388608
        %v1563 = vsub.s32 0, %v1562
        %v1564 = vadd.s32 %v1559, 1
        %vm1565 = vcmp.gt.s32.totalorder %v1564, 0
        %v1566 = vsel %vm1565, %v1564, 0
        %v1567 = vshrl.u32 %v1566, 5
        %v1568 = vand.u32 %v1566, 31
        %v1569 = vsub.s32 32, %v1568
        %v1570 = vshrl.u32 683565275, %v1569
        %v1571 = vshll.u32 683565275, %v1568
        %v1572 = vshrl.u32 2475754826, %v1569
        %v1573 = vor.u32 %v1571, %v1572
        %v1574 = vshll.u32 2475754826, %v1568
        %v1575 = vshrl.u32 2131351028, %v1569
        %v1576 = vor.u32 %v1574, %v1575
        %v1577 = vshll.u32 2131351028, %v1568
        %v1578 = vshrl.u32 2102212464, %v1569
        %v1579 = vor.u32 %v1577, %v1578
        %v1580 = vshll.u32 2102212464, %v1568
        %v1581 = vshrl.u32 920167782, %v1569
        %v1582 = vor.u32 %v1580, %v1581
        %v1583 = vshll.u32 920167782, %v1568
        %v1584 = vshrl.u32 1326507024, %v1569
        %v1585 = vor.u32 %v1583, %v1584
        %vm1586 = vcmp.lt.s32.totalorder %v1567, 1
        %vm1587 = vcmp.lt.s32.totalorder %v1567, 2
        %vm1588 = vcmp.lt.s32.totalorder %v1567, 3
        %vm1589 = vcmp.lt.s32.totalorder %v1567, 4
        %v1590 = vsel %vm1586, %v1570, %v1573
        %v1591 = vsel %vm1589, %v1579, 2102212464
        %v1592 = vsel %vm1588, %v1576, %v1591
        %v1593 = vsel %vm1587, %v1590, %v1592
        %v1594 = vsel %vm1586, %v1573, %v1576
        %v1595 = vsel %vm1589, %v1582, 920167782
        %v1596 = vsel %vm1588, %v1579, %v1595
        %v1597 = vsel %vm1587, %v1594, %v1596
        %v1598 = vsel %vm1586, %v1576, %v1579
        %v1599 = vsel %vm1589, %v1585, 1326507024
        %v1600 = vsel %vm1588, %v1582, %v1599
        %v1601 = vsel %vm1587, %v1598, %v1600
        %v1602 = vshll.u32 %v1562, 8
        %v1603 = vmul.u32.u64.compose %v1602, %v1601
        %v1604 = vextract.low.u32 %v1603
        %v1605 = vextract.high.u32 %v1603
        %v1606 = vmul.u32.u64.compose %v1602, %v1597
        %v1607 = vextract.low.u32 %v1606
        %v1608 = vextract.high.u32 %v1606
        %v1609 = vmul.u32 %v1602, %v1593
        %v1610 = vadd.s32 %v1605, %v1607
        %vm1611 = vc.u32 %v1605, %v1607
        %v1612 = vadd.s32 %v1608, 1
        %v1613 = vsel %vm1611, %v1612, %v1608
        %v1614 = vadd.s32 %v1609, %v1613
        %v1615 = vadd.s32 %v1614, 536870912
        %v1616 = vshrl.u32 %v1615, 30
        %v1617 = vshll.u32 %v1616, 30
        %v1618 = vsub.s32 %v1614, %v1617
        %vm1619 = vcmp.lt.s32.totalorder %v1618, 0
        %v1620 = vsub.s32 0, %v1618
        %v1621 = vsel %vm1619, %v1620, %v1618
        %v1622 = vclz %v1621
        %v1623 = vsub.s32 %v1622, 2
        %vm1624 = vcmp.gt.s32.totalorder 0, %v1623
        %v1625 = vsel %vm1624, 0, %v1623
        %v1626 = vsub.s32 32, %v1625
        %v1627 = vshll.u32 %v1618, %v1625
        %v1628 = vshrl.u32 %v1610, %v1626
        %v1629 = vor.u32 %v1627, %v1628
        %v1630 = vsub.s32 4294967266, %v1625
        %v1631 = vadd.s32 %v1630, 127
        %v1632 = vshll.u32 %v1631, 23
        %v1633 = vor.u32 4788187, %v1632
        %v1634 = vand.u32 2147483647, %v1633
        %v1636 = vcvt.s32.f32 %v1629
        %v1637 = vmul.f32 %v1636, %v1634
        %v1638 = vxor.u32 %v1637, 2147483648
        %v1639 = vsel %vm1556, %v1638, %v1637
        %v1640 = vsub.s32 4, %v1616
        %v1641 = vsel %vm1556, %v1640, %v1616
        %v1642 = vsel %vm1555, %v183, %v1639
        %v1643 = vsel %vm1555, 0, %v1641
        %v1644 = vcosq.f32.pop %v1642
        %v1645 = vsinq.f32.pop %v1642
        %vm1646 = vweird.f32 %v183
        %v1647 = vadd.s32 %v1643, 3
        %v1648 = vand.u32 %v1647, 3
        %vm1649 = vcmp.lt.s32.totalorder %v1648, 2
        %vm1650 = vcmp.eq.s32.totalorder %v1648, 0
        %v1651 = vxor.u32 %v1645, 2147483648
        %v1652 = vsel %vm1650, %v1644, %v1651
        %vm1653 = vcmp.eq.s32.totalorder %v1648, 2
        %v1654 = vxor.u32 %v1644, 2147483648
        %v1655 = vsel %vm1653, %v1654, %v1645
        %v1656 = vsel %vm1649, %v1652, %v1655
        %v1657 = vsel %vm1646, nan, %v1656
        %v1658 = vand.u32 2147483647, %v184
        %vm1659 = vcmp.le.f32.partialorder %v1658, 0.7853982
        %vm1660 = vcmp.lt.s32.totalorder %v184, 0
        %v1661 = vand.u32 %v184, 2139095040
        %v1662 = vshrl.u32 %v1661, 23
        %v1663 = vsub.s32 %v1662, 127
        %v1664 = vand.u32 2147483647, %v184
        %v1665 = vand.u32 %v1664, 8388607
        %v1666 = vor.u32 %v1665, 8388608
        %v1667 = vsub.s32 0, %v1666
        %v1668 = vadd.s32 %v1663, 1
        %vm1669 = vcmp.gt.s32.totalorder %v1668, 0
        %v1670 = vsel %vm1669, %v1668, 0
        %v1671 = vshrl.u32 %v1670, 5
        %v1672 = vand.u32 %v1670, 31
        %v1673 = vsub.s32 32, %v1672
        %v1674 = vshrl.u32 683565275, %v1673
        %v1675 = vshll.u32 683565275, %v1672
        %v1676 = vshrl.u32 2475754826, %v1673
        %v1677 = vor.u32 %v1675, %v1676
        %v1678 = vshll.u32 2475754826, %v1672
        %v1679 = vshrl.u32 2131351028, %v1673
        %v1680 = vor.u32 %v1678, %v1679
        %v1681 = vshll.u32 2131351028, %v1672
        %v1682 = vshrl.u32 2102212464, %v1673
        %v1683 = vor.u32 %v1681, %v1682
        %v1684 = vshll.u32 2102212464, %v1672
        %v1685 = vshrl.u32 920167782, %v1673
        %v1686 = vor.u32 %v1684, %v1685
        %v1687 = vshll.u32 920167782, %v1672
        %v1688 = vshrl.u32 1326507024, %v1673
        %v1689 = vor.u32 %v1687, %v1688
        %vm1690 = vcmp.lt.s32.totalorder %v1671, 1
        %vm1691 = vcmp.lt.s32.totalorder %v1671, 2
        %vm1692 = vcmp.lt.s32.totalorder %v1671, 3
        %vm1693 = vcmp.lt.s32.totalorder %v1671, 4
        %v1694 = vsel %vm1690, %v1674, %v1677
        %v1695 = vsel %vm1693, %v1683, 2102212464
        %v1696 = vsel %vm1692, %v1680, %v1695
        %v1697 = vsel %vm1691, %v1694, %v1696
        %v1698 = vsel %vm1690, %v1677, %v1680
        %v1699 = vsel %vm1693, %v1686, 920167782
        %v1700 = vsel %vm1692, %v1683, %v1699
        %v1701 = vsel %vm1691, %v1698, %v1700
        %v1702 = vsel %vm1690, %v1680, %v1683
        %v1703 = vsel %vm1693, %v1689, 1326507024
        %v1704 = vsel %vm1692, %v1686, %v1703
        %v1705 = vsel %vm1691, %v1702, %v1704
        %v1706 = vshll.u32 %v1666, 8
        %v1707 = vmul.u32.u64.compose %v1706, %v1705
        %v1708 = vextract.low.u32 %v1707
        %v1709 = vextract.high.u32 %v1707
        %v1710 = vmul.u32.u64.compose %v1706, %v1701
        %v1711 = vextract.low.u32 %v1710
        %v1712 = vextract.high.u32 %v1710
        %v1713 = vmul.u32 %v1706, %v1697
        %v1714 = vadd.s32 %v1709, %v1711
        %vm1715 = vc.u32 %v1709, %v1711
        %v1716 = vadd.s32 %v1712, 1
        %v1717 = vsel %vm1715, %v1716, %v1712
        %v1718 = vadd.s32 %v1713, %v1717
        %v1719 = vadd.s32 %v1718, 536870912
        %v1720 = vshrl.u32 %v1719, 30
        %v1721 = vshll.u32 %v1720, 30
        %v1722 = vsub.s32 %v1718, %v1721
        %vm1723 = vcmp.lt.s32.totalorder %v1722, 0
        %v1724 = vsub.s32 0, %v1722
        %v1725 = vsel %vm1723, %v1724, %v1722
        %v1726 = vclz %v1725
        %v1727 = vsub.s32 %v1726, 2
        %vm1728 = vcmp.gt.s32.totalorder 0, %v1727
        %v1729 = vsel %vm1728, 0, %v1727
        %v1730 = vsub.s32 32, %v1729
        %v1731 = vshll.u32 %v1722, %v1729
        %v1732 = vshrl.u32 %v1714, %v1730
        %v1733 = vor.u32 %v1731, %v1732
        %v1734 = vsub.s32 4294967266, %v1729
        %v1735 = vadd.s32 %v1734, 127
        %v1736 = vshll.u32 %v1735, 23
        %v1737 = vor.u32 4788187, %v1736
        %v1738 = vand.u32 2147483647, %v1737
        %v1740 = vcvt.s32.f32 %v1733
        %v1741 = vmul.f32 %v1740, %v1738
        %v1742 = vxor.u32 %v1741, 2147483648
        %v1743 = vsel %vm1660, %v1742, %v1741
        %v1744 = vsub.s32 4, %v1720
        %v1745 = vsel %vm1660, %v1744, %v1720
        %v1746 = vsel %vm1659, %v184, %v1743
        %v1747 = vsel %vm1659, 0, %v1745
        %v1748 = vcosq.f32.pop %v1746
        %v1749 = vsinq.f32.pop %v1746
        %vm1750 = vweird.f32 %v184
        %v1751 = vadd.s32 %v1747, 3
        %v1752 = vand.u32 %v1751, 3
        %vm1753 = vcmp.lt.s32.totalorder %v1752, 2
        %vm1754 = vcmp.eq.s32.totalorder %v1752, 0
        %v1755 = vxor.u32 %v1749, 2147483648
        %v1756 = vsel %vm1754, %v1748, %v1755
        %vm1757 = vcmp.eq.s32.totalorder %v1752, 2
        %v1758 = vxor.u32 %v1748, 2147483648
        %v1759 = vsel %vm1757, %v1758, %v1749
        %v1760 = vsel %vm1753, %v1756, %v1759
        %v1761 = vsel %vm1750, nan, %v1760
        %v1762 = vand.u32 2147483647, %v185
        %vm1763 = vcmp.le.f32.partialorder %v1762, 0.7853982
        %vm1764 = vcmp.lt.s32.totalorder %v185, 0
        %v1765 = vand.u32 %v185, 2139095040
        %v1766 = vshrl.u32 %v1765, 23
        %v1767 = vsub.s32 %v1766, 127
        %v1768 = vand.u32 2147483647, %v185
        %v1769 = vand.u32 %v1768, 8388607
        %v1770 = vor.u32 %v1769, 8388608
        %v1771 = vsub.s32 0, %v1770
        %v1772 = vadd.s32 %v1767, 1
        %vm1773 = vcmp.gt.s32.totalorder %v1772, 0
        %v1774 = vsel %vm1773, %v1772, 0
        %v1775 = vshrl.u32 %v1774, 5
        %v1776 = vand.u32 %v1774, 31
        %v1777 = vsub.s32 32, %v1776
        %v1778 = vshrl.u32 683565275, %v1777
        %v1779 = vshll.u32 683565275, %v1776
        %v1780 = vshrl.u32 2475754826, %v1777
        %v1781 = vor.u32 %v1779, %v1780
        %v1782 = vshll.u32 2475754826, %v1776
        %v1783 = vshrl.u32 2131351028, %v1777
        %v1784 = vor.u32 %v1782, %v1783
        %v1785 = vshll.u32 2131351028, %v1776
        %v1786 = vshrl.u32 2102212464, %v1777
        %v1787 = vor.u32 %v1785, %v1786
        %v1788 = vshll.u32 2102212464, %v1776
        %v1789 = vshrl.u32 920167782, %v1777
        %v1790 = vor.u32 %v1788, %v1789
        %v1791 = vshll.u32 920167782, %v1776
        %v1792 = vshrl.u32 1326507024, %v1777
        %v1793 = vor.u32 %v1791, %v1792
        %vm1794 = vcmp.lt.s32.totalorder %v1775, 1
        %vm1795 = vcmp.lt.s32.totalorder %v1775, 2
        %vm1796 = vcmp.lt.s32.totalorder %v1775, 3
        %vm1797 = vcmp.lt.s32.totalorder %v1775, 4
        %v1798 = vsel %vm1794, %v1778, %v1781
        %v1799 = vsel %vm1797, %v1787, 2102212464
        %v1800 = vsel %vm1796, %v1784, %v1799
        %v1801 = vsel %vm1795, %v1798, %v1800
        %v1802 = vsel %vm1794, %v1781, %v1784
        %v1803 = vsel %vm1797, %v1790, 920167782
        %v1804 = vsel %vm1796, %v1787, %v1803
        %v1805 = vsel %vm1795, %v1802, %v1804
        %v1806 = vsel %vm1794, %v1784, %v1787
        %v1807 = vsel %vm1797, %v1793, 1326507024
        %v1808 = vsel %vm1796, %v1790, %v1807
        %v1809 = vsel %vm1795, %v1806, %v1808
        %v1810 = vshll.u32 %v1770, 8
        %v1811 = vmul.u32.u64.compose %v1810, %v1809
        %v1812 = vextract.low.u32 %v1811
        %v1813 = vextract.high.u32 %v1811
        %v1814 = vmul.u32.u64.compose %v1810, %v1805
        %v1815 = vextract.low.u32 %v1814
        %v1816 = vextract.high.u32 %v1814
        %v1817 = vmul.u32 %v1810, %v1801
        %v1818 = vadd.s32 %v1813, %v1815
        %vm1819 = vc.u32 %v1813, %v1815
        %v1820 = vadd.s32 %v1816, 1
        %v1821 = vsel %vm1819, %v1820, %v1816
        %v1822 = vadd.s32 %v1817, %v1821
        %v1823 = vadd.s32 %v1822, 536870912
        %v1824 = vshrl.u32 %v1823, 30
        %v1825 = vshll.u32 %v1824, 30
        %v1826 = vsub.s32 %v1822, %v1825
        %vm1827 = vcmp.lt.s32.totalorder %v1826, 0
        %v1828 = vsub.s32 0, %v1826
        %v1829 = vsel %vm1827, %v1828, %v1826
        %v1830 = vclz %v1829
        %v1831 = vsub.s32 %v1830, 2
        %vm1832 = vcmp.gt.s32.totalorder 0, %v1831
        %v1833 = vsel %vm1832, 0, %v1831
        %v1834 = vsub.s32 32, %v1833
        %v1835 = vshll.u32 %v1826, %v1833
        %v1836 = vshrl.u32 %v1818, %v1834
        %v1837 = vor.u32 %v1835, %v1836
        %v1838 = vsub.s32 4294967266, %v1833
        %v1839 = vadd.s32 %v1838, 127
        %v1840 = vshll.u32 %v1839, 23
        %v1841 = vor.u32 4788187, %v1840
        %v1842 = vand.u32 2147483647, %v1841
        %v1844 = vcvt.s32.f32 %v1837
        %v1845 = vmul.f32 %v1844, %v1842
        %v1846 = vxor.u32 %v1845, 2147483648
        %v1847 = vsel %vm1764, %v1846, %v1845
        %v1848 = vsub.s32 4, %v1824
        %v1849 = vsel %vm1764, %v1848, %v1824
        %v1850 = vsel %vm1763, %v185, %v1847
        %v1851 = vsel %vm1763, 0, %v1849
        %v1852 = vcosq.f32.pop %v1850
        %v1853 = vsinq.f32.pop %v1850
        %vm1854 = vweird.f32 %v185
        %v1855 = vadd.s32 %v1851, 3
        %v1856 = vand.u32 %v1855, 3
        %vm1857 = vcmp.lt.s32.totalorder %v1856, 2
        %vm1858 = vcmp.eq.s32.totalorder %v1856, 0
        %v1859 = vxor.u32 %v1853, 2147483648
        %v1860 = vsel %vm1858, %v1852, %v1859
        %vm1861 = vcmp.eq.s32.totalorder %v1856, 2
        %v1862 = vxor.u32 %v1852, 2147483648
        %v1863 = vsel %vm1861, %v1862, %v1853
        %v1864 = vsel %vm1857, %v1860, %v1863
        %v1865 = vsel %vm1854, nan, %v1864
        %v1866 = vand.u32 2147483647, %v186
        %vm1867 = vcmp.le.f32.partialorder %v1866, 0.7853982
        %vm1868 = vcmp.lt.s32.totalorder %v186, 0
        %v1869 = vand.u32 %v186, 2139095040
        %v1870 = vshrl.u32 %v1869, 23
        %v1871 = vsub.s32 %v1870, 127
        %v1872 = vand.u32 2147483647, %v186
        %v1873 = vand.u32 %v1872, 8388607
        %v1874 = vor.u32 %v1873, 8388608
        %v1875 = vsub.s32 0, %v1874
        %v1876 = vadd.s32 %v1871, 1
        %vm1877 = vcmp.gt.s32.totalorder %v1876, 0
        %v1878 = vsel %vm1877, %v1876, 0
        %v1879 = vshrl.u32 %v1878, 5
        %v1880 = vand.u32 %v1878, 31
        %v1881 = vsub.s32 32, %v1880
        %v1882 = vshrl.u32 683565275, %v1881
        %v1883 = vshll.u32 683565275, %v1880
        %v1884 = vshrl.u32 2475754826, %v1881
        %v1885 = vor.u32 %v1883, %v1884
        %v1886 = vshll.u32 2475754826, %v1880
        %v1887 = vshrl.u32 2131351028, %v1881
        %v1888 = vor.u32 %v1886, %v1887
        %v1889 = vshll.u32 2131351028, %v1880
        %v1890 = vshrl.u32 2102212464, %v1881
        %v1891 = vor.u32 %v1889, %v1890
        %v1892 = vshll.u32 2102212464, %v1880
        %v1893 = vshrl.u32 920167782, %v1881
        %v1894 = vor.u32 %v1892, %v1893
        %v1895 = vshll.u32 920167782, %v1880
        %v1896 = vshrl.u32 1326507024, %v1881
        %v1897 = vor.u32 %v1895, %v1896
        %vm1898 = vcmp.lt.s32.totalorder %v1879, 1
        %vm1899 = vcmp.lt.s32.totalorder %v1879, 2
        %vm1900 = vcmp.lt.s32.totalorder %v1879, 3
        %vm1901 = vcmp.lt.s32.totalorder %v1879, 4
        %v1902 = vsel %vm1898, %v1882, %v1885
        %v1903 = vsel %vm1901, %v1891, 2102212464
        %v1904 = vsel %vm1900, %v1888, %v1903
        %v1905 = vsel %vm1899, %v1902, %v1904
        %v1906 = vsel %vm1898, %v1885, %v1888
        %v1907 = vsel %vm1901, %v1894, 920167782
        %v1908 = vsel %vm1900, %v1891, %v1907
        %v1909 = vsel %vm1899, %v1906, %v1908
        %v1910 = vsel %vm1898, %v1888, %v1891
        %v1911 = vsel %vm1901, %v1897, 1326507024
        %v1912 = vsel %vm1900, %v1894, %v1911
        %v1913 = vsel %vm1899, %v1910, %v1912
        %v1914 = vshll.u32 %v1874, 8
        %v1915 = vmul.u32.u64.compose %v1914, %v1913
        %v1916 = vextract.low.u32 %v1915
        %v1917 = vextract.high.u32 %v1915
        %v1918 = vmul.u32.u64.compose %v1914, %v1909
        %v1919 = vextract.low.u32 %v1918
        %v1920 = vextract.high.u32 %v1918
        %v1921 = vmul.u32 %v1914, %v1905
        %v1922 = vadd.s32 %v1917, %v1919
        %vm1923 = vc.u32 %v1917, %v1919
        %v1924 = vadd.s32 %v1920, 1
        %v1925 = vsel %vm1923, %v1924, %v1920
        %v1926 = vadd.s32 %v1921, %v1925
        %v1927 = vadd.s32 %v1926, 536870912
        %v1928 = vshrl.u32 %v1927, 30
        %v1929 = vshll.u32 %v1928, 30
        %v1930 = vsub.s32 %v1926, %v1929
        %vm1931 = vcmp.lt.s32.totalorder %v1930, 0
        %v1932 = vsub.s32 0, %v1930
        %v1933 = vsel %vm1931, %v1932, %v1930
        %v1934 = vclz %v1933
        %v1935 = vsub.s32 %v1934, 2
        %vm1936 = vcmp.gt.s32.totalorder 0, %v1935
        %v1937 = vsel %vm1936, 0, %v1935
        %v1938 = vsub.s32 32, %v1937
        %v1939 = vshll.u32 %v1930, %v1937
        %v1940 = vshrl.u32 %v1922, %v1938
        %v1941 = vor.u32 %v1939, %v1940
        %v1942 = vsub.s32 4294967266, %v1937
        %v1943 = vadd.s32 %v1942, 127
        %v1944 = vshll.u32 %v1943, 23
        %v1945 = vor.u32 4788187, %v1944
        %v1946 = vand.u32 2147483647, %v1945
        %v1948 = vcvt.s32.f32 %v1941
        %v1949 = vmul.f32 %v1948, %v1946
        %v1950 = vxor.u32 %v1949, 2147483648
        %v1951 = vsel %vm1868, %v1950, %v1949
        %v1952 = vsub.s32 4, %v1928
        %v1953 = vsel %vm1868, %v1952, %v1928
        %v1954 = vsel %vm1867, %v186, %v1951
        %v1955 = vsel %vm1867, 0, %v1953
        %v1956 = vcosq.f32.pop %v1954
        %v1957 = vsinq.f32.pop %v1954
        %vm1958 = vweird.f32 %v186
        %v1959 = vadd.s32 %v1955, 3
        %v1960 = vand.u32 %v1959, 3
        %vm1961 = vcmp.lt.s32.totalorder %v1960, 2
        %vm1962 = vcmp.eq.s32.totalorder %v1960, 0
        %v1963 = vxor.u32 %v1957, 2147483648
        %v1964 = vsel %vm1962, %v1956, %v1963
        %vm1965 = vcmp.eq.s32.totalorder %v1960, 2
        %v1966 = vxor.u32 %v1956, 2147483648
        %v1967 = vsel %vm1965, %v1966, %v1957
        %v1968 = vsel %vm1961, %v1964, %v1967
        %v1969 = vsel %vm1958, nan, %v1968
        %v1970 = vand.u32 2147483647, %v187
        %vm1971 = vcmp.le.f32.partialorder %v1970, 0.7853982
        %vm1972 = vcmp.lt.s32.totalorder %v187, 0
        %v1973 = vand.u32 %v187, 2139095040
        %v1974 = vshrl.u32 %v1973, 23
        %v1975 = vsub.s32 %v1974, 127
        %v1976 = vand.u32 2147483647, %v187
        %v1977 = vand.u32 %v1976, 8388607
        %v1978 = vor.u32 %v1977, 8388608
        %v1979 = vsub.s32 0, %v1978
        %v1980 = vadd.s32 %v1975, 1
        %vm1981 = vcmp.gt.s32.totalorder %v1980, 0
        %v1982 = vsel %vm1981, %v1980, 0
        %v1983 = vshrl.u32 %v1982, 5
        %v1984 = vand.u32 %v1982, 31
        %v1985 = vsub.s32 32, %v1984
        %v1986 = vshrl.u32 683565275, %v1985
        %v1987 = vshll.u32 683565275, %v1984
        %v1988 = vshrl.u32 2475754826, %v1985
        %v1989 = vor.u32 %v1987, %v1988
        %v1990 = vshll.u32 2475754826, %v1984
        %v1991 = vshrl.u32 2131351028, %v1985
        %v1992 = vor.u32 %v1990, %v1991
        %v1993 = vshll.u32 2131351028, %v1984
        %v1994 = vshrl.u32 2102212464, %v1985
        %v1995 = vor.u32 %v1993, %v1994
        %v1996 = vshll.u32 2102212464, %v1984
        %v1997 = vshrl.u32 920167782, %v1985
        %v1998 = vor.u32 %v1996, %v1997
        %v1999 = vshll.u32 920167782, %v1984
        %v2000 = vshrl.u32 1326507024, %v1985
        %v2001 = vor.u32 %v1999, %v2000
        %vm2002 = vcmp.lt.s32.totalorder %v1983, 1
        %vm2003 = vcmp.lt.s32.totalorder %v1983, 2
        %vm2004 = vcmp.lt.s32.totalorder %v1983, 3
        %vm2005 = vcmp.lt.s32.totalorder %v1983, 4
        %v2006 = vsel %vm2002, %v1986, %v1989
        %v2007 = vsel %vm2005, %v1995, 2102212464
        %v2008 = vsel %vm2004, %v1992, %v2007
        %v2009 = vsel %vm2003, %v2006, %v2008
        %v2010 = vsel %vm2002, %v1989, %v1992
        %v2011 = vsel %vm2005, %v1998, 920167782
        %v2012 = vsel %vm2004, %v1995, %v2011
        %v2013 = vsel %vm2003, %v2010, %v2012
        %v2014 = vsel %vm2002, %v1992, %v1995
        %v2015 = vsel %vm2005, %v2001, 1326507024
        %v2016 = vsel %vm2004, %v1998, %v2015
        %v2017 = vsel %vm2003, %v2014, %v2016
        %v2018 = vshll.u32 %v1978, 8
        %v2019 = vmul.u32.u64.compose %v2018, %v2017
        %v2020 = vextract.low.u32 %v2019
        %v2021 = vextract.high.u32 %v2019
        %v2022 = vmul.u32.u64.compose %v2018, %v2013
        %v2023 = vextract.low.u32 %v2022
        %v2024 = vextract.high.u32 %v2022
        %v2025 = vmul.u32 %v2018, %v2009
        %v2026 = vadd.s32 %v2021, %v2023
        %vm2027 = vc.u32 %v2021, %v2023
        %v2028 = vadd.s32 %v2024, 1
        %v2029 = vsel %vm2027, %v2028, %v2024
        %v2030 = vadd.s32 %v2025, %v2029
        %v2031 = vadd.s32 %v2030, 536870912
        %v2032 = vshrl.u32 %v2031, 30
        %v2033 = vshll.u32 %v2032, 30
        %v2034 = vsub.s32 %v2030, %v2033
        %vm2035 = vcmp.lt.s32.totalorder %v2034, 0
        %v2036 = vsub.s32 0, %v2034
        %v2037 = vsel %vm2035, %v2036, %v2034
        %v2038 = vclz %v2037
        %v2039 = vsub.s32 %v2038, 2
        %vm2040 = vcmp.gt.s32.totalorder 0, %v2039
        %v2041 = vsel %vm2040, 0, %v2039
        %v2042 = vsub.s32 32, %v2041
        %v2043 = vshll.u32 %v2034, %v2041
        %v2044 = vshrl.u32 %v2026, %v2042
        %v2045 = vor.u32 %v2043, %v2044
        %v2046 = vsub.s32 4294967266, %v2041
        %v2047 = vadd.s32 %v2046, 127
        %v2048 = vshll.u32 %v2047, 23
        %v2049 = vor.u32 4788187, %v2048
        %v2050 = vand.u32 2147483647, %v2049
        %v2052 = vcvt.s32.f32 %v2045
        %v2053 = vmul.f32 %v2052, %v2050
        %v2054 = vxor.u32 %v2053, 2147483648
        %v2055 = vsel %vm1972, %v2054, %v2053
        %v2056 = vsub.s32 4, %v2032
        %v2057 = vsel %vm1972, %v2056, %v2032
        %v2058 = vsel %vm1971, %v187, %v2055
        %v2059 = vsel %vm1971, 0, %v2057
        %v2060 = vcosq.f32.pop %v2058
        %v2061 = vsinq.f32.pop %v2058
        %vm2062 = vweird.f32 %v187
        %v2063 = vadd.s32 %v2059, 3
        %v2064 = vand.u32 %v2063, 3
        %vm2065 = vcmp.lt.s32.totalorder %v2064, 2
        %vm2066 = vcmp.eq.s32.totalorder %v2064, 0
        %v2067 = vxor.u32 %v2061, 2147483648
        %v2068 = vsel %vm2066, %v2060, %v2067
        %vm2069 = vcmp.eq.s32.totalorder %v2064, 2
        %v2070 = vxor.u32 %v2060, 2147483648
        %v2071 = vsel %vm2069, %v2070, %v2061
        %v2072 = vsel %vm2065, %v2068, %v2071
        %v2073 = vsel %vm2062, nan, %v2072
        %v2074 = vand.u32 2147483647, %v188
        %vm2075 = vcmp.le.f32.partialorder %v2074, 0.7853982
        %vm2076 = vcmp.lt.s32.totalorder %v188, 0
        %v2077 = vand.u32 %v188, 2139095040
        %v2078 = vshrl.u32 %v2077, 23
        %v2079 = vsub.s32 %v2078, 127
        %v2080 = vand.u32 2147483647, %v188
        %v2081 = vand.u32 %v2080, 8388607
        %v2082 = vor.u32 %v2081, 8388608
        %v2083 = vsub.s32 0, %v2082
        %v2084 = vadd.s32 %v2079, 1
        %vm2085 = vcmp.gt.s32.totalorder %v2084, 0
        %v2086 = vsel %vm2085, %v2084, 0
        %v2087 = vshrl.u32 %v2086, 5
        %v2088 = vand.u32 %v2086, 31
        %v2089 = vsub.s32 32, %v2088
        %v2090 = vshrl.u32 683565275, %v2089
        %v2091 = vshll.u32 683565275, %v2088
        %v2092 = vshrl.u32 2475754826, %v2089
        %v2093 = vor.u32 %v2091, %v2092
        %v2094 = vshll.u32 2475754826, %v2088
        %v2095 = vshrl.u32 2131351028, %v2089
        %v2096 = vor.u32 %v2094, %v2095
        %v2097 = vshll.u32 2131351028, %v2088
        %v2098 = vshrl.u32 2102212464, %v2089
        %v2099 = vor.u32 %v2097, %v2098
        %v2100 = vshll.u32 2102212464, %v2088
        %v2101 = vshrl.u32 920167782, %v2089
        %v2102 = vor.u32 %v2100, %v2101
        %v2103 = vshll.u32 920167782, %v2088
        %v2104 = vshrl.u32 1326507024, %v2089
        %v2105 = vor.u32 %v2103, %v2104
        %vm2106 = vcmp.lt.s32.totalorder %v2087, 1
        %vm2107 = vcmp.lt.s32.totalorder %v2087, 2
        %vm2108 = vcmp.lt.s32.totalorder %v2087, 3
        %vm2109 = vcmp.lt.s32.totalorder %v2087, 4
        %v2110 = vsel %vm2106, %v2090, %v2093
        %v2111 = vsel %vm2109, %v2099, 2102212464
        %v2112 = vsel %vm2108, %v2096, %v2111
        %v2113 = vsel %vm2107, %v2110, %v2112
        %v2114 = vsel %vm2106, %v2093, %v2096
        %v2115 = vsel %vm2109, %v2102, 920167782
        %v2116 = vsel %vm2108, %v2099, %v2115
        %v2117 = vsel %vm2107, %v2114, %v2116
        %v2118 = vsel %vm2106, %v2096, %v2099
        %v2119 = vsel %vm2109, %v2105, 1326507024
        %v2120 = vsel %vm2108, %v2102, %v2119
        %v2121 = vsel %vm2107, %v2118, %v2120
        %v2122 = vshll.u32 %v2082, 8
        %v2123 = vmul.u32.u64.compose %v2122, %v2121
        %v2124 = vextract.low.u32 %v2123
        %v2125 = vextract.high.u32 %v2123
        %v2126 = vmul.u32.u64.compose %v2122, %v2117
        %v2127 = vextract.low.u32 %v2126
        %v2128 = vextract.high.u32 %v2126
        %v2129 = vmul.u32 %v2122, %v2113
        %v2130 = vadd.s32 %v2125, %v2127
        %vm2131 = vc.u32 %v2125, %v2127
        %v2132 = vadd.s32 %v2128, 1
        %v2133 = vsel %vm2131, %v2132, %v2128
        %v2134 = vadd.s32 %v2129, %v2133
        %v2135 = vadd.s32 %v2134, 536870912
        %v2136 = vshrl.u32 %v2135, 30
        %v2137 = vshll.u32 %v2136, 30
        %v2138 = vsub.s32 %v2134, %v2137
        %vm2139 = vcmp.lt.s32.totalorder %v2138, 0
        %v2140 = vsub.s32 0, %v2138
        %v2141 = vsel %vm2139, %v2140, %v2138
        %v2142 = vclz %v2141
        %v2143 = vsub.s32 %v2142, 2
        %vm2144 = vcmp.gt.s32.totalorder 0, %v2143
        %v2145 = vsel %vm2144, 0, %v2143
        %v2146 = vsub.s32 32, %v2145
        %v2147 = vshll.u32 %v2138, %v2145
        %v2148 = vshrl.u32 %v2130, %v2146
        %v2149 = vor.u32 %v2147, %v2148
        %v2150 = vsub.s32 4294967266, %v2145
        %v2151 = vadd.s32 %v2150, 127
        %v2152 = vshll.u32 %v2151, 23
        %v2153 = vor.u32 4788187, %v2152
        %v2154 = vand.u32 2147483647, %v2153
        %v2156 = vcvt.s32.f32 %v2149
        %v2157 = vmul.f32 %v2156, %v2154
        %v2158 = vxor.u32 %v2157, 2147483648
        %v2159 = vsel %vm2076, %v2158, %v2157
        %v2160 = vsub.s32 4, %v2136
        %v2161 = vsel %vm2076, %v2160, %v2136
        %v2162 = vsel %vm2075, %v188, %v2159
        %v2163 = vsel %vm2075, 0, %v2161
        %v2164 = vcosq.f32.pop %v2162
        %v2165 = vsinq.f32.pop %v2162
        %vm2166 = vweird.f32 %v188
        %v2167 = vadd.s32 %v2163, 3
        %v2168 = vand.u32 %v2167, 3
        %vm2169 = vcmp.lt.s32.totalorder %v2168, 2
        %vm2170 = vcmp.eq.s32.totalorder %v2168, 0
        %v2171 = vxor.u32 %v2165, 2147483648
        %v2172 = vsel %vm2170, %v2164, %v2171
        %vm2173 = vcmp.eq.s32.totalorder %v2168, 2
        %v2174 = vxor.u32 %v2164, 2147483648
        %v2175 = vsel %vm2173, %v2174, %v2165
        %v2176 = vsel %vm2169, %v2172, %v2175
        %v2177 = vsel %vm2166, nan, %v2176
        %v2178 = vand.u32 2147483647, %v189
        %vm2179 = vcmp.le.f32.partialorder %v2178, 0.7853982
        %vm2180 = vcmp.lt.s32.totalorder %v189, 0
        %v2181 = vand.u32 %v189, 2139095040
        %v2182 = vshrl.u32 %v2181, 23
        %v2183 = vsub.s32 %v2182, 127
        %v2184 = vand.u32 2147483647, %v189
        %v2185 = vand.u32 %v2184, 8388607
        %v2186 = vor.u32 %v2185, 8388608
        %v2187 = vsub.s32 0, %v2186
        %v2188 = vadd.s32 %v2183, 1
        %vm2189 = vcmp.gt.s32.totalorder %v2188, 0
        %v2190 = vsel %vm2189, %v2188, 0
        %v2191 = vshrl.u32 %v2190, 5
        %v2192 = vand.u32 %v2190, 31
        %v2193 = vsub.s32 32, %v2192
        %v2194 = vshrl.u32 683565275, %v2193
        %v2195 = vshll.u32 683565275, %v2192
        %v2196 = vshrl.u32 2475754826, %v2193
        %v2197 = vor.u32 %v2195, %v2196
        %v2198 = vshll.u32 2475754826, %v2192
        %v2199 = vshrl.u32 2131351028, %v2193
        %v2200 = vor.u32 %v2198, %v2199
        %v2201 = vshll.u32 2131351028, %v2192
        %v2202 = vshrl.u32 2102212464, %v2193
        %v2203 = vor.u32 %v2201, %v2202
        %v2204 = vshll.u32 2102212464, %v2192
        %v2205 = vshrl.u32 920167782, %v2193
        %v2206 = vor.u32 %v2204, %v2205
        %v2207 = vshll.u32 920167782, %v2192
        %v2208 = vshrl.u32 1326507024, %v2193
        %v2209 = vor.u32 %v2207, %v2208
        %vm2210 = vcmp.lt.s32.totalorder %v2191, 1
        %vm2211 = vcmp.lt.s32.totalorder %v2191, 2
        %vm2212 = vcmp.lt.s32.totalorder %v2191, 3
        %vm2213 = vcmp.lt.s32.totalorder %v2191, 4
        %v2214 = vsel %vm2210, %v2194, %v2197
        %v2215 = vsel %vm2213, %v2203, 2102212464
        %v2216 = vsel %vm2212, %v2200, %v2215
        %v2217 = vsel %vm2211, %v2214, %v2216
        %v2218 = vsel %vm2210, %v2197, %v2200
        %v2219 = vsel %vm2213, %v2206, 920167782
        %v2220 = vsel %vm2212, %v2203, %v2219
        %v2221 = vsel %vm2211, %v2218, %v2220
        %v2222 = vsel %vm2210, %v2200, %v2203
        %v2223 = vsel %vm2213, %v2209, 1326507024
        %v2224 = vsel %vm2212, %v2206, %v2223
        %v2225 = vsel %vm2211, %v2222, %v2224
        %v2226 = vshll.u32 %v2186, 8
        %v2227 = vmul.u32.u64.compose %v2226, %v2225
        %v2228 = vextract.low.u32 %v2227
        %v2229 = vextract.high.u32 %v2227
        %v2230 = vmul.u32.u64.compose %v2226, %v2221
        %v2231 = vextract.low.u32 %v2230
        %v2232 = vextract.high.u32 %v2230
        %v2233 = vmul.u32 %v2226, %v2217
        %v2234 = vadd.s32 %v2229, %v2231
        %vm2235 = vc.u32 %v2229, %v2231
        %v2236 = vadd.s32 %v2232, 1
        %v2237 = vsel %vm2235, %v2236, %v2232
        %v2238 = vadd.s32 %v2233, %v2237
        %v2239 = vadd.s32 %v2238, 536870912
        %v2240 = vshrl.u32 %v2239, 30
        %v2241 = vshll.u32 %v2240, 30
        %v2242 = vsub.s32 %v2238, %v2241
        %vm2243 = vcmp.lt.s32.totalorder %v2242, 0
        %v2244 = vsub.s32 0, %v2242
        %v2245 = vsel %vm2243, %v2244, %v2242
        %v2246 = vclz %v2245
        %v2247 = vsub.s32 %v2246, 2
        %vm2248 = vcmp.gt.s32.totalorder 0, %v2247
        %v2249 = vsel %vm2248, 0, %v2247
        %v2250 = vsub.s32 32, %v2249
        %v2251 = vshll.u32 %v2242, %v2249
        %v2252 = vshrl.u32 %v2234, %v2250
        %v2253 = vor.u32 %v2251, %v2252
        %v2254 = vsub.s32 4294967266, %v2249
        %v2255 = vadd.s32 %v2254, 127
        %v2256 = vshll.u32 %v2255, 23
        %v2257 = vor.u32 4788187, %v2256
        %v2258 = vand.u32 2147483647, %v2257
        %v2260 = vcvt.s32.f32 %v2253
        %v2261 = vmul.f32 %v2260, %v2258
        %v2262 = vxor.u32 %v2261, 2147483648
        %v2263 = vsel %vm2180, %v2262, %v2261
        %v2264 = vsub.s32 4, %v2240
        %v2265 = vsel %vm2180, %v2264, %v2240
        %v2266 = vsel %vm2179, %v189, %v2263
        %v2267 = vsel %vm2179, 0, %v2265
        %v2268 = vcosq.f32.pop %v2266
        %v2269 = vsinq.f32.pop %v2266
        %vm2270 = vweird.f32 %v189
        %v2271 = vadd.s32 %v2267, 3
        %v2272 = vand.u32 %v2271, 3
        %vm2273 = vcmp.lt.s32.totalorder %v2272, 2
        %vm2274 = vcmp.eq.s32.totalorder %v2272, 0
        %v2275 = vxor.u32 %v2269, 2147483648
        %v2276 = vsel %vm2274, %v2268, %v2275
        %vm2277 = vcmp.eq.s32.totalorder %v2272, 2
        %v2278 = vxor.u32 %v2268, 2147483648
        %v2279 = vsel %vm2277, %v2278, %v2269
        %v2280 = vsel %vm2273, %v2276, %v2279
        %v2281 = vsel %vm2270, nan, %v2280
        %v2282 = vand.u32 2147483647, %v190
        %vm2283 = vcmp.le.f32.partialorder %v2282, 0.7853982
        %vm2284 = vcmp.lt.s32.totalorder %v190, 0
        %v2285 = vand.u32 %v190, 2139095040
        %v2286 = vshrl.u32 %v2285, 23
        %v2287 = vsub.s32 %v2286, 127
        %v2288 = vand.u32 2147483647, %v190
        %v2289 = vand.u32 %v2288, 8388607
        %v2290 = vor.u32 %v2289, 8388608
        %v2291 = vsub.s32 0, %v2290
        %v2292 = vadd.s32 %v2287, 1
        %vm2293 = vcmp.gt.s32.totalorder %v2292, 0
        %v2294 = vsel %vm2293, %v2292, 0
        %v2295 = vshrl.u32 %v2294, 5
        %v2296 = vand.u32 %v2294, 31
        %v2297 = vsub.s32 32, %v2296
        %v2298 = vshrl.u32 683565275, %v2297
        %v2299 = vshll.u32 683565275, %v2296
        %v2300 = vshrl.u32 2475754826, %v2297
        %v2301 = vor.u32 %v2299, %v2300
        %v2302 = vshll.u32 2475754826, %v2296
        %v2303 = vshrl.u32 2131351028, %v2297
        %v2304 = vor.u32 %v2302, %v2303
        %v2305 = vshll.u32 2131351028, %v2296
        %v2306 = vshrl.u32 2102212464, %v2297
        %v2307 = vor.u32 %v2305, %v2306
        %v2308 = vshll.u32 2102212464, %v2296
        %v2309 = vshrl.u32 920167782, %v2297
        %v2310 = vor.u32 %v2308, %v2309
        %v2311 = vshll.u32 920167782, %v2296
        %v2312 = vshrl.u32 1326507024, %v2297
        %v2313 = vor.u32 %v2311, %v2312
        %vm2314 = vcmp.lt.s32.totalorder %v2295, 1
        %vm2315 = vcmp.lt.s32.totalorder %v2295, 2
        %vm2316 = vcmp.lt.s32.totalorder %v2295, 3
        %vm2317 = vcmp.lt.s32.totalorder %v2295, 4
        %v2318 = vsel %vm2314, %v2298, %v2301
        %v2319 = vsel %vm2317, %v2307, 2102212464
        %v2320 = vsel %vm2316, %v2304, %v2319
        %v2321 = vsel %vm2315, %v2318, %v2320
        %v2322 = vsel %vm2314, %v2301, %v2304
        %v2323 = vsel %vm2317, %v2310, 920167782
        %v2324 = vsel %vm2316, %v2307, %v2323
        %v2325 = vsel %vm2315, %v2322, %v2324
        %v2326 = vsel %vm2314, %v2304, %v2307
        %v2327 = vsel %vm2317, %v2313, 1326507024
        %v2328 = vsel %vm2316, %v2310, %v2327
        %v2329 = vsel %vm2315, %v2326, %v2328
        %v2330 = vshll.u32 %v2290, 8
        %v2331 = vmul.u32.u64.compose %v2330, %v2329
        %v2332 = vextract.low.u32 %v2331
        %v2333 = vextract.high.u32 %v2331
        %v2334 = vmul.u32.u64.compose %v2330, %v2325
        %v2335 = vextract.low.u32 %v2334
        %v2336 = vextract.high.u32 %v2334
        %v2337 = vmul.u32 %v2330, %v2321
        %v2338 = vadd.s32 %v2333, %v2335
        %vm2339 = vc.u32 %v2333, %v2335
        %v2340 = vadd.s32 %v2336, 1
        %v2341 = vsel %vm2339, %v2340, %v2336
        %v2342 = vadd.s32 %v2337, %v2341
        %v2343 = vadd.s32 %v2342, 536870912
        %v2344 = vshrl.u32 %v2343, 30
        %v2345 = vshll.u32 %v2344, 30
        %v2346 = vsub.s32 %v2342, %v2345
        %vm2347 = vcmp.lt.s32.totalorder %v2346, 0
        %v2348 = vsub.s32 0, %v2346
        %v2349 = vsel %vm2347, %v2348, %v2346
        %v2350 = vclz %v2349
        %v2351 = vsub.s32 %v2350, 2
        %vm2352 = vcmp.gt.s32.totalorder 0, %v2351
        %v2353 = vsel %vm2352, 0, %v2351
        %v2354 = vsub.s32 32, %v2353
        %v2355 = vshll.u32 %v2346, %v2353
        %v2356 = vshrl.u32 %v2338, %v2354
        %v2357 = vor.u32 %v2355, %v2356
        %v2358 = vsub.s32 4294967266, %v2353
        %v2359 = vadd.s32 %v2358, 127
        %v2360 = vshll.u32 %v2359, 23
        %v2361 = vor.u32 4788187, %v2360
        %v2362 = vand.u32 2147483647, %v2361
        %v2364 = vcvt.s32.f32 %v2357
        %v2365 = vmul.f32 %v2364, %v2362
        %v2366 = vxor.u32 %v2365, 2147483648
        %v2367 = vsel %vm2284, %v2366, %v2365
        %v2368 = vsub.s32 4, %v2344
        %v2369 = vsel %vm2284, %v2368, %v2344
        %v2370 = vsel %vm2283, %v190, %v2367
        %v2371 = vsel %vm2283, 0, %v2369
        %v2372 = vcosq.f32.pop %v2370
        %v2373 = vsinq.f32.pop %v2370
        %vm2374 = vweird.f32 %v190
        %v2375 = vadd.s32 %v2371, 3
        %v2376 = vand.u32 %v2375, 3
        %vm2377 = vcmp.lt.s32.totalorder %v2376, 2
        %vm2378 = vcmp.eq.s32.totalorder %v2376, 0
        %v2379 = vxor.u32 %v2373, 2147483648
        %v2380 = vsel %vm2378, %v2372, %v2379
        %vm2381 = vcmp.eq.s32.totalorder %v2376, 2
        %v2382 = vxor.u32 %v2372, 2147483648
        %v2383 = vsel %vm2381, %v2382, %v2373
        %v2384 = vsel %vm2377, %v2380, %v2383
        %v2385 = vsel %vm2374, nan, %v2384
        %v2386 = vand.u32 2147483647, %v191
        %vm2387 = vcmp.le.f32.partialorder %v2386, 0.7853982
        %vm2388 = vcmp.lt.s32.totalorder %v191, 0
        %v2389 = vand.u32 %v191, 2139095040
        %v2390 = vshrl.u32 %v2389, 23
        %v2391 = vsub.s32 %v2390, 127
        %v2392 = vand.u32 2147483647, %v191
        %v2393 = vand.u32 %v2392, 8388607
        %v2394 = vor.u32 %v2393, 8388608
        %v2395 = vsub.s32 0, %v2394
        %v2396 = vadd.s32 %v2391, 1
        %vm2397 = vcmp.gt.s32.totalorder %v2396, 0
        %v2398 = vsel %vm2397, %v2396, 0
        %v2399 = vshrl.u32 %v2398, 5
        %v2400 = vand.u32 %v2398, 31
        %v2401 = vsub.s32 32, %v2400
        %v2402 = vshrl.u32 683565275, %v2401
        %v2403 = vshll.u32 683565275, %v2400
        %v2404 = vshrl.u32 2475754826, %v2401
        %v2405 = vor.u32 %v2403, %v2404
        %v2406 = vshll.u32 2475754826, %v2400
        %v2407 = vshrl.u32 2131351028, %v2401
        %v2408 = vor.u32 %v2406, %v2407
        %v2409 = vshll.u32 2131351028, %v2400
        %v2410 = vshrl.u32 2102212464, %v2401
        %v2411 = vor.u32 %v2409, %v2410
        %v2412 = vshll.u32 2102212464, %v2400
        %v2413 = vshrl.u32 920167782, %v2401
        %v2414 = vor.u32 %v2412, %v2413
        %v2415 = vshll.u32 920167782, %v2400
        %v2416 = vshrl.u32 1326507024, %v2401
        %v2417 = vor.u32 %v2415, %v2416
        %vm2418 = vcmp.lt.s32.totalorder %v2399, 1
        %vm2419 = vcmp.lt.s32.totalorder %v2399, 2
        %vm2420 = vcmp.lt.s32.totalorder %v2399, 3
        %vm2421 = vcmp.lt.s32.totalorder %v2399, 4
        %v2422 = vsel %vm2418, %v2402, %v2405
        %v2423 = vsel %vm2421, %v2411, 2102212464
        %v2424 = vsel %vm2420, %v2408, %v2423
        %v2425 = vsel %vm2419, %v2422, %v2424
        %v2426 = vsel %vm2418, %v2405, %v2408
        %v2427 = vsel %vm2421, %v2414, 920167782
        %v2428 = vsel %vm2420, %v2411, %v2427
        %v2429 = vsel %vm2419, %v2426, %v2428
        %v2430 = vsel %vm2418, %v2408, %v2411
        %v2431 = vsel %vm2421, %v2417, 1326507024
        %v2432 = vsel %vm2420, %v2414, %v2431
        %v2433 = vsel %vm2419, %v2430, %v2432
        %v2434 = vshll.u32 %v2394, 8
        %v2435 = vmul.u32.u64.compose %v2434, %v2433
        %v2436 = vextract.low.u32 %v2435
        %v2437 = vextract.high.u32 %v2435
        %v2438 = vmul.u32.u64.compose %v2434, %v2429
        %v2439 = vextract.low.u32 %v2438
        %v2440 = vextract.high.u32 %v2438
        %v2441 = vmul.u32 %v2434, %v2425
        %v2442 = vadd.s32 %v2437, %v2439
        %vm2443 = vc.u32 %v2437, %v2439
        %v2444 = vadd.s32 %v2440, 1
        %v2445 = vsel %vm2443, %v2444, %v2440
        %v2446 = vadd.s32 %v2441, %v2445
        %v2447 = vadd.s32 %v2446, 536870912
        %v2448 = vshrl.u32 %v2447, 30
        %v2449 = vshll.u32 %v2448, 30
        %v2450 = vsub.s32 %v2446, %v2449
        %vm2451 = vcmp.lt.s32.totalorder %v2450, 0
        %v2452 = vsub.s32 0, %v2450
        %v2453 = vsel %vm2451, %v2452, %v2450
        %v2454 = vclz %v2453
        %v2455 = vsub.s32 %v2454, 2
        %vm2456 = vcmp.gt.s32.totalorder 0, %v2455
        %v2457 = vsel %vm2456, 0, %v2455
        %v2458 = vsub.s32 32, %v2457
        %v2459 = vshll.u32 %v2450, %v2457
        %v2460 = vshrl.u32 %v2442, %v2458
        %v2461 = vor.u32 %v2459, %v2460
        %v2462 = vsub.s32 4294967266, %v2457
        %v2463 = vadd.s32 %v2462, 127
        %v2464 = vshll.u32 %v2463, 23
        %v2465 = vor.u32 4788187, %v2464
        %v2466 = vand.u32 2147483647, %v2465
        %v2468 = vcvt.s32.f32 %v2461
        %v2469 = vmul.f32 %v2468, %v2466
        %v2470 = vxor.u32 %v2469, 2147483648
        %v2471 = vsel %vm2388, %v2470, %v2469
        %v2472 = vsub.s32 4, %v2448
        %v2473 = vsel %vm2388, %v2472, %v2448
        %v2474 = vsel %vm2387, %v191, %v2471
        %v2475 = vsel %vm2387, 0, %v2473
        %v2476 = vcosq.f32.pop %v2474
        %v2477 = vsinq.f32.pop %v2474
        %vm2478 = vweird.f32 %v191
        %v2479 = vadd.s32 %v2475, 3
        %v2480 = vand.u32 %v2479, 3
        %vm2481 = vcmp.lt.s32.totalorder %v2480, 2
        %vm2482 = vcmp.eq.s32.totalorder %v2480, 0
        %v2483 = vxor.u32 %v2477, 2147483648
        %v2484 = vsel %vm2482, %v2476, %v2483
        %vm2485 = vcmp.eq.s32.totalorder %v2480, 2
        %v2486 = vxor.u32 %v2476, 2147483648
        %v2487 = vsel %vm2485, %v2486, %v2477
        %v2488 = vsel %vm2481, %v2484, %v2487
        %v2489 = vsel %vm2478, nan, %v2488
        %v2490 = vand.u32 2147483647, %v192
        %vm2491 = vcmp.le.f32.partialorder %v2490, 0.7853982
        %vm2492 = vcmp.lt.s32.totalorder %v192, 0
        %v2493 = vand.u32 %v192, 2139095040
        %v2494 = vshrl.u32 %v2493, 23
        %v2495 = vsub.s32 %v2494, 127
        %v2496 = vand.u32 2147483647, %v192
        %v2497 = vand.u32 %v2496, 8388607
        %v2498 = vor.u32 %v2497, 8388608
        %v2499 = vsub.s32 0, %v2498
        %v2500 = vadd.s32 %v2495, 1
        %vm2501 = vcmp.gt.s32.totalorder %v2500, 0
        %v2502 = vsel %vm2501, %v2500, 0
        %v2503 = vshrl.u32 %v2502, 5
        %v2504 = vand.u32 %v2502, 31
        %v2505 = vsub.s32 32, %v2504
        %v2506 = vshrl.u32 683565275, %v2505
        %v2507 = vshll.u32 683565275, %v2504
        %v2508 = vshrl.u32 2475754826, %v2505
        %v2509 = vor.u32 %v2507, %v2508
        %v2510 = vshll.u32 2475754826, %v2504
        %v2511 = vshrl.u32 2131351028, %v2505
        %v2512 = vor.u32 %v2510, %v2511
        %v2513 = vshll.u32 2131351028, %v2504
        %v2514 = vshrl.u32 2102212464, %v2505
        %v2515 = vor.u32 %v2513, %v2514
        %v2516 = vshll.u32 2102212464, %v2504
        %v2517 = vshrl.u32 920167782, %v2505
        %v2518 = vor.u32 %v2516, %v2517
        %v2519 = vshll.u32 920167782, %v2504
        %v2520 = vshrl.u32 1326507024, %v2505
        %v2521 = vor.u32 %v2519, %v2520
        %vm2522 = vcmp.lt.s32.totalorder %v2503, 1
        %vm2523 = vcmp.lt.s32.totalorder %v2503, 2
        %vm2524 = vcmp.lt.s32.totalorder %v2503, 3
        %vm2525 = vcmp.lt.s32.totalorder %v2503, 4
        %v2526 = vsel %vm2522, %v2506, %v2509
        %v2527 = vsel %vm2525, %v2515, 2102212464
        %v2528 = vsel %vm2524, %v2512, %v2527
        %v2529 = vsel %vm2523, %v2526, %v2528
        %v2530 = vsel %vm2522, %v2509, %v2512
        %v2531 = vsel %vm2525, %v2518, 920167782
        %v2532 = vsel %vm2524, %v2515, %v2531
        %v2533 = vsel %vm2523, %v2530, %v2532
        %v2534 = vsel %vm2522, %v2512, %v2515
        %v2535 = vsel %vm2525, %v2521, 1326507024
        %v2536 = vsel %vm2524, %v2518, %v2535
        %v2537 = vsel %vm2523, %v2534, %v2536
        %v2538 = vshll.u32 %v2498, 8
        %v2539 = vmul.u32.u64.compose %v2538, %v2537
        %v2540 = vextract.low.u32 %v2539
        %v2541 = vextract.high.u32 %v2539
        %v2542 = vmul.u32.u64.compose %v2538, %v2533
        %v2543 = vextract.low.u32 %v2542
        %v2544 = vextract.high.u32 %v2542
        %v2545 = vmul.u32 %v2538, %v2529
        %v2546 = vadd.s32 %v2541, %v2543
        %vm2547 = vc.u32 %v2541, %v2543
        %v2548 = vadd.s32 %v2544, 1
        %v2549 = vsel %vm2547, %v2548, %v2544
        %v2550 = vadd.s32 %v2545, %v2549
        %v2551 = vadd.s32 %v2550, 536870912
        %v2552 = vshrl.u32 %v2551, 30
        %v2553 = vshll.u32 %v2552, 30
        %v2554 = vsub.s32 %v2550, %v2553
        %vm2555 = vcmp.lt.s32.totalorder %v2554, 0
        %v2556 = vsub.s32 0, %v2554
        %v2557 = vsel %vm2555, %v2556, %v2554
        %v2558 = vclz %v2557
        %v2559 = vsub.s32 %v2558, 2
        %vm2560 = vcmp.gt.s32.totalorder 0, %v2559
        %v2561 = vsel %vm2560, 0, %v2559
        %v2562 = vsub.s32 32, %v2561
        %v2563 = vshll.u32 %v2554, %v2561
        %v2564 = vshrl.u32 %v2546, %v2562
        %v2565 = vor.u32 %v2563, %v2564
        %v2566 = vsub.s32 4294967266, %v2561
        %v2567 = vadd.s32 %v2566, 127
        %v2568 = vshll.u32 %v2567, 23
        %v2569 = vor.u32 4788187, %v2568
        %v2570 = vand.u32 2147483647, %v2569
        %v2572 = vcvt.s32.f32 %v2565
        %v2573 = vmul.f32 %v2572, %v2570
        %v2574 = vxor.u32 %v2573, 2147483648
        %v2575 = vsel %vm2492, %v2574, %v2573
        %v2576 = vsub.s32 4, %v2552
        %v2577 = vsel %vm2492, %v2576, %v2552
        %v2578 = vsel %vm2491, %v192, %v2575
        %v2579 = vsel %vm2491, 0, %v2577
        %v2580 = vcosq.f32.pop %v2578
        %v2581 = vsinq.f32.pop %v2578
        %vm2582 = vweird.f32 %v192
        %v2583 = vadd.s32 %v2579, 3
        %v2584 = vand.u32 %v2583, 3
        %vm2585 = vcmp.lt.s32.totalorder %v2584, 2
        %vm2586 = vcmp.eq.s32.totalorder %v2584, 0
        %v2587 = vxor.u32 %v2581, 2147483648
        %v2588 = vsel %vm2586, %v2580, %v2587
        %vm2589 = vcmp.eq.s32.totalorder %v2584, 2
        %v2590 = vxor.u32 %v2580, 2147483648
        %v2591 = vsel %vm2589, %v2590, %v2581
        %v2592 = vsel %vm2585, %v2588, %v2591
        %v2593 = vsel %vm2582, nan, %v2592
        %v2594 = vand.u32 2147483647, %v193
        %vm2595 = vcmp.le.f32.partialorder %v2594, 0.7853982
        %vm2596 = vcmp.lt.s32.totalorder %v193, 0
        %v2597 = vand.u32 %v193, 2139095040
        %v2598 = vshrl.u32 %v2597, 23
        %v2599 = vsub.s32 %v2598, 127
        %v2600 = vand.u32 2147483647, %v193
        %v2601 = vand.u32 %v2600, 8388607
        %v2602 = vor.u32 %v2601, 8388608
        %v2603 = vsub.s32 0, %v2602
        %v2604 = vadd.s32 %v2599, 1
        %vm2605 = vcmp.gt.s32.totalorder %v2604, 0
        %v2606 = vsel %vm2605, %v2604, 0
        %v2607 = vshrl.u32 %v2606, 5
        %v2608 = vand.u32 %v2606, 31
        %v2609 = vsub.s32 32, %v2608
        %v2610 = vshrl.u32 683565275, %v2609
        %v2611 = vshll.u32 683565275, %v2608
        %v2612 = vshrl.u32 2475754826, %v2609
        %v2613 = vor.u32 %v2611, %v2612
        %v2614 = vshll.u32 2475754826, %v2608
        %v2615 = vshrl.u32 2131351028, %v2609
        %v2616 = vor.u32 %v2614, %v2615
        %v2617 = vshll.u32 2131351028, %v2608
        %v2618 = vshrl.u32 2102212464, %v2609
        %v2619 = vor.u32 %v2617, %v2618
        %v2620 = vshll.u32 2102212464, %v2608
        %v2621 = vshrl.u32 920167782, %v2609
        %v2622 = vor.u32 %v2620, %v2621
        %v2623 = vshll.u32 920167782, %v2608
        %v2624 = vshrl.u32 1326507024, %v2609
        %v2625 = vor.u32 %v2623, %v2624
        %vm2626 = vcmp.lt.s32.totalorder %v2607, 1
        %vm2627 = vcmp.lt.s32.totalorder %v2607, 2
        %vm2628 = vcmp.lt.s32.totalorder %v2607, 3
        %vm2629 = vcmp.lt.s32.totalorder %v2607, 4
        %v2630 = vsel %vm2626, %v2610, %v2613
        %v2631 = vsel %vm2629, %v2619, 2102212464
        %v2632 = vsel %vm2628, %v2616, %v2631
        %v2633 = vsel %vm2627, %v2630, %v2632
        %v2634 = vsel %vm2626, %v2613, %v2616
        %v2635 = vsel %vm2629, %v2622, 920167782
        %v2636 = vsel %vm2628, %v2619, %v2635
        %v2637 = vsel %vm2627, %v2634, %v2636
        %v2638 = vsel %vm2626, %v2616, %v2619
        %v2639 = vsel %vm2629, %v2625, 1326507024
        %v2640 = vsel %vm2628, %v2622, %v2639
        %v2641 = vsel %vm2627, %v2638, %v2640
        %v2642 = vshll.u32 %v2602, 8
        %v2643 = vmul.u32.u64.compose %v2642, %v2641
        %v2644 = vextract.low.u32 %v2643
        %v2645 = vextract.high.u32 %v2643
        %v2646 = vmul.u32.u64.compose %v2642, %v2637
        %v2647 = vextract.low.u32 %v2646
        %v2648 = vextract.high.u32 %v2646
        %v2649 = vmul.u32 %v2642, %v2633
        %v2650 = vadd.s32 %v2645, %v2647
        %vm2651 = vc.u32 %v2645, %v2647
        %v2652 = vadd.s32 %v2648, 1
        %v2653 = vsel %vm2651, %v2652, %v2648
        %v2654 = vadd.s32 %v2649, %v2653
        %v2655 = vadd.s32 %v2654, 536870912
        %v2656 = vshrl.u32 %v2655, 30
        %v2657 = vshll.u32 %v2656, 30
        %v2658 = vsub.s32 %v2654, %v2657
        %vm2659 = vcmp.lt.s32.totalorder %v2658, 0
        %v2660 = vsub.s32 0, %v2658
        %v2661 = vsel %vm2659, %v2660, %v2658
        %v2662 = vclz %v2661
        %v2663 = vsub.s32 %v2662, 2
        %vm2664 = vcmp.gt.s32.totalorder 0, %v2663
        %v2665 = vsel %vm2664, 0, %v2663
        %v2666 = vsub.s32 32, %v2665
        %v2667 = vshll.u32 %v2658, %v2665
        %v2668 = vshrl.u32 %v2650, %v2666
        %v2669 = vor.u32 %v2667, %v2668
        %v2670 = vsub.s32 4294967266, %v2665
        %v2671 = vadd.s32 %v2670, 127
        %v2672 = vshll.u32 %v2671, 23
        %v2673 = vor.u32 4788187, %v2672
        %v2674 = vand.u32 2147483647, %v2673
        %v2676 = vcvt.s32.f32 %v2669
        %v2677 = vmul.f32 %v2676, %v2674
        %v2678 = vxor.u32 %v2677, 2147483648
        %v2679 = vsel %vm2596, %v2678, %v2677
        %v2680 = vsub.s32 4, %v2656
        %v2681 = vsel %vm2596, %v2680, %v2656
        %v2682 = vsel %vm2595, %v193, %v2679
        %v2683 = vsel %vm2595, 0, %v2681
        %v2684 = vcosq.f32.pop %v2682
        %v2685 = vsinq.f32.pop %v2682
        %vm2686 = vweird.f32 %v193
        %v2687 = vadd.s32 %v2683, 3
        %v2688 = vand.u32 %v2687, 3
        %vm2689 = vcmp.lt.s32.totalorder %v2688, 2
        %vm2690 = vcmp.eq.s32.totalorder %v2688, 0
        %v2691 = vxor.u32 %v2685, 2147483648
        %v2692 = vsel %vm2690, %v2684, %v2691
        %vm2693 = vcmp.eq.s32.totalorder %v2688, 2
        %v2694 = vxor.u32 %v2684, 2147483648
        %v2695 = vsel %vm2693, %v2694, %v2685
        %v2696 = vsel %vm2689, %v2692, %v2695
        %v2697 = vsel %vm2686, nan, %v2696
        %v2698 = vand.u32 2147483647, %v194
        %vm2699 = vcmp.le.f32.partialorder %v2698, 0.7853982
        %vm2700 = vcmp.lt.s32.totalorder %v194, 0
        %v2701 = vand.u32 %v194, 2139095040
        %v2702 = vshrl.u32 %v2701, 23
        %v2703 = vsub.s32 %v2702, 127
        %v2704 = vand.u32 2147483647, %v194
        %v2705 = vand.u32 %v2704, 8388607
        %v2706 = vor.u32 %v2705, 8388608
        %v2707 = vsub.s32 0, %v2706
        %v2708 = vadd.s32 %v2703, 1
        %vm2709 = vcmp.gt.s32.totalorder %v2708, 0
        %v2710 = vsel %vm2709, %v2708, 0
        %v2711 = vshrl.u32 %v2710, 5
        %v2712 = vand.u32 %v2710, 31
        %v2713 = vsub.s32 32, %v2712
        %v2714 = vshrl.u32 683565275, %v2713
        %v2715 = vshll.u32 683565275, %v2712
        %v2716 = vshrl.u32 2475754826, %v2713
        %v2717 = vor.u32 %v2715, %v2716
        %v2718 = vshll.u32 2475754826, %v2712
        %v2719 = vshrl.u32 2131351028, %v2713
        %v2720 = vor.u32 %v2718, %v2719
        %v2721 = vshll.u32 2131351028, %v2712
        %v2722 = vshrl.u32 2102212464, %v2713
        %v2723 = vor.u32 %v2721, %v2722
        %v2724 = vshll.u32 2102212464, %v2712
        %v2725 = vshrl.u32 920167782, %v2713
        %v2726 = vor.u32 %v2724, %v2725
        %v2727 = vshll.u32 920167782, %v2712
        %v2728 = vshrl.u32 1326507024, %v2713
        %v2729 = vor.u32 %v2727, %v2728
        %vm2730 = vcmp.lt.s32.totalorder %v2711, 1
        %vm2731 = vcmp.lt.s32.totalorder %v2711, 2
        %vm2732 = vcmp.lt.s32.totalorder %v2711, 3
        %vm2733 = vcmp.lt.s32.totalorder %v2711, 4
        %v2734 = vsel %vm2730, %v2714, %v2717
        %v2735 = vsel %vm2733, %v2723, 2102212464
        %v2736 = vsel %vm2732, %v2720, %v2735
        %v2737 = vsel %vm2731, %v2734, %v2736
        %v2738 = vsel %vm2730, %v2717, %v2720
        %v2739 = vsel %vm2733, %v2726, 920167782
        %v2740 = vsel %vm2732, %v2723, %v2739
        %v2741 = vsel %vm2731, %v2738, %v2740
        %v2742 = vsel %vm2730, %v2720, %v2723
        %v2743 = vsel %vm2733, %v2729, 1326507024
        %v2744 = vsel %vm2732, %v2726, %v2743
        %v2745 = vsel %vm2731, %v2742, %v2744
        %v2746 = vshll.u32 %v2706, 8
        %v2747 = vmul.u32.u64.compose %v2746, %v2745
        %v2748 = vextract.low.u32 %v2747
        %v2749 = vextract.high.u32 %v2747
        %v2750 = vmul.u32.u64.compose %v2746, %v2741
        %v2751 = vextract.low.u32 %v2750
        %v2752 = vextract.high.u32 %v2750
        %v2753 = vmul.u32 %v2746, %v2737
        %v2754 = vadd.s32 %v2749, %v2751
        %vm2755 = vc.u32 %v2749, %v2751
        %v2756 = vadd.s32 %v2752, 1
        %v2757 = vsel %vm2755, %v2756, %v2752
        %v2758 = vadd.s32 %v2753, %v2757
        %v2759 = vadd.s32 %v2758, 536870912
        %v2760 = vshrl.u32 %v2759, 30
        %v2761 = vshll.u32 %v2760, 30
        %v2762 = vsub.s32 %v2758, %v2761
        %vm2763 = vcmp.lt.s32.totalorder %v2762, 0
        %v2764 = vsub.s32 0, %v2762
        %v2765 = vsel %vm2763, %v2764, %v2762
        %v2766 = vclz %v2765
        %v2767 = vsub.s32 %v2766, 2
        %vm2768 = vcmp.gt.s32.totalorder 0, %v2767
        %v2769 = vsel %vm2768, 0, %v2767
        %v2770 = vsub.s32 32, %v2769
        %v2771 = vshll.u32 %v2762, %v2769
        %v2772 = vshrl.u32 %v2754, %v2770
        %v2773 = vor.u32 %v2771, %v2772
        %v2774 = vsub.s32 4294967266, %v2769
        %v2775 = vadd.s32 %v2774, 127
        %v2776 = vshll.u32 %v2775, 23
        %v2777 = vor.u32 4788187, %v2776
        %v2778 = vand.u32 2147483647, %v2777
        %v2780 = vcvt.s32.f32 %v2773
        %v2781 = vmul.f32 %v2780, %v2778
        %v2782 = vxor.u32 %v2781, 2147483648
        %v2783 = vsel %vm2700, %v2782, %v2781
        %v2784 = vsub.s32 4, %v2760
        %v2785 = vsel %vm2700, %v2784, %v2760
        %v2786 = vsel %vm2699, %v194, %v2783
        %v2787 = vsel %vm2699, 0, %v2785
        %v2788 = vcosq.f32.pop %v2786
        %v2789 = vsinq.f32.pop %v2786
        %vm2790 = vweird.f32 %v194
        %v2791 = vadd.s32 %v2787, 3
        %v2792 = vand.u32 %v2791, 3
        %vm2793 = vcmp.lt.s32.totalorder %v2792, 2
        %vm2794 = vcmp.eq.s32.totalorder %v2792, 0
        %v2795 = vxor.u32 %v2789, 2147483648
        %v2796 = vsel %vm2794, %v2788, %v2795
        %vm2797 = vcmp.eq.s32.totalorder %v2792, 2
        %v2798 = vxor.u32 %v2788, 2147483648
        %v2799 = vsel %vm2797, %v2798, %v2789
        %v2800 = vsel %vm2793, %v2796, %v2799
        %v2801 = vsel %vm2790, nan, %v2800
        %v2802 = vand.u32 2147483647, %v195
        %vm2803 = vcmp.le.f32.partialorder %v2802, 0.7853982
        %vm2804 = vcmp.lt.s32.totalorder %v195, 0
        %v2805 = vand.u32 %v195, 2139095040
        %v2806 = vshrl.u32 %v2805, 23
        %v2807 = vsub.s32 %v2806, 127
        %v2808 = vand.u32 2147483647, %v195
        %v2809 = vand.u32 %v2808, 8388607
        %v2810 = vor.u32 %v2809, 8388608
        %v2811 = vsub.s32 0, %v2810
        %v2812 = vadd.s32 %v2807, 1
        %vm2813 = vcmp.gt.s32.totalorder %v2812, 0
        %v2814 = vsel %vm2813, %v2812, 0
        %v2815 = vshrl.u32 %v2814, 5
        %v2816 = vand.u32 %v2814, 31
        %v2817 = vsub.s32 32, %v2816
        %v2818 = vshrl.u32 683565275, %v2817
        %v2819 = vshll.u32 683565275, %v2816
        %v2820 = vshrl.u32 2475754826, %v2817
        %v2821 = vor.u32 %v2819, %v2820
        %v2822 = vshll.u32 2475754826, %v2816
        %v2823 = vshrl.u32 2131351028, %v2817
        %v2824 = vor.u32 %v2822, %v2823
        %v2825 = vshll.u32 2131351028, %v2816
        %v2826 = vshrl.u32 2102212464, %v2817
        %v2827 = vor.u32 %v2825, %v2826
        %v2828 = vshll.u32 2102212464, %v2816
        %v2829 = vshrl.u32 920167782, %v2817
        %v2830 = vor.u32 %v2828, %v2829
        %v2831 = vshll.u32 920167782, %v2816
        %v2832 = vshrl.u32 1326507024, %v2817
        %v2833 = vor.u32 %v2831, %v2832
        %vm2834 = vcmp.lt.s32.totalorder %v2815, 1
        %vm2835 = vcmp.lt.s32.totalorder %v2815, 2
        %vm2836 = vcmp.lt.s32.totalorder %v2815, 3
        %vm2837 = vcmp.lt.s32.totalorder %v2815, 4
        %v2838 = vsel %vm2834, %v2818, %v2821
        %v2839 = vsel %vm2837, %v2827, 2102212464
        %v2840 = vsel %vm2836, %v2824, %v2839
        %v2841 = vsel %vm2835, %v2838, %v2840
        %v2842 = vsel %vm2834, %v2821, %v2824
        %v2843 = vsel %vm2837, %v2830, 920167782
        %v2844 = vsel %vm2836, %v2827, %v2843
        %v2845 = vsel %vm2835, %v2842, %v2844
        %v2846 = vsel %vm2834, %v2824, %v2827
        %v2847 = vsel %vm2837, %v2833, 1326507024
        %v2848 = vsel %vm2836, %v2830, %v2847
        %v2849 = vsel %vm2835, %v2846, %v2848
        %v2850 = vshll.u32 %v2810, 8
        %v2851 = vmul.u32.u64.compose %v2850, %v2849
        %v2852 = vextract.low.u32 %v2851
        %v2853 = vextract.high.u32 %v2851
        %v2854 = vmul.u32.u64.compose %v2850, %v2845
        %v2855 = vextract.low.u32 %v2854
        %v2856 = vextract.high.u32 %v2854
        %v2857 = vmul.u32 %v2850, %v2841
        %v2858 = vadd.s32 %v2853, %v2855
        %vm2859 = vc.u32 %v2853, %v2855
        %v2860 = vadd.s32 %v2856, 1
        %v2861 = vsel %vm2859, %v2860, %v2856
        %v2862 = vadd.s32 %v2857, %v2861
        %v2863 = vadd.s32 %v2862, 536870912
        %v2864 = vshrl.u32 %v2863, 30
        %v2865 = vshll.u32 %v2864, 30
        %v2866 = vsub.s32 %v2862, %v2865
        %vm2867 = vcmp.lt.s32.totalorder %v2866, 0
        %v2868 = vsub.s32 0, %v2866
        %v2869 = vsel %vm2867, %v2868, %v2866
        %v2870 = vclz %v2869
        %v2871 = vsub.s32 %v2870, 2
        %vm2872 = vcmp.gt.s32.totalorder 0, %v2871
        %v2873 = vsel %vm2872, 0, %v2871
        %v2874 = vsub.s32 32, %v2873
        %v2875 = vshll.u32 %v2866, %v2873
        %v2876 = vshrl.u32 %v2858, %v2874
        %v2877 = vor.u32 %v2875, %v2876
        %v2878 = vsub.s32 4294967266, %v2873
        %v2879 = vadd.s32 %v2878, 127
        %v2880 = vshll.u32 %v2879, 23
        %v2881 = vor.u32 4788187, %v2880
        %v2882 = vand.u32 2147483647, %v2881
        %v2884 = vcvt.s32.f32 %v2877
        %v2885 = vmul.f32 %v2884, %v2882
        %v2886 = vxor.u32 %v2885, 2147483648
        %v2887 = vsel %vm2804, %v2886, %v2885
        %v2888 = vsub.s32 4, %v2864
        %v2889 = vsel %vm2804, %v2888, %v2864
        %v2890 = vsel %vm2803, %v195, %v2887
        %v2891 = vsel %vm2803, 0, %v2889
        %v2892 = vcosq.f32.pop %v2890
        %v2893 = vsinq.f32.pop %v2890
        %vm2894 = vweird.f32 %v195
        %v2895 = vadd.s32 %v2891, 3
        %v2896 = vand.u32 %v2895, 3
        %vm2897 = vcmp.lt.s32.totalorder %v2896, 2
        %vm2898 = vcmp.eq.s32.totalorder %v2896, 0
        %v2899 = vxor.u32 %v2893, 2147483648
        %v2900 = vsel %vm2898, %v2892, %v2899
        %vm2901 = vcmp.eq.s32.totalorder %v2896, 2
        %v2902 = vxor.u32 %v2892, 2147483648
        %v2903 = vsel %vm2901, %v2902, %v2893
        %v2904 = vsel %vm2897, %v2900, %v2903
        %v2905 = vsel %vm2894, nan, %v2904
        %v2906 = vand.u32 2147483647, %v196
        %vm2907 = vcmp.le.f32.partialorder %v2906, 0.7853982
        %vm2908 = vcmp.lt.s32.totalorder %v196, 0
        %v2909 = vand.u32 %v196, 2139095040
        %v2910 = vshrl.u32 %v2909, 23
        %v2911 = vsub.s32 %v2910, 127
        %v2912 = vand.u32 2147483647, %v196
        %v2913 = vand.u32 %v2912, 8388607
        %v2914 = vor.u32 %v2913, 8388608
        %v2915 = vsub.s32 0, %v2914
        %v2916 = vadd.s32 %v2911, 1
        %vm2917 = vcmp.gt.s32.totalorder %v2916, 0
        %v2918 = vsel %vm2917, %v2916, 0
        %v2919 = vshrl.u32 %v2918, 5
        %v2920 = vand.u32 %v2918, 31
        %v2921 = vsub.s32 32, %v2920
        %v2922 = vshrl.u32 683565275, %v2921
        %v2923 = vshll.u32 683565275, %v2920
        %v2924 = vshrl.u32 2475754826, %v2921
        %v2925 = vor.u32 %v2923, %v2924
        %v2926 = vshll.u32 2475754826, %v2920
        %v2927 = vshrl.u32 2131351028, %v2921
        %v2928 = vor.u32 %v2926, %v2927
        %v2929 = vshll.u32 2131351028, %v2920
        %v2930 = vshrl.u32 2102212464, %v2921
        %v2931 = vor.u32 %v2929, %v2930
        %v2932 = vshll.u32 2102212464, %v2920
        %v2933 = vshrl.u32 920167782, %v2921
        %v2934 = vor.u32 %v2932, %v2933
        %v2935 = vshll.u32 920167782, %v2920
        %v2936 = vshrl.u32 1326507024, %v2921
        %v2937 = vor.u32 %v2935, %v2936
        %vm2938 = vcmp.lt.s32.totalorder %v2919, 1
        %vm2939 = vcmp.lt.s32.totalorder %v2919, 2
        %vm2940 = vcmp.lt.s32.totalorder %v2919, 3
        %vm2941 = vcmp.lt.s32.totalorder %v2919, 4
        %v2942 = vsel %vm2938, %v2922, %v2925
        %v2943 = vsel %vm2941, %v2931, 2102212464
        %v2944 = vsel %vm2940, %v2928, %v2943
        %v2945 = vsel %vm2939, %v2942, %v2944
        %v2946 = vsel %vm2938, %v2925, %v2928
        %v2947 = vsel %vm2941, %v2934, 920167782
        %v2948 = vsel %vm2940, %v2931, %v2947
        %v2949 = vsel %vm2939, %v2946, %v2948
        %v2950 = vsel %vm2938, %v2928, %v2931
        %v2951 = vsel %vm2941, %v2937, 1326507024
        %v2952 = vsel %vm2940, %v2934, %v2951
        %v2953 = vsel %vm2939, %v2950, %v2952
        %v2954 = vshll.u32 %v2914, 8
        %v2955 = vmul.u32.u64.compose %v2954, %v2953
        %v2956 = vextract.low.u32 %v2955
        %v2957 = vextract.high.u32 %v2955
        %v2958 = vmul.u32.u64.compose %v2954, %v2949
        %v2959 = vextract.low.u32 %v2958
        %v2960 = vextract.high.u32 %v2958
        %v2961 = vmul.u32 %v2954, %v2945
        %v2962 = vadd.s32 %v2957, %v2959
        %vm2963 = vc.u32 %v2957, %v2959
        %v2964 = vadd.s32 %v2960, 1
        %v2965 = vsel %vm2963, %v2964, %v2960
        %v2966 = vadd.s32 %v2961, %v2965
        %v2967 = vadd.s32 %v2966, 536870912
        %v2968 = vshrl.u32 %v2967, 30
        %v2969 = vshll.u32 %v2968, 30
        %v2970 = vsub.s32 %v2966, %v2969
        %vm2971 = vcmp.lt.s32.totalorder %v2970, 0
        %v2972 = vsub.s32 0, %v2970
        %v2973 = vsel %vm2971, %v2972, %v2970
        %v2974 = vclz %v2973
        %v2975 = vsub.s32 %v2974, 2
        %vm2976 = vcmp.gt.s32.totalorder 0, %v2975
        %v2977 = vsel %vm2976, 0, %v2975
        %v2978 = vsub.s32 32, %v2977
        %v2979 = vshll.u32 %v2970, %v2977
        %v2980 = vshrl.u32 %v2962, %v2978
        %v2981 = vor.u32 %v2979, %v2980
        %v2982 = vsub.s32 4294967266, %v2977
        %v2983 = vadd.s32 %v2982, 127
        %v2984 = vshll.u32 %v2983, 23
        %v2985 = vor.u32 4788187, %v2984
        %v2986 = vand.u32 2147483647, %v2985
        %v2988 = vcvt.s32.f32 %v2981
        %v2989 = vmul.f32 %v2988, %v2986
        %v2990 = vxor.u32 %v2989, 2147483648
        %v2991 = vsel %vm2908, %v2990, %v2989
        %v2992 = vsub.s32 4, %v2968
        %v2993 = vsel %vm2908, %v2992, %v2968
        %v2994 = vsel %vm2907, %v196, %v2991
        %v2995 = vsel %vm2907, 0, %v2993
        %v2996 = vcosq.f32.pop %v2994
        %v2997 = vsinq.f32.pop %v2994
        %vm2998 = vweird.f32 %v196
        %v2999 = vadd.s32 %v2995, 3
        %v3000 = vand.u32 %v2999, 3
        %vm3001 = vcmp.lt.s32.totalorder %v3000, 2
        %vm3002 = vcmp.eq.s32.totalorder %v3000, 0
        %v3003 = vxor.u32 %v2997, 2147483648
        %v3004 = vsel %vm3002, %v2996, %v3003
        %vm3005 = vcmp.eq.s32.totalorder %v3000, 2
        %v3006 = vxor.u32 %v2996, 2147483648
        %v3007 = vsel %vm3005, %v3006, %v2997
        %v3008 = vsel %vm3001, %v3004, %v3007
        %v3009 = vsel %vm2998, nan, %v3008
        %v3010 = vand.u32 2147483647, %v197
        %vm3011 = vcmp.le.f32.partialorder %v3010, 0.7853982
        %vm3012 = vcmp.lt.s32.totalorder %v197, 0
        %v3013 = vand.u32 %v197, 2139095040
        %v3014 = vshrl.u32 %v3013, 23
        %v3015 = vsub.s32 %v3014, 127
        %v3016 = vand.u32 2147483647, %v197
        %v3017 = vand.u32 %v3016, 8388607
        %v3018 = vor.u32 %v3017, 8388608
        %v3019 = vsub.s32 0, %v3018
        %v3020 = vadd.s32 %v3015, 1
        %vm3021 = vcmp.gt.s32.totalorder %v3020, 0
        %v3022 = vsel %vm3021, %v3020, 0
        %v3023 = vshrl.u32 %v3022, 5
        %v3024 = vand.u32 %v3022, 31
        %v3025 = vsub.s32 32, %v3024
        %v3026 = vshrl.u32 683565275, %v3025
        %v3027 = vshll.u32 683565275, %v3024
        %v3028 = vshrl.u32 2475754826, %v3025
        %v3029 = vor.u32 %v3027, %v3028
        %v3030 = vshll.u32 2475754826, %v3024
        %v3031 = vshrl.u32 2131351028, %v3025
        %v3032 = vor.u32 %v3030, %v3031
        %v3033 = vshll.u32 2131351028, %v3024
        %v3034 = vshrl.u32 2102212464, %v3025
        %v3035 = vor.u32 %v3033, %v3034
        %v3036 = vshll.u32 2102212464, %v3024
        %v3037 = vshrl.u32 920167782, %v3025
        %v3038 = vor.u32 %v3036, %v3037
        %v3039 = vshll.u32 920167782, %v3024
        %v3040 = vshrl.u32 1326507024, %v3025
        %v3041 = vor.u32 %v3039, %v3040
        %vm3042 = vcmp.lt.s32.totalorder %v3023, 1
        %vm3043 = vcmp.lt.s32.totalorder %v3023, 2
        %vm3044 = vcmp.lt.s32.totalorder %v3023, 3
        %vm3045 = vcmp.lt.s32.totalorder %v3023, 4
        %v3046 = vsel %vm3042, %v3026, %v3029
        %v3047 = vsel %vm3045, %v3035, 2102212464
        %v3048 = vsel %vm3044, %v3032, %v3047
        %v3049 = vsel %vm3043, %v3046, %v3048
        %v3050 = vsel %vm3042, %v3029, %v3032
        %v3051 = vsel %vm3045, %v3038, 920167782
        %v3052 = vsel %vm3044, %v3035, %v3051
        %v3053 = vsel %vm3043, %v3050, %v3052
        %v3054 = vsel %vm3042, %v3032, %v3035
        %v3055 = vsel %vm3045, %v3041, 1326507024
        %v3056 = vsel %vm3044, %v3038, %v3055
        %v3057 = vsel %vm3043, %v3054, %v3056
        %v3058 = vshll.u32 %v3018, 8
        %v3059 = vmul.u32.u64.compose %v3058, %v3057
        %v3060 = vextract.low.u32 %v3059
        %v3061 = vextract.high.u32 %v3059
        %v3062 = vmul.u32.u64.compose %v3058, %v3053
        %v3063 = vextract.low.u32 %v3062
        %v3064 = vextract.high.u32 %v3062
        %v3065 = vmul.u32 %v3058, %v3049
        %v3066 = vadd.s32 %v3061, %v3063
        %vm3067 = vc.u32 %v3061, %v3063
        %v3068 = vadd.s32 %v3064, 1
        %v3069 = vsel %vm3067, %v3068, %v3064
        %v3070 = vadd.s32 %v3065, %v3069
        %v3071 = vadd.s32 %v3070, 536870912
        %v3072 = vshrl.u32 %v3071, 30
        %v3073 = vshll.u32 %v3072, 30
        %v3074 = vsub.s32 %v3070, %v3073
        %vm3075 = vcmp.lt.s32.totalorder %v3074, 0
        %v3076 = vsub.s32 0, %v3074
        %v3077 = vsel %vm3075, %v3076, %v3074
        %v3078 = vclz %v3077
        %v3079 = vsub.s32 %v3078, 2
        %vm3080 = vcmp.gt.s32.totalorder 0, %v3079
        %v3081 = vsel %vm3080, 0, %v3079
        %v3082 = vsub.s32 32, %v3081
        %v3083 = vshll.u32 %v3074, %v3081
        %v3084 = vshrl.u32 %v3066, %v3082
        %v3085 = vor.u32 %v3083, %v3084
        %v3086 = vsub.s32 4294967266, %v3081
        %v3087 = vadd.s32 %v3086, 127
        %v3088 = vshll.u32 %v3087, 23
        %v3089 = vor.u32 4788187, %v3088
        %v3090 = vand.u32 2147483647, %v3089
        %v3092 = vcvt.s32.f32 %v3085
        %v3093 = vmul.f32 %v3092, %v3090
        %v3094 = vxor.u32 %v3093, 2147483648
        %v3095 = vsel %vm3012, %v3094, %v3093
        %v3096 = vsub.s32 4, %v3072
        %v3097 = vsel %vm3012, %v3096, %v3072
        %v3098 = vsel %vm3011, %v197, %v3095
        %v3099 = vsel %vm3011, 0, %v3097
        %v3100 = vcosq.f32.pop %v3098
        %v3101 = vsinq.f32.pop %v3098
        %vm3102 = vweird.f32 %v197
        %v3103 = vadd.s32 %v3099, 3
        %v3104 = vand.u32 %v3103, 3
        %vm3105 = vcmp.lt.s32.totalorder %v3104, 2
        %vm3106 = vcmp.eq.s32.totalorder %v3104, 0
        %v3107 = vxor.u32 %v3101, 2147483648
        %v3108 = vsel %vm3106, %v3100, %v3107
        %vm3109 = vcmp.eq.s32.totalorder %v3104, 2
        %v3110 = vxor.u32 %v3100, 2147483648
        %v3111 = vsel %vm3109, %v3110, %v3101
        %v3112 = vsel %vm3105, %v3108, %v3111
        %v3113 = vsel %vm3102, nan, %v3112
        %v3114 = vand.u32 2147483647, %v198
        %vm3115 = vcmp.le.f32.partialorder %v3114, 0.7853982
        %vm3116 = vcmp.lt.s32.totalorder %v198, 0
        %v3117 = vand.u32 %v198, 2139095040
        %v3118 = vshrl.u32 %v3117, 23
        %v3119 = vsub.s32 %v3118, 127
        %v3120 = vand.u32 2147483647, %v198
        %v3121 = vand.u32 %v3120, 8388607
        %v3122 = vor.u32 %v3121, 8388608
        %v3123 = vsub.s32 0, %v3122
        %v3124 = vadd.s32 %v3119, 1
        %vm3125 = vcmp.gt.s32.totalorder %v3124, 0
        %v3126 = vsel %vm3125, %v3124, 0
        %v3127 = vshrl.u32 %v3126, 5
        %v3128 = vand.u32 %v3126, 31
        %v3129 = vsub.s32 32, %v3128
        %v3130 = vshrl.u32 683565275, %v3129
        %v3131 = vshll.u32 683565275, %v3128
        %v3132 = vshrl.u32 2475754826, %v3129
        %v3133 = vor.u32 %v3131, %v3132
        %v3134 = vshll.u32 2475754826, %v3128
        %v3135 = vshrl.u32 2131351028, %v3129
        %v3136 = vor.u32 %v3134, %v3135
        %v3137 = vshll.u32 2131351028, %v3128
        %v3138 = vshrl.u32 2102212464, %v3129
        %v3139 = vor.u32 %v3137, %v3138
        %v3140 = vshll.u32 2102212464, %v3128
        %v3141 = vshrl.u32 920167782, %v3129
        %v3142 = vor.u32 %v3140, %v3141
        %v3143 = vshll.u32 920167782, %v3128
        %v3144 = vshrl.u32 1326507024, %v3129
        %v3145 = vor.u32 %v3143, %v3144
        %vm3146 = vcmp.lt.s32.totalorder %v3127, 1
        %vm3147 = vcmp.lt.s32.totalorder %v3127, 2
        %vm3148 = vcmp.lt.s32.totalorder %v3127, 3
        %vm3149 = vcmp.lt.s32.totalorder %v3127, 4
        %v3150 = vsel %vm3146, %v3130, %v3133
        %v3151 = vsel %vm3149, %v3139, 2102212464
        %v3152 = vsel %vm3148, %v3136, %v3151
        %v3153 = vsel %vm3147, %v3150, %v3152
        %v3154 = vsel %vm3146, %v3133, %v3136
        %v3155 = vsel %vm3149, %v3142, 920167782
        %v3156 = vsel %vm3148, %v3139, %v3155
        %v3157 = vsel %vm3147, %v3154, %v3156
        %v3158 = vsel %vm3146, %v3136, %v3139
        %v3159 = vsel %vm3149, %v3145, 1326507024
        %v3160 = vsel %vm3148, %v3142, %v3159
        %v3161 = vsel %vm3147, %v3158, %v3160
        %v3162 = vshll.u32 %v3122, 8
        %v3163 = vmul.u32.u64.compose %v3162, %v3161
        %v3164 = vextract.low.u32 %v3163
        %v3165 = vextract.high.u32 %v3163
        %v3166 = vmul.u32.u64.compose %v3162, %v3157
        %v3167 = vextract.low.u32 %v3166
        %v3168 = vextract.high.u32 %v3166
        %v3169 = vmul.u32 %v3162, %v3153
        %v3170 = vadd.s32 %v3165, %v3167
        %vm3171 = vc.u32 %v3165, %v3167
        %v3172 = vadd.s32 %v3168, 1
        %v3173 = vsel %vm3171, %v3172, %v3168
        %v3174 = vadd.s32 %v3169, %v3173
        %v3175 = vadd.s32 %v3174, 536870912
        %v3176 = vshrl.u32 %v3175, 30
        %v3177 = vshll.u32 %v3176, 30
        %v3178 = vsub.s32 %v3174, %v3177
        %vm3179 = vcmp.lt.s32.totalorder %v3178, 0
        %v3180 = vsub.s32 0, %v3178
        %v3181 = vsel %vm3179, %v3180, %v3178
        %v3182 = vclz %v3181
        %v3183 = vsub.s32 %v3182, 2
        %vm3184 = vcmp.gt.s32.totalorder 0, %v3183
        %v3185 = vsel %vm3184, 0, %v3183
        %v3186 = vsub.s32 32, %v3185
        %v3187 = vshll.u32 %v3178, %v3185
        %v3188 = vshrl.u32 %v3170, %v3186
        %v3189 = vor.u32 %v3187, %v3188
        %v3190 = vsub.s32 4294967266, %v3185
        %v3191 = vadd.s32 %v3190, 127
        %v3192 = vshll.u32 %v3191, 23
        %v3193 = vor.u32 4788187, %v3192
        %v3194 = vand.u32 2147483647, %v3193
        %v3196 = vcvt.s32.f32 %v3189
        %v3197 = vmul.f32 %v3196, %v3194
        %v3198 = vxor.u32 %v3197, 2147483648
        %v3199 = vsel %vm3116, %v3198, %v3197
        %v3200 = vsub.s32 4, %v3176
        %v3201 = vsel %vm3116, %v3200, %v3176
        %v3202 = vsel %vm3115, %v198, %v3199
        %v3203 = vsel %vm3115, 0, %v3201
        %v3204 = vcosq.f32.pop %v3202
        %v3205 = vsinq.f32.pop %v3202
        %vm3206 = vweird.f32 %v198
        %v3207 = vadd.s32 %v3203, 3
        %v3208 = vand.u32 %v3207, 3
        %vm3209 = vcmp.lt.s32.totalorder %v3208, 2
        %vm3210 = vcmp.eq.s32.totalorder %v3208, 0
        %v3211 = vxor.u32 %v3205, 2147483648
        %v3212 = vsel %vm3210, %v3204, %v3211
        %vm3213 = vcmp.eq.s32.totalorder %v3208, 2
        %v3214 = vxor.u32 %v3204, 2147483648
        %v3215 = vsel %vm3213, %v3214, %v3205
        %v3216 = vsel %vm3209, %v3212, %v3215
        %v3217 = vsel %vm3206, nan, %v3216
        %v3218 = vand.u32 2147483647, %v199
        %vm3219 = vcmp.le.f32.partialorder %v3218, 0.7853982
        %vm3220 = vcmp.lt.s32.totalorder %v199, 0
        %v3221 = vand.u32 %v199, 2139095040
        %v3222 = vshrl.u32 %v3221, 23
        %v3223 = vsub.s32 %v3222, 127
        %v3224 = vand.u32 2147483647, %v199
        %v3225 = vand.u32 %v3224, 8388607
        %v3226 = vor.u32 %v3225, 8388608
        %v3227 = vsub.s32 0, %v3226
        %v3228 = vadd.s32 %v3223, 1
        %vm3229 = vcmp.gt.s32.totalorder %v3228, 0
        %v3230 = vsel %vm3229, %v3228, 0
        %v3231 = vshrl.u32 %v3230, 5
        %v3232 = vand.u32 %v3230, 31
        %v3233 = vsub.s32 32, %v3232
        %v3234 = vshrl.u32 683565275, %v3233
        %v3235 = vshll.u32 683565275, %v3232
        %v3236 = vshrl.u32 2475754826, %v3233
        %v3237 = vor.u32 %v3235, %v3236
        %v3238 = vshll.u32 2475754826, %v3232
        %v3239 = vshrl.u32 2131351028, %v3233
        %v3240 = vor.u32 %v3238, %v3239
        %v3241 = vshll.u32 2131351028, %v3232
        %v3242 = vshrl.u32 2102212464, %v3233
        %v3243 = vor.u32 %v3241, %v3242
        %v3244 = vshll.u32 2102212464, %v3232
        %v3245 = vshrl.u32 920167782, %v3233
        %v3246 = vor.u32 %v3244, %v3245
        %v3247 = vshll.u32 920167782, %v3232
        %v3248 = vshrl.u32 1326507024, %v3233
        %v3249 = vor.u32 %v3247, %v3248
        %vm3250 = vcmp.lt.s32.totalorder %v3231, 1
        %vm3251 = vcmp.lt.s32.totalorder %v3231, 2
        %vm3252 = vcmp.lt.s32.totalorder %v3231, 3
        %vm3253 = vcmp.lt.s32.totalorder %v3231, 4
        %v3254 = vsel %vm3250, %v3234, %v3237
        %v3255 = vsel %vm3253, %v3243, 2102212464
        %v3256 = vsel %vm3252, %v3240, %v3255
        %v3257 = vsel %vm3251, %v3254, %v3256
        %v3258 = vsel %vm3250, %v3237, %v3240
        %v3259 = vsel %vm3253, %v3246, 920167782
        %v3260 = vsel %vm3252, %v3243, %v3259
        %v3261 = vsel %vm3251, %v3258, %v3260
        %v3262 = vsel %vm3250, %v3240, %v3243
        %v3263 = vsel %vm3253, %v3249, 1326507024
        %v3264 = vsel %vm3252, %v3246, %v3263
        %v3265 = vsel %vm3251, %v3262, %v3264
        %v3266 = vshll.u32 %v3226, 8
        %v3267 = vmul.u32.u64.compose %v3266, %v3265
        %v3268 = vextract.low.u32 %v3267
        %v3269 = vextract.high.u32 %v3267
        %v3270 = vmul.u32.u64.compose %v3266, %v3261
        %v3271 = vextract.low.u32 %v3270
        %v3272 = vextract.high.u32 %v3270
        %v3273 = vmul.u32 %v3266, %v3257
        %v3274 = vadd.s32 %v3269, %v3271
        %vm3275 = vc.u32 %v3269, %v3271
        %v3276 = vadd.s32 %v3272, 1
        %v3277 = vsel %vm3275, %v3276, %v3272
        %v3278 = vadd.s32 %v3273, %v3277
        %v3279 = vadd.s32 %v3278, 536870912
        %v3280 = vshrl.u32 %v3279, 30
        %v3281 = vshll.u32 %v3280, 30
        %v3282 = vsub.s32 %v3278, %v3281
        %vm3283 = vcmp.lt.s32.totalorder %v3282, 0
        %v3284 = vsub.s32 0, %v3282
        %v3285 = vsel %vm3283, %v3284, %v3282
        %v3286 = vclz %v3285
        %v3287 = vsub.s32 %v3286, 2
        %vm3288 = vcmp.gt.s32.totalorder 0, %v3287
        %v3289 = vsel %vm3288, 0, %v3287
        %v3290 = vsub.s32 32, %v3289
        %v3291 = vshll.u32 %v3282, %v3289
        %v3292 = vshrl.u32 %v3274, %v3290
        %v3293 = vor.u32 %v3291, %v3292
        %v3294 = vsub.s32 4294967266, %v3289
        %v3295 = vadd.s32 %v3294, 127
        %v3296 = vshll.u32 %v3295, 23
        %v3297 = vor.u32 4788187, %v3296
        %v3298 = vand.u32 2147483647, %v3297
        %v3300 = vcvt.s32.f32 %v3293
        %v3301 = vmul.f32 %v3300, %v3298
        %v3302 = vxor.u32 %v3301, 2147483648
        %v3303 = vsel %vm3220, %v3302, %v3301
        %v3304 = vsub.s32 4, %v3280
        %v3305 = vsel %vm3220, %v3304, %v3280
        %v3306 = vsel %vm3219, %v199, %v3303
        %v3307 = vsel %vm3219, 0, %v3305
        %v3308 = vcosq.f32.pop %v3306
        %v3309 = vsinq.f32.pop %v3306
        %vm3310 = vweird.f32 %v199
        %v3311 = vadd.s32 %v3307, 3
        %v3312 = vand.u32 %v3311, 3
        %vm3313 = vcmp.lt.s32.totalorder %v3312, 2
        %vm3314 = vcmp.eq.s32.totalorder %v3312, 0
        %v3315 = vxor.u32 %v3309, 2147483648
        %v3316 = vsel %vm3314, %v3308, %v3315
        %vm3317 = vcmp.eq.s32.totalorder %v3312, 2
        %v3318 = vxor.u32 %v3308, 2147483648
        %v3319 = vsel %vm3317, %v3318, %v3309
        %v3320 = vsel %vm3313, %v3316, %v3319
        %v3321 = vsel %vm3310, nan, %v3320
        %v3322 = vand.u32 2147483647, %v200
        %vm3323 = vcmp.le.f32.partialorder %v3322, 0.7853982
        %vm3324 = vcmp.lt.s32.totalorder %v200, 0
        %v3325 = vand.u32 %v200, 2139095040
        %v3326 = vshrl.u32 %v3325, 23
        %v3327 = vsub.s32 %v3326, 127
        %v3328 = vand.u32 2147483647, %v200
        %v3329 = vand.u32 %v3328, 8388607
        %v3330 = vor.u32 %v3329, 8388608
        %v3331 = vsub.s32 0, %v3330
        %v3332 = vadd.s32 %v3327, 1
        %vm3333 = vcmp.gt.s32.totalorder %v3332, 0
        %v3334 = vsel %vm3333, %v3332, 0
        %v3335 = vshrl.u32 %v3334, 5
        %v3336 = vand.u32 %v3334, 31
        %v3337 = vsub.s32 32, %v3336
        %v3338 = vshrl.u32 683565275, %v3337
        %v3339 = vshll.u32 683565275, %v3336
        %v3340 = vshrl.u32 2475754826, %v3337
        %v3341 = vor.u32 %v3339, %v3340
        %v3342 = vshll.u32 2475754826, %v3336
        %v3343 = vshrl.u32 2131351028, %v3337
        %v3344 = vor.u32 %v3342, %v3343
        %v3345 = vshll.u32 2131351028, %v3336
        %v3346 = vshrl.u32 2102212464, %v3337
        %v3347 = vor.u32 %v3345, %v3346
        %v3348 = vshll.u32 2102212464, %v3336
        %v3349 = vshrl.u32 920167782, %v3337
        %v3350 = vor.u32 %v3348, %v3349
        %v3351 = vshll.u32 920167782, %v3336
        %v3352 = vshrl.u32 1326507024, %v3337
        %v3353 = vor.u32 %v3351, %v3352
        %vm3354 = vcmp.lt.s32.totalorder %v3335, 1
        %vm3355 = vcmp.lt.s32.totalorder %v3335, 2
        %vm3356 = vcmp.lt.s32.totalorder %v3335, 3
        %vm3357 = vcmp.lt.s32.totalorder %v3335, 4
        %v3358 = vsel %vm3354, %v3338, %v3341
        %v3359 = vsel %vm3357, %v3347, 2102212464
        %v3360 = vsel %vm3356, %v3344, %v3359
        %v3361 = vsel %vm3355, %v3358, %v3360
        %v3362 = vsel %vm3354, %v3341, %v3344
        %v3363 = vsel %vm3357, %v3350, 920167782
        %v3364 = vsel %vm3356, %v3347, %v3363
        %v3365 = vsel %vm3355, %v3362, %v3364
        %v3366 = vsel %vm3354, %v3344, %v3347
        %v3367 = vsel %vm3357, %v3353, 1326507024
        %v3368 = vsel %vm3356, %v3350, %v3367
        %v3369 = vsel %vm3355, %v3366, %v3368
        %v3370 = vshll.u32 %v3330, 8
        %v3371 = vmul.u32.u64.compose %v3370, %v3369
        %v3372 = vextract.low.u32 %v3371
        %v3373 = vextract.high.u32 %v3371
        %v3374 = vmul.u32.u64.compose %v3370, %v3365
        %v3375 = vextract.low.u32 %v3374
        %v3376 = vextract.high.u32 %v3374
        %v3377 = vmul.u32 %v3370, %v3361
        %v3378 = vadd.s32 %v3373, %v3375
        %vm3379 = vc.u32 %v3373, %v3375
        %v3380 = vadd.s32 %v3376, 1
        %v3381 = vsel %vm3379, %v3380, %v3376
        %v3382 = vadd.s32 %v3377, %v3381
        %v3383 = vadd.s32 %v3382, 536870912
        %v3384 = vshrl.u32 %v3383, 30
        %v3385 = vshll.u32 %v3384, 30
        %v3386 = vsub.s32 %v3382, %v3385
        %vm3387 = vcmp.lt.s32.totalorder %v3386, 0
        %v3388 = vsub.s32 0, %v3386
        %v3389 = vsel %vm3387, %v3388, %v3386
        %v3390 = vclz %v3389
        %v3391 = vsub.s32 %v3390, 2
        %vm3392 = vcmp.gt.s32.totalorder 0, %v3391
        %v3393 = vsel %vm3392, 0, %v3391
        %v3394 = vsub.s32 32, %v3393
        %v3395 = vshll.u32 %v3386, %v3393
        %v3396 = vshrl.u32 %v3378, %v3394
        %v3397 = vor.u32 %v3395, %v3396
        %v3398 = vsub.s32 4294967266, %v3393
        %v3399 = vadd.s32 %v3398, 127
        %v3400 = vshll.u32 %v3399, 23
        %v3401 = vor.u32 4788187, %v3400
        %v3402 = vand.u32 2147483647, %v3401
        %v3404 = vcvt.s32.f32 %v3397
        %v3405 = vmul.f32 %v3404, %v3402
        %v3406 = vxor.u32 %v3405, 2147483648
        %v3407 = vsel %vm3324, %v3406, %v3405
        %v3408 = vsub.s32 4, %v3384
        %v3409 = vsel %vm3324, %v3408, %v3384
        %v3410 = vsel %vm3323, %v200, %v3407
        %v3411 = vsel %vm3323, 0, %v3409
        %v3412 = vcosq.f32.pop %v3410
        %v3413 = vsinq.f32.pop %v3410
        %vm3414 = vweird.f32 %v200
        %v3415 = vadd.s32 %v3411, 3
        %v3416 = vand.u32 %v3415, 3
        %vm3417 = vcmp.lt.s32.totalorder %v3416, 2
        %vm3418 = vcmp.eq.s32.totalorder %v3416, 0
        %v3419 = vxor.u32 %v3413, 2147483648
        %v3420 = vsel %vm3418, %v3412, %v3419
        %vm3421 = vcmp.eq.s32.totalorder %v3416, 2
        %v3422 = vxor.u32 %v3412, 2147483648
        %v3423 = vsel %vm3421, %v3422, %v3413
        %v3424 = vsel %vm3417, %v3420, %v3423
        %v3425 = vsel %vm3414, nan, %v3424
        %v3426 = vand.u32 2147483647, %v201
        %vm3427 = vcmp.le.f32.partialorder %v3426, 0.7853982
        %vm3428 = vcmp.lt.s32.totalorder %v201, 0
        %v3429 = vand.u32 %v201, 2139095040
        %v3430 = vshrl.u32 %v3429, 23
        %v3431 = vsub.s32 %v3430, 127
        %v3432 = vand.u32 2147483647, %v201
        %v3433 = vand.u32 %v3432, 8388607
        %v3434 = vor.u32 %v3433, 8388608
        %v3435 = vsub.s32 0, %v3434
        %v3436 = vadd.s32 %v3431, 1
        %vm3437 = vcmp.gt.s32.totalorder %v3436, 0
        %v3438 = vsel %vm3437, %v3436, 0
        %v3439 = vshrl.u32 %v3438, 5
        %v3440 = vand.u32 %v3438, 31
        %v3441 = vsub.s32 32, %v3440
        %v3442 = vshrl.u32 683565275, %v3441
        %v3443 = vshll.u32 683565275, %v3440
        %v3444 = vshrl.u32 2475754826, %v3441
        %v3445 = vor.u32 %v3443, %v3444
        %v3446 = vshll.u32 2475754826, %v3440
        %v3447 = vshrl.u32 2131351028, %v3441
        %v3448 = vor.u32 %v3446, %v3447
        %v3449 = vshll.u32 2131351028, %v3440
        %v3450 = vshrl.u32 2102212464, %v3441
        %v3451 = vor.u32 %v3449, %v3450
        %v3452 = vshll.u32 2102212464, %v3440
        %v3453 = vshrl.u32 920167782, %v3441
        %v3454 = vor.u32 %v3452, %v3453
        %v3455 = vshll.u32 920167782, %v3440
        %v3456 = vshrl.u32 1326507024, %v3441
        %v3457 = vor.u32 %v3455, %v3456
        %vm3458 = vcmp.lt.s32.totalorder %v3439, 1
        %vm3459 = vcmp.lt.s32.totalorder %v3439, 2
        %vm3460 = vcmp.lt.s32.totalorder %v3439, 3
        %vm3461 = vcmp.lt.s32.totalorder %v3439, 4
        %v3462 = vsel %vm3458, %v3442, %v3445
        %v3463 = vsel %vm3461, %v3451, 2102212464
        %v3464 = vsel %vm3460, %v3448, %v3463
        %v3465 = vsel %vm3459, %v3462, %v3464
        %v3466 = vsel %vm3458, %v3445, %v3448
        %v3467 = vsel %vm3461, %v3454, 920167782
        %v3468 = vsel %vm3460, %v3451, %v3467
        %v3469 = vsel %vm3459, %v3466, %v3468
        %v3470 = vsel %vm3458, %v3448, %v3451
        %v3471 = vsel %vm3461, %v3457, 1326507024
        %v3472 = vsel %vm3460, %v3454, %v3471
        %v3473 = vsel %vm3459, %v3470, %v3472
        %v3474 = vshll.u32 %v3434, 8
        %v3475 = vmul.u32.u64.compose %v3474, %v3473
        %v3476 = vextract.low.u32 %v3475
        %v3477 = vextract.high.u32 %v3475
        %v3478 = vmul.u32.u64.compose %v3474, %v3469
        %v3479 = vextract.low.u32 %v3478
        %v3480 = vextract.high.u32 %v3478
        %v3481 = vmul.u32 %v3474, %v3465
        %v3482 = vadd.s32 %v3477, %v3479
        %vm3483 = vc.u32 %v3477, %v3479
        %v3484 = vadd.s32 %v3480, 1
        %v3485 = vsel %vm3483, %v3484, %v3480
        %v3486 = vadd.s32 %v3481, %v3485
        %v3487 = vadd.s32 %v3486, 536870912
        %v3488 = vshrl.u32 %v3487, 30
        %v3489 = vshll.u32 %v3488, 30
        %v3490 = vsub.s32 %v3486, %v3489
        %vm3491 = vcmp.lt.s32.totalorder %v3490, 0
        %v3492 = vsub.s32 0, %v3490
        %v3493 = vsel %vm3491, %v3492, %v3490
        %v3494 = vclz %v3493
        %v3495 = vsub.s32 %v3494, 2
        %vm3496 = vcmp.gt.s32.totalorder 0, %v3495
        %v3497 = vsel %vm3496, 0, %v3495
        %v3498 = vsub.s32 32, %v3497
        %v3499 = vshll.u32 %v3490, %v3497
        %v3500 = vshrl.u32 %v3482, %v3498
        %v3501 = vor.u32 %v3499, %v3500
        %v3502 = vsub.s32 4294967266, %v3497
        %v3503 = vadd.s32 %v3502, 127
        %v3504 = vshll.u32 %v3503, 23
        %v3505 = vor.u32 4788187, %v3504
        %v3506 = vand.u32 2147483647, %v3505
        %v3508 = vcvt.s32.f32 %v3501
        %v3509 = vmul.f32 %v3508, %v3506
        %v3510 = vxor.u32 %v3509, 2147483648
        %v3511 = vsel %vm3428, %v3510, %v3509
        %v3512 = vsub.s32 4, %v3488
        %v3513 = vsel %vm3428, %v3512, %v3488
        %v3514 = vsel %vm3427, %v201, %v3511
        %v3515 = vsel %vm3427, 0, %v3513
        %v3516 = vcosq.f32.pop %v3514
        %v3517 = vsinq.f32.pop %v3514
        %vm3518 = vweird.f32 %v201
        %v3519 = vadd.s32 %v3515, 3
        %v3520 = vand.u32 %v3519, 3
        %vm3521 = vcmp.lt.s32.totalorder %v3520, 2
        %vm3522 = vcmp.eq.s32.totalorder %v3520, 0
        %v3523 = vxor.u32 %v3517, 2147483648
        %v3524 = vsel %vm3522, %v3516, %v3523
        %vm3525 = vcmp.eq.s32.totalorder %v3520, 2
        %v3526 = vxor.u32 %v3516, 2147483648
        %v3527 = vsel %vm3525, %v3526, %v3517
        %v3528 = vsel %vm3521, %v3524, %v3527
        %v3529 = vsel %vm3518, nan, %v3528
        %3530 = vst [vmem:[%s135] sm:$0xff] %v305
        %3531 = vst [vmem:[%s135 + $0x8] sm:$0xff] %v409
        %3532 = vst [vmem:[%s135 + $0x10] sm:$0xff] %v513
        %3533 = vst [vmem:[%s135 + $0x18] sm:$0xff] %v617
        %3534 = vst [vmem:[%s135 + $0x20] sm:$0xff] %v721
        %3535 = vst [vmem:[%s135 + $0x28] sm:$0xff] %v825
        %3536 = vst [vmem:[%s135 + $0x30] sm:$0xff] %v929
        %3537 = vst [vmem:[%s135 + $0x38] sm:$0xff] %v1033
        %3538 = vst [vmem:[%s135 + $0x40] sm:$0xff] %v1137
        %3539 = vst [vmem:[%s135 + $0x48] sm:$0xff] %v1241
        %3540 = vst [vmem:[%s135 + $0x50] sm:$0xff] %v1345
        %3541 = vst [vmem:[%s135 + $0x58] sm:$0xff] %v1449
        %3542 = vst [vmem:[%s135 + $0x60] sm:$0xff] %v1553
        %3543 = vst [vmem:[%s135 + $0x68] sm:$0xff] %v1657
        %3544 = vst [vmem:[%s135 + $0x70] sm:$0xff] %v1761
        %3545 = vst [vmem:[%s135 + $0x78] sm:$0xff] %v1865
        %3546 = vst [vmem:[%s135 + $0x80] sm:$0xff] %v1969
        %3547 = vst [vmem:[%s135 + $0x88] sm:$0xff] %v2073
        %3548 = vst [vmem:[%s135 + $0x90] sm:$0xff] %v2177
        %3549 = vst [vmem:[%s135 + $0x98] sm:$0xff] %v2281
        %3550 = vst [vmem:[%s135 + $0xa0] sm:$0xff] %v2385
        %3551 = vst [vmem:[%s135 + $0xa8] sm:$0xff] %v2489
        %3552 = vst [vmem:[%s135 + $0xb0] sm:$0xff] %v2593
        %3553 = vst [vmem:[%s135 + $0xb8] sm:$0xff] %v2697
        %3554 = vst [vmem:[%s135 + $0xc0] sm:$0xff] %v2801
        %3555 = vst [vmem:[%s135 + $0xc8] sm:$0xff] %v2905
        %3556 = vst [vmem:[%s135 + $0xd0] sm:$0xff] %v3009
        %3557 = vst [vmem:[%s135 + $0xd8] sm:$0xff] %v3113
        %3558 = vst [vmem:[%s135 + $0xe0] sm:$0xff] %v3217
        %3559 = vst [vmem:[%s135 + $0xe8] sm:$0xff] %v3321
        %3560 = vst [vmem:[%s135 + $0xf0] sm:$0xff] %v3425
        %3561 = vst [vmem:[%s135 + $0xf8] sm:$0xff] %v3529
        %s3562 = sand.u32 %s52, 1
        %s3563 = scalar_lea.sflag [#allocation4], %s3562
        %s3564 = sand.u32 %s52, 1
        %s3565 = smul.addr %s3564, 256
        %s3566 = scalar_lea.vmem [#allocation5], %s3565
        // Predicated region
        $region29: #{tpu_custom_call.1} parent=23 // pred_check
          %p3567 = pneg %p62
        $region30: #{tpu_custom_call.1} parent=23 // pred_check_branch
          %3569 = sbr.rel (%p3567) target = $region32
        $region31: #{tpu_custom_call.1} parent=23 // pred_region
          %s3570 = smul.u32 4, %s18
          %s3572 = ssub.s32 4096, 4096
          %3573 = vsyncadd %s3563, %s3572
          %s3574 = smul.addr %s3570, 8
          %s3575 = smul.addr %s3574, 128
          %s3576 = scalar_lea.hbm %s1, %s3575
          %s3577 = sshll.u32 %s3566, 4
          %s3578 = int_to_ptr.vmem [resolvable:$true] %s3577
          %3583 = dma.vmem_to_hbm [thread:$0]  %s3578, 4096, %s3576, %s3563, 1024, 1024, 64
        $region32: #{tpu_custom_call.1} parent=23 // pred_fallthru
          _
      $region24: #{tpu_custom_call.1} parent=5 // pred_fallthru
        _
      %p3584 = scmp.le.s32.totalorder 2, %s13
      // Predicated region
      $region33: #{tpu_custom_call.1} parent=5 // pred_check
        %p3585 = pneg %p3584
      $region34: #{tpu_custom_call.1} parent=5 // pred_check_branch
        %3587 = sbr.rel (%p3585) target = $region36
      $region35: #{tpu_custom_call.1} parent=5 // pred_region
        %s3588 = ssub.s32 %s13, 2
        // Predicated region
        $region37: #{tpu_custom_call.1} parent=35 // pred_check
          %p3589 = pneg %p68
        $region38: #{tpu_custom_call.1} parent=35 // pred_check_branch
          %3591 = sbr.rel (%p3589) target = $region40
        $region39: #{tpu_custom_call.1} parent=35 // pred_region
          %s3592 = sand.u32 %s53, 1
          %s3593 = scalar_lea.sflag [#allocation4], %s3592
          %s3594 = sand.u32 %s53, 1
          %s3595 = smul.addr %s3594, 256
          %s3596 = scalar_lea.vmem [#allocation5], %s3595
          %3597 = dma.done %s3593, 4096
        $region40: #{tpu_custom_call.1} parent=35 // pred_fallthru
          _
      $region36: #{tpu_custom_call.1} parent=5 // pred_fallthru
        _
    $region6: #{tpu_custom_call.1} parent=1 // loop_footer
      %s17 = sadd.s32 1, %s13
    $region7: #{tpu_custom_call.1} parent=1 // loop_footer_branch
      %12 = sbr.rel target = $region3
    $region8: #{tpu_custom_call.1} parent=1 // loop_exit
      _
    %3598 = vsyncpa [#allocation3], 1
    %s3599 = scalar_lea.sflag [#allocation3], 1
    %3600 = vsyncpa %s3599, 1
    %3601 = vsyncpa [#allocation4], 1
    %s3602 = scalar_lea.sflag [#allocation4], 1
    %3603 = vsyncpa %s3602, 1

</llo_original>
